<compile_context>
chip_gen: v7x
topology: tpu7x:2x2x1
jax: 0.10.0
libtpu: 0.0.40
codegen_flags: <defaults>
</compile_context>

<pallas_src>
import jax
import jax.numpy as jnp
from jax import lax
from jax.experimental import pallas as pl
from jax.experimental.pallas import tpu as pltpu


# ---------------------------------------------------------------------------
# activations (PyTorch semantics)
# ---------------------------------------------------------------------------
def _apply_act(y, act):
    if act == "relu":
        return jnp.maximum(y, 0.0)
    if act == "hardswish":                       # F.hardswish: x * relu6(x+3) / 6
        return y * jnp.clip(y + 3.0, 0.0, 6.0) * (1.0 / 6.0)
    if act is None:
        return y
    raise NotImplementedError(act)


def _hardsigmoid(x):                             # module's own: clamp(0.2*x + 0.5, 0, 1)
    return jnp.clip(x * 0.2 + 0.5, 0.0, 1.0)


# ---------------------------------------------------------------------------
# fused InvertedResidual kernel (one grid step == Bt batch elements)
# ---------------------------------------------------------------------------
def _make_ir_kernel(Bt, Cin, H, W, Cmid, Cout, k, stride, act, use_se, use_shortcut):
    p = (k - 1) // 2
    Hp, Wp = H + 2 * p, W + 2 * p
    Ho = (H + 2 * p - k) // stride + 1
    Wo = (W + 2 * p - k) // stride + 1
    Cp = Bt * Cmid                                # images lane-packed along channels
    HWo = Ho * Wo

    def kernel(*refs):
        if use_se:
            (x_ref, we_ref, es_ref, eb_ref, wd_ref, ds_ref, db_ref,
             w1_ref, b1_ref, w2_ref, b2_ref,
             wl_ref, ls_ref, lb_ref, o_ref, pad_ref) = refs
        else:
            (x_ref, we_ref, es_ref, eb_ref, wd_ref, ds_ref, db_ref,
             wl_ref, ls_ref, lb_ref, o_ref, pad_ref) = refs

        # ---- zero ONLY the halo border; interior is fully overwritten below ----
        # (done every step on purpose: a program_id==0 one-time init would leave the
        #  second TensorCore's halo uninitialized under megacore sharding)
        zrow = jnp.zeros((p, Wp, Cp), jnp.float32)
        pad_ref[0:p, :, :] = zrow
        pad_ref[p + H:Hp, :, :] = zrow
        zcol = jnp.zeros((H, p, Cp), jnp.float32)
        pad_ref[p:p + H, 0:p, :] = zcol
        pad_ref[p:p + H, p + W:Wp, :] = zcol

        # ---- expand 1x1 conv + folded BN + act (MXU, bf16 in / f32 acc) ----------
        # dot_general contracts dim 0 of both operands -> no in-kernel transpose.
        e_imgs = []
        for b in range(Bt):
            e_b = lax.dot_general(x_ref[b].astype(jnp.bfloat16), we_ref[...],
                                  dimension_numbers=(((0,), (0,)), ((), ())),
                                  preferred_element_type=jnp.float32)   # (H*W, Cmid)
            e_imgs.append(_apply_act(e_b * es_ref[...] + eb_ref[...], act))
        e = jnp.concatenate(e_imgs, axis=-1) if Bt > 1 else e_imgs[0]    # (H*W, Bt*Cmid)
        pad_ref[p:p + H, p:p + W, :] = e.reshape(H, W, Cp)

        # ---- depthwise kxk conv + folded BN + act (VPU, lane-packed) -------------
        acc0 = jnp.zeros((Ho, Wo, Cp), jnp.float32)
        if stride == 1:
            def row_body(kh, acc):
                w_kh = wd_ref[kh]                                        # (k, Cp)
                for kw in range(k):
                    tap = pad_ref[pl.ds(kh, Ho), pl.ds(kw, Wo), :]
                    acc = acc + tap * w_kh[kw]
                return acc
            acc = lax.fori_loop(0, k, row_body, acc0, unroll=True)
        else:
            # phase-decompose the padded activation once -> every tap is contiguous
            wd = wd_ref[...]                                             # (k, k, Cp)
            phases = []
            for ph in range(2):
                nH = max(kh for kh in range(k) if kh % 2 == ph) // 2 + Ho
                row = []
                for pw in range(2):
                    nW = max(kw for kw in range(k) if kw % 2 == pw) // 2 + Wo
                    row.append(pad_ref[pl.ds(ph, nH, stride),
                                       pl.ds(pw, nW, stride), :])
                phases.append(row)
            acc = acc0
            for kh in range(k):
                for kw in range(k):
                    ph_v = phases[kh % 2][kw % 2]
                    tap = ph_v[kh // 2:kh // 2 + Ho, kw // 2:kw // 2 + Wo, :]
                    acc = acc + tap * wd[kh, kw]
        y2 = _apply_act(acc * ds_ref[0] + db_ref[0], act).reshape(HWo, Cp)

        # ---- Squeeze-Excitation (pool + 2 tiny FCs + channel rescale) ------------
        if use_se:
            m = jnp.sum(y2, axis=0, keepdims=True) * (1.0 / HWo)         # (1, Bt*Cmid)
            t_parts = []
            for b in range(Bt):
                m_b = m[:, b * Cmid:(b + 1) * Cmid]                      # (1, Cmid)
                h_b = jnp.maximum(
                    jnp.dot(m_b, w1_ref[...], preferred_element_type=jnp.float32)
                    + b1_ref[...], 0.0)
                t_parts.append(_hardsigmoid(
                    jnp.dot(h_b, w2_ref[...], preferred_element_type=jnp.float32)
                    + b2_ref[...]))
            t = jnp.concatenate(t_parts, axis=1) if Bt > 1 else t_parts[0]
            y2 = y2 * t

        # ---- linear 1x1 conv + folded BN (+ fused residual), lane-dense store ----
        for b in range(Bt):
            y_b = y2[:, b * Cmid:(b + 1) * Cmid].astype(jnp.bfloat16)    # (HWo, Cmid)
            out_b = lax.dot_general(wl_ref[...], y_b,
                                    dimension_numbers=(((0,), (1,)), ((), ())),
                                    preferred_element_type=jnp.float32)  # (Cout, HWo)
            out_b = out_b * ls_ref[...] + lb_ref[...]
            if use_shortcut:
                out_b = out_b + x_ref[b]
            o_ref[b] = out_b

    return kernel


# ---------------------------------------------------------------------------
# batch-tile heuristic: largest Bt dividing N that keeps >=2 grid steps (megacore),
# bounded lane packing and comfortable VMEM usage
# ---------------------------------------------------------------------------
def _pick_batch_tile(N, Cin, Cmid, Cout, H, W, k, stride):
    p = (k - 1) // 2
    Hp, Wp = H + 2 * p, W + 2 * p
    Ho = (H + 2 * p - k) // stride + 1
    Wo = (W + 2 * p - k) // stride + 1
    budget = 40 << 20                 # conservative headroom under v7x's 64 MiB VMEM
    best = 1
    for bt in range(1, N + 1):
        if N % bt:
            continue
        if N >= 2 and N // bt < 2:    # keep >= 2 grid steps for megacore sharding
            continue
        if bt * Cmid > 512:           # bound lane-packed width / vreg pressure
            continue
        need = (2 * bt * Cin * H * W * 4 + 2 * bt * Cout * Ho * Wo * 4
                + Hp * Wp * bt * Cmid * 4 + 6 * bt * Cmid * H * W * 4)
        if need <= budget:
            best = bt
    return best


# ---------------------------------------------------------------------------
# wrapper: NCHW in -> NCHW out, single pallas_call
# ---------------------------------------------------------------------------
def inverted_residual(x_nchw, params, cfg):
    N, Cin, H, W = x_nchw.shape
    k, stride, act, use_se = cfg["k"], cfg["stride"], cfg["act"], cfg["use_se"]
    Cmid = params["we"].shape[1]
    Cout = params["wl"].shape[1]
    use_shortcut = (stride == 1) and (Cin == Cout)
    p = (k - 1) // 2
    Hp, Wp = H + 2 * p, W + 2 * p
    Ho = (H + 2 * p - k) // stride + 1
    Wo = (W + 2 * p - k) // stride + 1

    Bt = _pick_batch_tile(N, Cin, Cmid, Cout, H, W, k, stride)
    Cp = Bt * Cmid

    x3 = x_nchw.reshape(N, Cin, H * W).astype(jnp.float32)

    # tile depthwise params once on the host for the lane-packed layout
    wd_t = jnp.tile(params["wd"], (1, Bt)).reshape(k, k, Cp)
    ds_t = jnp.tile(params["d_scale"], (1, Bt))
    db_t = jnp.tile(params["d_bias"], (1, Bt))
    ls_t = params["l_scale"].reshape(Cout, 1)       # (Cout,1): broadcasts on (Cout,HWo)
    lb_t = params["l_bias"].reshape(Cout, 1)

    args = [x3, params["we"], params["e_scale"], params["e_bias"], wd_t, ds_t, db_t]
    if use_se:
        args += [params["se_w1"], params["se_b1"], params["se_w2"], params["se_b2"]]
    args += [params["wl"], ls_t, lb_t]

    def full_spec(arr):
        nd = arr.ndim
        return pl.BlockSpec(tuple(arr.shape), lambda n, _nd=nd: (0,) * _nd)

    in_specs = [pl.BlockSpec((Bt, Cin, H * W), lambda n: (n, 0, 0))]
    in_specs += [full_spec(a) for a in args[1:]]

    weight_bytes = sum(int(a.size) * a.dtype.itemsize for a in args[1:])
    vmem_needed = (2 * Bt * Cin * H * W * 4 + 2 * Bt * Cout * Ho * Wo * 4
                   + Hp * Wp * Cp * 4 + 8 * Cp * H * W * 4 + weight_bytes + (2 << 20))
    vmem_limit = int(min(max(vmem_needed, 32 << 20), 96 << 20))

    cr = params["se_w1"].shape[1] if use_se else 0
    flops = N * (2 * H * W * Cin * Cmid
                 + 2 * Ho * Wo * k * k * Cmid
                 + 2 * Ho * Wo * Cmid * Cout
                 + 4 * Cmid * cr)
    bytes_accessed = 4 * (int(x3.size) + N * Cout * Ho * Wo) + weight_bytes

    out3 = pl.pallas_call(
        _make_ir_kernel(Bt, Cin, H, W, Cmid, Cout, k, stride, act, use_se, use_shortcut),
        grid=(N // Bt,),
        in_specs=in_specs,
        out_specs=pl.BlockSpec((Bt, Cout, Ho * Wo), lambda n: (n, 0, 0)),
        out_shape=jax.ShapeDtypeStruct((N, Cout, Ho * Wo), jnp.float32),
        scratch_shapes=[pltpu.VMEM((Hp, Wp, Cp), jnp.float32)],
        compiler_params=pltpu.CompilerParams(
            dimension_semantics=("parallel",), vmem_limit_bytes=vmem_limit),
        cost_estimate=pl.CostEstimate(flops=flops, transcendentals=0,
                                      bytes_accessed=bytes_accessed),
    )(*args)
    # TODO(synk): for large detection resolutions on v7x (64 MiB VMEM), tile H with p
    # halo rows (two-pass SE) and switch the pad scratch to bf16 on v6e/v7x.
    return out3.reshape(N, Cout, Ho, Wo)


# ---------------------------------------------------------------------------
# deterministic synthetic parameters (eval-mode BN folded into scale/bias)
# ---------------------------------------------------------------------------
def _fold_bn(key, c):
    k1, k2, k3, k4 = jax.random.split(key, 4)
    gamma = jax.random.uniform(k1, (c,), jnp.float32, 0.5, 1.5)
    beta = jax.random.normal(k2, (c,), jnp.float32) * 0.1
    mean = jax.random.normal(k3, (c,), jnp.float32) * 0.1
    var = jax.random.uniform(k4, (c,), jnp.float32, 0.5, 1.5)
    scale = gamma * jax.lax.rsqrt(var + 1e-5)
    bias = beta - mean * scale
    return scale.reshape(1, c), bias.reshape(1, c)


def init_inverted_residual(key, cin, cmid, cout, k, use_se):
    ks = jax.random.split(key, 10)
    p = {
        "we": (jax.random.normal(ks[0], (cin, cmid), jnp.float32)
               * (cin ** -0.5)).astype(jnp.bfloat16),
        "wd": jax.random.normal(ks[1], (k * k, cmid), jnp.float32) * (1.0 / k),
        "wl": (jax.random.normal(ks[2], (cmid, cout), jnp.float32)
               * (cmid ** -0.5)).astype(jnp.bfloat16),
    }
    p["e_scale"], p["e_bias"] = _fold_bn(ks[3], cmid)
    p["d_scale"], p["d_bias"] = _fold_bn(ks[4], cmid)
    p["l_scale"], p["l_bias"] = _fold_bn(ks[5], cout)
    if use_se:
        cr = cmid // 4
        p["se_w1"] = jax.random.normal(ks[6], (cmid, cr), jnp.float32) * (cmid ** -0.5)
        p["se_b1"] = jax.random.normal(ks[7], (1, cr), jnp.float32) * 0.1
        p["se_w2"] = jax.random.normal(ks[8], (cr, cmid), jnp.float32) * (cr ** -0.5)
        p["se_b2"] = jax.random.normal(ks[9], (1, cmid), jnp.float32) * 0.1
    return p


# ---------------------------------------------------------------------------
# pure-JAX reference (mirrors the kernel's bf16-at-the-MXU precision)
# ---------------------------------------------------------------------------
def inverted_residual_reference(x_nchw, params, cfg):
    N, Cin, H, W = x_nchw.shape
    k, stride, act, use_se = cfg["k"], cfg["stride"], cfg["act"], cfg["use_se"]
    Cmid = params["we"].shape[1]
    Cout = params["wl"].shape[1]
    use_shortcut = (stride == 1) and (Cin == Cout)
    p = (k - 1) // 2
    Ho = (H + 2 * p - k) // stride + 1
    Wo = (W + 2 * p - k) // stride + 1

    x = jnp.transpose(x_nchw, (0, 2, 3, 1)).astype(jnp.float32)    # NHWC
    e = jnp.dot(x.reshape(N * H * W, Cin).astype(jnp.bfloat16), params["we"],
                preferred_element_type=jnp.float32)
    e = _apply_act(e * params["e_scale"] + params["e_bias"], act).reshape(N, H, W, Cmid)

    ep = jnp.pad(e, ((0, 0), (p, p), (p, p), (0, 0)))
    acc = jnp.zeros((N, Ho, Wo, Cmid), jnp.float32)
    for kh in range(k):
        for kw in range(k):
            tap = ep[:, kh:kh + stride * (Ho - 1) + 1:stride,
                     kw:kw + stride * (Wo - 1) + 1:stride, :]
            acc = acc + tap * params["wd"][kh * k + kw]
    y = _apply_act(acc * params["d_scale"][0] + params["d_bias"][0], act)
    y2 = y.reshape(N, Ho * Wo, Cmid)

    if use_se:
        m = jnp.mean(y2, axis=1)                                    # (N, Cmid)
        h = jnp.maximum(jnp.dot(m, params["se_w1"]) + params["se_b1"], 0.0)
        t = _hardsigmoid(jnp.dot(h, params["se_w2"]) + params["se_b2"])
        y2 = y2 * t[:, None, :]

    out = jnp.dot(y2.reshape(N * Ho * Wo, Cmid).astype(jnp.bfloat16), params["wl"],
                  preferred_element_type=jnp.float32)
    out = (out * params["l_scale"] + params["l_bias"]).reshape(N, Ho, Wo, Cout)
    if use_shortcut:
        out = out + x
    return jnp.transpose(out, (0, 3, 1, 2))                         # NCHW


# ---------------------------------------------------------------------------
# main
# ---------------------------------------------------------------------------
if __name__ == "__main__":
    key = jax.random.PRNGKey(0)
    kx, k1, k2, k3 = jax.random.split(key, 4)

    N, Cin, H, W = 4, 16, 16, 16
    x = jax.random.normal(kx, (N, Cin, H, W), jnp.float32)

    configs = [
        # cmid, cout, k, stride, act, use_se   (shortcut iff stride==1 and cin==cout)
        dict(cmid=32, cout=16, k=3, stride=1, act="hardswish", use_se=True),
        dict(cmid=48, cout=24, k=5, stride=2, act="relu", use_se=True),
        dict(cmid=40, cout=16, k=3, stride=1, act="relu", use_se=False),
    ]
    pkeys = [k1, k2, k3]

    for c, pkey in zip(configs, pkeys):
        cfg = {"k": c["k"], "stride": c["stride"], "act": c["act"], "use_se": c["use_se"]}
        params = init_inverted_residual(pkey, Cin, c["cmid"], c["cout"], c["k"], c["use_se"])

        out = jax.block_until_ready(inverted_residual(x, params, cfg))
        ref = jax.block_until_ready(inverted_residual_reference(x, params, cfg))

        p = (c["k"] - 1) // 2
        Ho = (H + 2 * p - c["k"]) // c["stride"] + 1
        Wo = (W + 2 * p - c["k"]) // c["stride"] + 1
        assert out.shape == (N, c["cout"], Ho, Wo), out.shape
        assert bool(jnp.all(jnp.isfinite(out)))
        err = float(jnp.max(jnp.abs(out - ref)))
        assert err < 2e-2, f"mismatch vs reference: max abs err = {err}"

    print("KERNEL_OK")
</pallas_src>

<mosaic_0001>
module attributes {stable_mosaic.version = 11 : i64} {
  func.func @kernel(%arg0: i32, %arg1: memref<2x16x256xf32, #tpu.memory_space<vmem>>, %arg2: memref<16x32xbf16, #tpu.memory_space<vmem>>, %arg3: memref<1x32xf32, #tpu.memory_space<vmem>>, %arg4: memref<1x32xf32, #tpu.memory_space<vmem>>, %arg5: memref<3x3x64xf32, #tpu.memory_space<vmem>>, %arg6: memref<1x64xf32, #tpu.memory_space<vmem>>, %arg7: memref<1x64xf32, #tpu.memory_space<vmem>>, %arg8: memref<32x8xf32, #tpu.memory_space<vmem>>, %arg9: memref<1x8xf32, #tpu.memory_space<vmem>>, %arg10: memref<8x32xf32, #tpu.memory_space<vmem>>, %arg11: memref<1x32xf32, #tpu.memory_space<vmem>>, %arg12: memref<32x16xbf16, #tpu.memory_space<vmem>>, %arg13: memref<16x1xf32, #tpu.memory_space<vmem>>, %arg14: memref<16x1xf32, #tpu.memory_space<vmem>>, %arg15: memref<2x16x256xf32, #tpu.memory_space<vmem>>, %arg16: memref<18x18x64xf32, #tpu.memory_space<vmem>>) attributes {dimension_semantics = [#tpu.dimension_semantics<parallel>], iteration_bounds = array<i64: 2>, scalar_prefetch = 0 : i64, scratch_operands = 1 : i64, tpu.core_type = #tpu.core_type<tc>, window_params = [{transform_indices = @transform_0, window_bounds = array<i64: 2, 16, 256>}, {pipeline_mode = #tpu.pipeline_mode<synchronous>, transform_indices = @transform_1, window_bounds = array<i64: 16, 32>}, {pipeline_mode = #tpu.pipeline_mode<synchronous>, transform_indices = @transform_2, window_bounds = array<i64: 1, 32>}, {pipeline_mode = #tpu.pipeline_mode<synchronous>, transform_indices = @transform_3, window_bounds = array<i64: 1, 32>}, {pipeline_mode = #tpu.pipeline_mode<synchronous>, transform_indices = @transform_4, window_bounds = array<i64: 3, 3, 64>}, {pipeline_mode = #tpu.pipeline_mode<synchronous>, transform_indices = @transform_5, window_bounds = array<i64: 1, 64>}, {pipeline_mode = #tpu.pipeline_mode<synchronous>, transform_indices = @transform_6, window_bounds = array<i64: 1, 64>}, {pipeline_mode = #tpu.pipeline_mode<synchronous>, transform_indices = @transform_7, window_bounds = array<i64: 32, 8>}, {pipeline_mode = #tpu.pipeline_mode<synchronous>, transform_indices = @transform_8, window_bounds = array<i64: 1, 8>}, {pipeline_mode = #tpu.pipeline_mode<synchronous>, transform_indices = @transform_9, window_bounds = array<i64: 8, 32>}, {pipeline_mode = #tpu.pipeline_mode<synchronous>, transform_indices = @transform_10, window_bounds = array<i64: 1, 32>}, {pipeline_mode = #tpu.pipeline_mode<synchronous>, transform_indices = @transform_11, window_bounds = array<i64: 32, 16>}, {pipeline_mode = #tpu.pipeline_mode<synchronous>, transform_indices = @transform_12, window_bounds = array<i64: 16, 1>}, {pipeline_mode = #tpu.pipeline_mode<synchronous>, transform_indices = @transform_13, window_bounds = array<i64: 16, 1>}, {transform_indices = @transform_14, window_bounds = array<i64: 2, 16, 256>}]} {
    %cst = arith.constant 0.000000e+00 : f32
    %0 = vector.broadcast %cst : f32 to vector<1x18x64xf32>
    %c0 = arith.constant 0 : index
    %c0_0 = arith.constant 0 : index
    %c0_1 = arith.constant 0 : index
    %1 = vector.load %arg16[%c0, %c0_0, %c0_1] : memref<18x18x64xf32, #tpu.memory_space<vmem>>, vector<1x18x64xf32>
    tpu.vector_store %arg16[%c0, %c0_0, %c0_1], %0 {strides = array<i32>} : memref<18x18x64xf32, #tpu.memory_space<vmem>>, vector<1x18x64xf32>,
    %c17 = arith.constant 17 : index
    %c0_2 = arith.constant 0 : index
    %c0_3 = arith.constant 0 : index
    %2 = vector.load %arg16[%c17, %c0_2, %c0_3] : memref<18x18x64xf32, #tpu.memory_space<vmem>>, vector<1x18x64xf32>
    tpu.vector_store %arg16[%c17, %c0_2, %c0_3], %0 {strides = array<i32>} : memref<18x18x64xf32, #tpu.memory_space<vmem>>, vector<1x18x64xf32>,
    %cst_4 = arith.constant 0.000000e+00 : f32
    %3 = vector.broadcast %cst_4 : f32 to vector<16x1x64xf32>
    %c1 = arith.constant 1 : index
    %c0_5 = arith.constant 0 : index
    %c0_6 = arith.constant 0 : index
    %4 = vector.load %arg16[%c1, %c0_5, %c0_6] : memref<18x18x64xf32, #tpu.memory_space<vmem>>, vector<16x1x64xf32>
    tpu.vector_store %arg16[%c1, %c0_5, %c0_6], %3 {strides = array<i32>} : memref<18x18x64xf32, #tpu.memory_space<vmem>>, vector<16x1x64xf32>,
    %c1_7 = arith.constant 1 : index
    %c17_8 = arith.constant 17 : index
    %c0_9 = arith.constant 0 : index
    %5 = vector.load %arg16[%c1_7, %c17_8, %c0_9] : memref<18x18x64xf32, #tpu.memory_space<vmem>>, vector<16x1x64xf32>
    tpu.vector_store %arg16[%c1_7, %c17_8, %c0_9], %3 {strides = array<i32>} : memref<18x18x64xf32, #tpu.memory_space<vmem>>, vector<16x1x64xf32>,
    %c0_10 = arith.constant 0 : index
    %c0_11 = arith.constant 0 : index
    %c0_12 = arith.constant 0 : index
    %6 = vector.load %arg1[%c0_10, %c0_11, %c0_12] : memref<2x16x256xf32, #tpu.memory_space<vmem>>, vector<1x16x256xf32>
    %7 = vector.shape_cast %6 : vector<1x16x256xf32> to vector<16x256xf32>
    %8 = arith.truncf %7 : vector<16x256xf32> to vector<16x256xbf16>
    %c0_13 = arith.constant 0 : index
    %c0_14 = arith.constant 0 : index
    %9 = vector.load %arg2[%c0_13, %c0_14] : memref<16x32xbf16, #tpu.memory_space<vmem>>, vector<16x32xbf16>
    %cst_15 = arith.constant dense<0.000000e+00> : vector<256x32xf32>
    %10 = tpu.matmul %8, %9, %cst_15 {dimension_numbers = #tpu.dot_dimension_numbers<[0], [0], [1], [1], [0, 1, 1, 1], [], []>} : vector<16x256xbf16>, vector<16x32xbf16>, vector<256x32xf32> -> vector<256x32xf32>
    %c0_16 = arith.constant 0 : index
    %c0_17 = arith.constant 0 : index
    %11 = vector.load %arg3[%c0_16, %c0_17] : memref<1x32xf32, #tpu.memory_space<vmem>>, vector<1x32xf32>
    %12 = vector.broadcast %11 : vector<1x32xf32> to vector<256x32xf32>
    %13 = arith.mulf %10, %12 : vector<256x32xf32>
    %c0_18 = arith.constant 0 : index
    %c0_19 = arith.constant 0 : index
    %14 = vector.load %arg4[%c0_18, %c0_19] : memref<1x32xf32, #tpu.memory_space<vmem>>, vector<1x32xf32>
    %15 = vector.broadcast %14 : vector<1x32xf32> to vector<256x32xf32>
    %16 = arith.addf %13, %15 : vector<256x32xf32>
    %cst_20 = arith.constant 3.000000e+00 : f32
    %17 = vector.broadcast %cst_20 : f32 to vector<256x32xf32>
    %18 = arith.addf %16, %17 : vector<256x32xf32>
    %cst_21 = arith.constant 0.000000e+00 : f32
    %cst_22 = arith.constant 6.000000e+00 : f32
    %19 = vector.broadcast %cst_21 : f32 to vector<256x32xf32>
    %20 = arith.maximumf %19, %18 : vector<256x32xf32>
    %21 = vector.broadcast %cst_22 : f32 to vector<256x32xf32>
    %22 = arith.minimumf %21, %20 : vector<256x32xf32>
    %23 = arith.mulf %16, %22 : vector<256x32xf32>
    %cst_23 = arith.constant 0.166666672 : f32
    %24 = vector.broadcast %cst_23 : f32 to vector<256x32xf32>
    %25 = arith.mulf %23, %24 : vector<256x32xf32>
    %c1_24 = arith.constant 1 : index
    %c0_25 = arith.constant 0 : index
    %c0_26 = arith.constant 0 : index
    %26 = vector.load %arg1[%c1_24, %c0_25, %c0_26] : memref<2x16x256xf32, #tpu.memory_space<vmem>>, vector<1x16x256xf32>
    %27 = vector.shape_cast %26 : vector<1x16x256xf32> to vector<16x256xf32>
    %28 = arith.truncf %27 : vector<16x256xf32> to vector<16x256xbf16>
    %c0_27 = arith.constant 0 : index
    %c0_28 = arith.constant 0 : index
    %29 = vector.load %arg2[%c0_27, %c0_28] : memref<16x32xbf16, #tpu.memory_space<vmem>>, vector<16x32xbf16>
    %cst_29 = arith.constant dense<0.000000e+00> : vector<256x32xf32>
    %30 = tpu.matmul %28, %29, %cst_29 {dimension_numbers = #tpu.dot_dimension_numbers<[0], [0], [1], [1], [0, 1, 1, 1], [], []>} : vector<16x256xbf16>, vector<16x32xbf16>, vector<256x32xf32> -> vector<256x32xf32>
    %c0_30 = arith.constant 0 : index
    %c0_31 = arith.constant 0 : index
    %31 = vector.load %arg3[%c0_30, %c0_31] : memref<1x32xf32, #tpu.memory_space<vmem>>, vector<1x32xf32>
    %32 = vector.broadcast %31 : vector<1x32xf32> to vector<256x32xf32>
    %33 = arith.mulf %30, %32 : vector<256x32xf32>
    %c0_32 = arith.constant 0 : index
    %c0_33 = arith.constant 0 : index
    %34 = vector.load %arg4[%c0_32, %c0_33] : memref<1x32xf32, #tpu.memory_space<vmem>>, vector<1x32xf32>
    %35 = vector.broadcast %34 : vector<1x32xf32> to vector<256x32xf32>
    %36 = arith.addf %33, %35 : vector<256x32xf32>
    %cst_34 = arith.constant 3.000000e+00 : f32
    %37 = vector.broadcast %cst_34 : f32 to vector<256x32xf32>
    %38 = arith.addf %36, %37 : vector<256x32xf32>
    %cst_35 = arith.constant 0.000000e+00 : f32
    %cst_36 = arith.constant 6.000000e+00 : f32
    %39 = vector.broadcast %cst_35 : f32 to vector<256x32xf32>
    %40 = arith.maximumf %39, %38 : vector<256x32xf32>
    %41 = vector.broadcast %cst_36 : f32 to vector<256x32xf32>
    %42 = arith.minimumf %41, %40 : vector<256x32xf32>
    %43 = arith.mulf %36, %42 : vector<256x32xf32>
    %cst_37 = arith.constant 0.166666672 : f32
    %44 = vector.broadcast %cst_37 : f32 to vector<256x32xf32>
    %45 = arith.mulf %43, %44 : vector<256x32xf32>
    %46 = tpu.concatenate %25, %45 in 1 : vector<256x32xf32>, vector<256x32xf32> -> vector<256x64xf32>
    %47 = vector.shape_cast %46 : vector<256x64xf32> to vector<16x16x64xf32>
    %c1_38 = arith.constant 1 : index
    %c1_39 = arith.constant 1 : index
    %c0_40 = arith.constant 0 : index
    %48 = vector.load %arg16[%c1_38, %c1_39, %c0_40] : memref<18x18x64xf32, #tpu.memory_space<vmem>>, vector<16x16x64xf32>
    tpu.vector_store %arg16[%c1_38, %c1_39, %c0_40], %47 {strides = array<i32>} : memref<18x18x64xf32, #tpu.memory_space<vmem>>, vector<16x16x64xf32>,
    %cst_41 = arith.constant 0.000000e+00 : f32
    %49 = vector.broadcast %cst_41 : f32 to vector<16x16x64xf32>
    %c0_i32 = arith.constant 0 : i32
    %50 = arith.index_cast %c0_i32 : i32 to index
    %c0_42 = arith.constant 0 : index
    %c0_43 = arith.constant 0 : index
    %51 = vector.load %arg5[%50, %c0_42, %c0_43] : memref<3x3x64xf32, #tpu.memory_space<vmem>>, vector<1x3x64xf32>
    %52 = vector.shape_cast %51 : vector<1x3x64xf32> to vector<3x64xf32>
    %53 = arith.index_cast %c0_i32 : i32 to index
    %c0_44 = arith.constant 0 : index
    %c0_45 = arith.constant 0 : index
    %54 = vector.load %arg16[%53, %c0_44, %c0_45] : memref<18x18x64xf32, #tpu.memory_space<vmem>>, vector<16x16x64xf32>
    %55 = vector.extract_strided_slice %52 {offsets = [0, 0], sizes = [1, 64], strides = [1, 1]} : vector<3x64xf32> to vector<1x64xf32>
    %56 = vector.shape_cast %55 : vector<1x64xf32> to vector<64xf32>
    %57 = vector.shape_cast %56 : vector<64xf32> to vector<1x1x64xf32>
    %58 = vector.broadcast %57 : vector<1x1x64xf32> to vector<16x16x64xf32>
    %59 = arith.mulf %54, %58 : vector<16x16x64xf32>
    %60 = arith.addf %49, %59 : vector<16x16x64xf32>
    %61 = arith.index_cast %c0_i32 : i32 to index
    %c1_46 = arith.constant 1 : index
    %c0_47 = arith.constant 0 : index
    %62 = vector.load %arg16[%61, %c1_46, %c0_47] : memref<18x18x64xf32, #tpu.memory_space<vmem>>, vector<16x16x64xf32>
    %63 = vector.extract_strided_slice %52 {offsets = [1, 0], sizes = [1, 64], strides = [1, 1]} : vector<3x64xf32> to vector<1x64xf32>
    %64 = vector.shape_cast %63 : vector<1x64xf32> to vector<64xf32>
    %65 = vector.shape_cast %64 : vector<64xf32> to vector<1x1x64xf32>
    %66 = vector.broadcast %65 : vector<1x1x64xf32> to vector<16x16x64xf32>
    %67 = arith.mulf %62, %66 : vector<16x16x64xf32>
    %68 = arith.addf %60, %67 : vector<16x16x64xf32>
    %69 = arith.index_cast %c0_i32 : i32 to index
    %c2 = arith.constant 2 : index
    %c0_48 = arith.constant 0 : index
    %70 = vector.load %arg16[%69, %c2, %c0_48] : memref<18x18x64xf32, #tpu.memory_space<vmem>>, vector<16x16x64xf32>
    %71 = vector.extract_strided_slice %52 {offsets = [2, 0], sizes = [1, 64], strides = [1, 1]} : vector<3x64xf32> to vector<1x64xf32>
    %72 = vector.shape_cast %71 : vector<1x64xf32> to vector<64xf32>
    %73 = vector.shape_cast %72 : vector<64xf32> to vector<1x1x64xf32>
    %74 = vector.broadcast %73 : vector<1x1x64xf32> to vector<16x16x64xf32>
    %75 = arith.mulf %70, %74 : vector<16x16x64xf32>
    %76 = arith.addf %68, %75 : vector<16x16x64xf32>
    %c1_i32 = arith.constant 1 : i32
    %77 = arith.index_cast %c1_i32 : i32 to index
    %c0_49 = arith.constant 0 : index
    %c0_50 = arith.constant 0 : index
    %78 = vector.load %arg5[%77, %c0_49, %c0_50] : memref<3x3x64xf32, #tpu.memory_space<vmem>>, vector<1x3x64xf32>
    %79 = vector.shape_cast %78 : vector<1x3x64xf32> to vector<3x64xf32>
    %80 = arith.index_cast %c1_i32 : i32 to index
    %c0_51 = arith.constant 0 : index
    %c0_52 = arith.constant 0 : index
    %81 = vector.load %arg16[%80, %c0_51, %c0_52] : memref<18x18x64xf32, #tpu.memory_space<vmem>>, vector<16x16x64xf32>
    %82 = vector.extract_strided_slice %79 {offsets = [0, 0], sizes = [1, 64], strides = [1, 1]} : vector<3x64xf32> to vector<1x64xf32>
    %83 = vector.shape_cast %82 : vector<1x64xf32> to vector<64xf32>
    %84 = vector.shape_cast %83 : vector<64xf32> to vector<1x1x64xf32>
    %85 = vector.broadcast %84 : vector<1x1x64xf32> to vector<16x16x64xf32>
    %86 = arith.mulf %81, %85 : vector<16x16x64xf32>
    %87 = arith.addf %76, %86 : vector<16x16x64xf32>
    %88 = arith.index_cast %c1_i32 : i32 to index
    %c1_53 = arith.constant 1 : index
    %c0_54 = arith.constant 0 : index
    %89 = vector.load %arg16[%88, %c1_53, %c0_54] : memref<18x18x64xf32, #tpu.memory_space<vmem>>, vector<16x16x64xf32>
    %90 = vector.extract_strided_slice %79 {offsets = [1, 0], sizes = [1, 64], strides = [1, 1]} : vector<3x64xf32> to vector<1x64xf32>
    %91 = vector.shape_cast %90 : vector<1x64xf32> to vector<64xf32>
    %92 = vector.shape_cast %91 : vector<64xf32> to vector<1x1x64xf32>
    %93 = vector.broadcast %92 : vector<1x1x64xf32> to vector<16x16x64xf32>
    %94 = arith.mulf %89, %93 : vector<16x16x64xf32>
    %95 = arith.addf %87, %94 : vector<16x16x64xf32>
    %96 = arith.index_cast %c1_i32 : i32 to index
    %c2_55 = arith.constant 2 : index
    %c0_56 = arith.constant 0 : index
    %97 = vector.load %arg16[%96, %c2_55, %c0_56] : memref<18x18x64xf32, #tpu.memory_space<vmem>>, vector<16x16x64xf32>
    %98 = vector.extract_strided_slice %79 {offsets = [2, 0], sizes = [1, 64], strides = [1, 1]} : vector<3x64xf32> to vector<1x64xf32>
    %99 = vector.shape_cast %98 : vector<1x64xf32> to vector<64xf32>
    %100 = vector.shape_cast %99 : vector<64xf32> to vector<1x1x64xf32>
    %101 = vector.broadcast %100 : vector<1x1x64xf32> to vector<16x16x64xf32>
    %102 = arith.mulf %97, %101 : vector<16x16x64xf32>
    %103 = arith.addf %95, %102 : vector<16x16x64xf32>
    %c2_i32 = arith.constant 2 : i32
    %104 = arith.index_cast %c2_i32 : i32 to index
    %c0_57 = arith.constant 0 : index
    %c0_58 = arith.constant 0 : index
    %105 = vector.load %arg5[%104, %c0_57, %c0_58] : memref<3x3x64xf32, #tpu.memory_space<vmem>>, vector<1x3x64xf32>
    %106 = vector.shape_cast %105 : vector<1x3x64xf32> to vector<3x64xf32>
    %107 = arith.index_cast %c2_i32 : i32 to index
    %c0_59 = arith.constant 0 : index
    %c0_60 = arith.constant 0 : index
    %108 = vector.load %arg16[%107, %c0_59, %c0_60] : memref<18x18x64xf32, #tpu.memory_space<vmem>>, vector<16x16x64xf32>
    %109 = vector.extract_strided_slice %106 {offsets = [0, 0], sizes = [1, 64], strides = [1, 1]} : vector<3x64xf32> to vector<1x64xf32>
    %110 = vector.shape_cast %109 : vector<1x64xf32> to vector<64xf32>
    %111 = vector.shape_cast %110 : vector<64xf32> to vector<1x1x64xf32>
    %112 = vector.broadcast %111 : vector<1x1x64xf32> to vector<16x16x64xf32>
    %113 = arith.mulf %108, %112 : vector<16x16x64xf32>
    %114 = arith.addf %103, %113 : vector<16x16x64xf32>
    %115 = arith.index_cast %c2_i32 : i32 to index
    %c1_61 = arith.constant 1 : index
    %c0_62 = arith.constant 0 : index
    %116 = vector.load %arg16[%115, %c1_61, %c0_62] : memref<18x18x64xf32, #tpu.memory_space<vmem>>, vector<16x16x64xf32>
    %117 = vector.extract_strided_slice %106 {offsets = [1, 0], sizes = [1, 64], strides = [1, 1]} : vector<3x64xf32> to vector<1x64xf32>
    %118 = vector.shape_cast %117 : vector<1x64xf32> to vector<64xf32>
    %119 = vector.shape_cast %118 : vector<64xf32> to vector<1x1x64xf32>
    %120 = vector.broadcast %119 : vector<1x1x64xf32> to vector<16x16x64xf32>
    %121 = arith.mulf %116, %120 : vector<16x16x64xf32>
    %122 = arith.addf %114, %121 : vector<16x16x64xf32>
    %123 = arith.index_cast %c2_i32 : i32 to index
    %c2_63 = arith.constant 2 : index
    %c0_64 = arith.constant 0 : index
    %124 = vector.load %arg16[%123, %c2_63, %c0_64] : memref<18x18x64xf32, #tpu.memory_space<vmem>>, vector<16x16x64xf32>
    %125 = vector.extract_strided_slice %106 {offsets = [2, 0], sizes = [1, 64], strides = [1, 1]} : vector<3x64xf32> to vector<1x64xf32>
    %126 = vector.shape_cast %125 : vector<1x64xf32> to vector<64xf32>
    %127 = vector.shape_cast %126 : vector<64xf32> to vector<1x1x64xf32>
    %128 = vector.broadcast %127 : vector<1x1x64xf32> to vector<16x16x64xf32>
    %129 = arith.mulf %124, %128 : vector<16x16x64xf32>
    %130 = arith.addf %122, %129 : vector<16x16x64xf32>
    %c3_i32 = arith.constant 3 : i32
    %c0_65 = arith.constant 0 : index
    %c0_66 = arith.constant 0 : index
    %131 = vector.load %arg6[%c0_65, %c0_66] : memref<1x64xf32, #tpu.memory_space<vmem>>, vector<1x64xf32>
    %132 = vector.shape_cast %131 : vector<1x64xf32> to vector<64xf32>
    %133 = vector.shape_cast %132 : vector<64xf32> to vector<1x1x64xf32>
    %134 = vector.broadcast %133 : vector<1x1x64xf32> to vector<16x16x64xf32>
    %135 = arith.mulf %130, %134 : vector<16x16x64xf32>
    %c0_67 = arith.constant 0 : index
    %c0_68 = arith.constant 0 : index
    %136 = vector.load %arg7[%c0_67, %c0_68] : memref<1x64xf32, #tpu.memory_space<vmem>>, vector<1x64xf32>
    %137 = vector.shape_cast %136 : vector<1x64xf32> to vector<64xf32>
    %138 = vector.shape_cast %137 : vector<64xf32> to vector<1x1x64xf32>
    %139 = vector.broadcast %138 : vector<1x1x64xf32> to vector<16x16x64xf32>
    %140 = arith.addf %135, %139 : vector<16x16x64xf32>
    %cst_69 = arith.constant 3.000000e+00 : f32
    %141 = vector.broadcast %cst_69 : f32 to vector<16x16x64xf32>
    %142 = arith.addf %140, %141 : vector<16x16x64xf32>
    %cst_70 = arith.constant 0.000000e+00 : f32
    %cst_71 = arith.constant 6.000000e+00 : f32
    %143 = vector.broadcast %cst_70 : f32 to vector<16x16x64xf32>
    %144 = arith.maximumf %143, %142 : vector<16x16x64xf32>
    %145 = vector.broadcast %cst_71 : f32 to vector<16x16x64xf32>
    %146 = arith.minimumf %145, %144 : vector<16x16x64xf32>
    %147 = arith.mulf %140, %146 : vector<16x16x64xf32>
    %cst_72 = arith.constant 0.166666672 : f32
    %148 = vector.broadcast %cst_72 : f32 to vector<16x16x64xf32>
    %149 = arith.mulf %147, %148 : vector<16x16x64xf32>
    %150 = vector.shape_cast %149 : vector<16x16x64xf32> to vector<256x64xf32>
    %cst_73 = arith.constant dense<0.000000e+00> : vector<64xf32>
    %151 = vector.multi_reduction <add>, %150, %cst_73 [0] : vector<256x64xf32> to vector<64xf32>
    %152 = vector.shape_cast %151 : vector<64xf32> to vector<1x64xf32>
    %cst_74 = arith.constant 3.906250e-03 : f32
    %153 = vector.broadcast %cst_74 : f32 to vector<1x64xf32>
    %154 = arith.mulf %152, %153 : vector<1x64xf32>
    %155 = vector.extract_strided_slice %154 {offsets = [0, 0], sizes = [1, 32], strides = [1, 1]} : vector<1x64xf32> to vector<1x32xf32>
    %c0_75 = arith.constant 0 : index
    %c0_76 = arith.constant 0 : index
    %156 = vector.load %arg8[%c0_75, %c0_76] : memref<32x8xf32, #tpu.memory_space<vmem>>, vector<32x8xf32>
    %cst_77 = arith.constant dense<0.000000e+00> : vector<1x8xf32>
    %157 = tpu.matmul %155, %156, %cst_77 {dimension_numbers = #tpu.dot_dimension_numbers<[1], [0], [0], [1], [0, 0, 1, 1], [], []>} : vector<1x32xf32>, vector<32x8xf32>, vector<1x8xf32> -> vector<1x8xf32>
    %c0_78 = arith.constant 0 : index
    %c0_79 = arith.constant 0 : index
    %158 = vector.load %arg9[%c0_78, %c0_79] : memref<1x8xf32, #tpu.memory_space<vmem>>, vector<1x8xf32>
    %159 = arith.addf %157, %158 : vector<1x8xf32>
    %cst_80 = arith.constant 0.000000e+00 : f32
    %160 = vector.broadcast %cst_80 : f32 to vector<1x8xf32>
    %161 = arith.maximumf %159, %160 : vector<1x8xf32>
    %c0_81 = arith.constant 0 : index
    %c0_82 = arith.constant 0 : index
    %162 = vector.load %arg10[%c0_81, %c0_82] : memref<8x32xf32, #tpu.memory_space<vmem>>, vector<8x32xf32>
    %cst_83 = arith.constant dense<0.000000e+00> : vector<1x32xf32>
    %163 = tpu.matmul %161, %162, %cst_83 {dimension_numbers = #tpu.dot_dimension_numbers<[1], [0], [0], [1], [0, 0, 1, 1], [], []>} : vector<1x8xf32>, vector<8x32xf32>, vector<1x32xf32> -> vector<1x32xf32>
    %c0_84 = arith.constant 0 : index
    %c0_85 = arith.constant 0 : index
    %164 = vector.load %arg11[%c0_84, %c0_85] : memref<1x32xf32, #tpu.memory_space<vmem>>, vector<1x32xf32>
    %165 = arith.addf %163, %164 : vector<1x32xf32>
    %cst_86 = arith.constant 2.000000e-01 : f32
    %166 = vector.broadcast %cst_86 : f32 to vector<1x32xf32>
    %167 = arith.mulf %165, %166 : vector<1x32xf32>
    %cst_87 = arith.constant 5.000000e-01 : f32
    %168 = vector.broadcast %cst_87 : f32 to vector<1x32xf32>
    %169 = arith.addf %167, %168 : vector<1x32xf32>
    %cst_88 = arith.constant 0.000000e+00 : f32
    %cst_89 = arith.constant 1.000000e+00 : f32
    %170 = vector.broadcast %cst_88 : f32 to vector<1x32xf32>
    %171 = arith.maximumf %170, %169 : vector<1x32xf32>
    %172 = vector.broadcast %cst_89 : f32 to vector<1x32xf32>
    %173 = arith.minimumf %172, %171 : vector<1x32xf32>
    %174 = vector.extract_strided_slice %154 {offsets = [0, 32], sizes = [1, 32], strides = [1, 1]} : vector<1x64xf32> to vector<1x32xf32>
    %c0_90 = arith.constant 0 : index
    %c0_91 = arith.constant 0 : index
    %175 = vector.load %arg8[%c0_90, %c0_91] : memref<32x8xf32, #tpu.memory_space<vmem>>, vector<32x8xf32>
    %cst_92 = arith.constant dense<0.000000e+00> : vector<1x8xf32>
    %176 = tpu.matmul %174, %175, %cst_92 {dimension_numbers = #tpu.dot_dimension_numbers<[1], [0], [0], [1], [0, 0, 1, 1], [], []>} : vector<1x32xf32>, vector<32x8xf32>, vector<1x8xf32> -> vector<1x8xf32>
    %c0_93 = arith.constant 0 : index
    %c0_94 = arith.constant 0 : index
    %177 = vector.load %arg9[%c0_93, %c0_94] : memref<1x8xf32, #tpu.memory_space<vmem>>, vector<1x8xf32>
    %178 = arith.addf %176, %177 : vector<1x8xf32>
    %cst_95 = arith.constant 0.000000e+00 : f32
    %179 = vector.broadcast %cst_95 : f32 to vector<1x8xf32>
    %180 = arith.maximumf %178, %179 : vector<1x8xf32>
    %c0_96 = arith.constant 0 : index
    %c0_97 = arith.constant 0 : index
    %181 = vector.load %arg10[%c0_96, %c0_97] : memref<8x32xf32, #tpu.memory_space<vmem>>, vector<8x32xf32>
    %cst_98 = arith.constant dense<0.000000e+00> : vector<1x32xf32>
    %182 = tpu.matmul %180, %181, %cst_98 {dimension_numbers = #tpu.dot_dimension_numbers<[1], [0], [0], [1], [0, 0, 1, 1], [], []>} : vector<1x8xf32>, vector<8x32xf32>, vector<1x32xf32> -> vector<1x32xf32>
    %c0_99 = arith.constant 0 : index
    %c0_100 = arith.constant 0 : index
    %183 = vector.load %arg11[%c0_99, %c0_100] : memref<1x32xf32, #tpu.memory_space<vmem>>, vector<1x32xf32>
    %184 = arith.addf %182, %183 : vector<1x32xf32>
    %cst_101 = arith.constant 2.000000e-01 : f32
    %185 = vector.broadcast %cst_101 : f32 to vector<1x32xf32>
    %186 = arith.mulf %184, %185 : vector<1x32xf32>
    %cst_102 = arith.constant 5.000000e-01 : f32
    %187 = vector.broadcast %cst_102 : f32 to vector<1x32xf32>
    %188 = arith.addf %186, %187 : vector<1x32xf32>
    %cst_103 = arith.constant 0.000000e+00 : f32
    %cst_104 = arith.constant 1.000000e+00 : f32
    %189 = vector.broadcast %cst_103 : f32 to vector<1x32xf32>
    %190 = arith.maximumf %189, %188 : vector<1x32xf32>
    %191 = vector.broadcast %cst_104 : f32 to vector<1x32xf32>
    %192 = arith.minimumf %191, %190 : vector<1x32xf32>
    %193 = tpu.concatenate %173, %192 in 1 : vector<1x32xf32>, vector<1x32xf32> -> vector<1x64xf32>
    %194 = vector.broadcast %193 : vector<1x64xf32> to vector<256x64xf32>
    %195 = arith.mulf %150, %194 : vector<256x64xf32>
    %196 = vector.extract_strided_slice %195 {offsets = [0, 0], sizes = [256, 32], strides = [1, 1]} : vector<256x64xf32> to vector<256x32xf32>
    %197 = arith.truncf %196 : vector<256x32xf32> to vector<256x32xbf16>
    %c0_105 = arith.constant 0 : index
    %c0_106 = arith.constant 0 : index
    %198 = vector.load %arg12[%c0_105, %c0_106] : memref<32x16xbf16, #tpu.memory_space<vmem>>, vector<32x16xbf16>
    %cst_107 = arith.constant dense<0.000000e+00> : vector<16x256xf32>
    %199 = tpu.matmul %198, %197, %cst_107 {dimension_numbers = #tpu.dot_dimension_numbers<[0], [1], [1], [0], [0, 1, 1, 0], [], []>} : vector<32x16xbf16>, vector<256x32xbf16>, vector<16x256xf32> -> vector<16x256xf32>
    %c0_108 = arith.constant 0 : index
    %c0_109 = arith.constant 0 : index
    %200 = vector.load %arg13[%c0_108, %c0_109] : memref<16x1xf32, #tpu.memory_space<vmem>>, vector<16x1xf32>
    %201 = vector.broadcast %200 : vector<16x1xf32> to vector<16x256xf32>
    %202 = arith.mulf %199, %201 : vector<16x256xf32>
    %c0_110 = arith.constant 0 : index
    %c0_111 = arith.constant 0 : index
    %203 = vector.load %arg14[%c0_110, %c0_111] : memref<16x1xf32, #tpu.memory_space<vmem>>, vector<16x1xf32>
    %204 = vector.broadcast %203 : vector<16x1xf32> to vector<16x256xf32>
    %205 = arith.addf %202, %204 : vector<16x256xf32>
    %c0_112 = arith.constant 0 : index
    %c0_113 = arith.constant 0 : index
    %c0_114 = arith.constant 0 : index
    %206 = vector.load %arg1[%c0_112, %c0_113, %c0_114] : memref<2x16x256xf32, #tpu.memory_space<vmem>>, vector<1x16x256xf32>
    %207 = vector.shape_cast %206 : vector<1x16x256xf32> to vector<16x256xf32>
    %208 = arith.addf %205, %207 : vector<16x256xf32>
    %c0_115 = arith.constant 0 : index
    %c0_116 = arith.constant 0 : index
    %c0_117 = arith.constant 0 : index
    %209 = vector.load %arg15[%c0_115, %c0_116, %c0_117] : memref<2x16x256xf32, #tpu.memory_space<vmem>>, vector<1x16x256xf32>
    %210 = vector.shape_cast %209 : vector<1x16x256xf32> to vector<16x256xf32>
    %211 = vector.shape_cast %208 : vector<16x256xf32> to vector<1x16x256xf32>
    tpu.vector_store %arg15[%c0_115, %c0_116, %c0_117], %211 {strides = array<i32>} : memref<2x16x256xf32, #tpu.memory_space<vmem>>, vector<1x16x256xf32>,
    %212 = vector.extract_strided_slice %195 {offsets = [0, 32], sizes = [256, 32], strides = [1, 1]} : vector<256x64xf32> to vector<256x32xf32>
    %213 = arith.truncf %212 : vector<256x32xf32> to vector<256x32xbf16>
    %c0_118 = arith.constant 0 : index
    %c0_119 = arith.constant 0 : index
    %214 = vector.load %arg12[%c0_118, %c0_119] : memref<32x16xbf16, #tpu.memory_space<vmem>>, vector<32x16xbf16>
    %cst_120 = arith.constant dense<0.000000e+00> : vector<16x256xf32>
    %215 = tpu.matmul %214, %213, %cst_120 {dimension_numbers = #tpu.dot_dimension_numbers<[0], [1], [1], [0], [0, 1, 1, 0], [], []>} : vector<32x16xbf16>, vector<256x32xbf16>, vector<16x256xf32> -> vector<16x256xf32>
    %c0_121 = arith.constant 0 : index
    %c0_122 = arith.constant 0 : index
    %216 = vector.load %arg13[%c0_121, %c0_122] : memref<16x1xf32, #tpu.memory_space<vmem>>, vector<16x1xf32>
    %217 = vector.broadcast %216 : vector<16x1xf32> to vector<16x256xf32>
    %218 = arith.mulf %215, %217 : vector<16x256xf32>
    %c0_123 = arith.constant 0 : index
    %c0_124 = arith.constant 0 : index
    %219 = vector.load %arg14[%c0_123, %c0_124] : memref<16x1xf32, #tpu.memory_space<vmem>>, vector<16x1xf32>
    %220 = vector.broadcast %219 : vector<16x1xf32> to vector<16x256xf32>
    %221 = arith.addf %218, %220 : vector<16x256xf32>
    %c1_125 = arith.constant 1 : index
    %c0_126 = arith.constant 0 : index
    %c0_127 = arith.constant 0 : index
    %222 = vector.load %arg1[%c1_125, %c0_126, %c0_127] : memref<2x16x256xf32, #tpu.memory_space<vmem>>, vector<1x16x256xf32>
    %223 = vector.shape_cast %222 : vector<1x16x256xf32> to vector<16x256xf32>
    %224 = arith.addf %221, %223 : vector<16x256xf32>
    %c1_128 = arith.constant 1 : index
    %c0_129 = arith.constant 0 : index
    %c0_130 = arith.constant 0 : index
    %225 = vector.load %arg15[%c1_128, %c0_129, %c0_130] : memref<2x16x256xf32, #tpu.memory_space<vmem>>, vector<1x16x256xf32>
    %226 = vector.shape_cast %225 : vector<1x16x256xf32> to vector<16x256xf32>
    %227 = vector.shape_cast %224 : vector<16x256xf32> to vector<1x16x256xf32>
    tpu.vector_store %arg15[%c1_128, %c0_129, %c0_130], %227 {strides = array<i32>} : memref<2x16x256xf32, #tpu.memory_space<vmem>>, vector<1x16x256xf32>,
    return
  }
  func.func @transform_0(%arg0: i32) -> (i32, i32, i32) {
    %c0_i32 = arith.constant 0 : i32
    %c0_i32_0 = arith.constant 0 : i32
    %c0_i32_1 = arith.constant 0 : i32
    return %arg0, %c0_i32, %c0_i32_0 : i32, i32, i32
  }
  func.func @transform_1(%arg0: i32) -> (i32, i32) {
    %c0_i32 = arith.constant 0 : i32
    %c0_i32_0 = arith.constant 0 : i32
    %c0_i32_1 = arith.constant 0 : i32
    return %c0_i32, %c0_i32_0 : i32, i32
  }
  func.func @transform_2(%arg0: i32) -> (i32, i32) {
    %c0_i32 = arith.constant 0 : i32
    %c0_i32_0 = arith.constant 0 : i32
    %c0_i32_1 = arith.constant 0 : i32
    return %c0_i32, %c0_i32_0 : i32, i32
  }
  func.func @transform_3(%arg0: i32) -> (i32, i32) {
    %c0_i32 = arith.constant 0 : i32
    %c0_i32_0 = arith.constant 0 : i32
    %c0_i32_1 = arith.constant 0 : i32
    return %c0_i32, %c0_i32_0 : i32, i32
  }
  func.func @transform_4(%arg0: i32) -> (i32, i32, i32) {
    %c0_i32 = arith.constant 0 : i32
    %c0_i32_0 = arith.constant 0 : i32
    %c0_i32_1 = arith.constant 0 : i32
    %c0_i32_2 = arith.constant 0 : i32
    return %c0_i32, %c0_i32_0, %c0_i32_1 : i32, i32, i32
  }
  func.func @transform_5(%arg0: i32) -> (i32, i32) {
    %c0_i32 = arith.constant 0 : i32
    %c0_i32_0 = arith.constant 0 : i32
    %c0_i32_1 = arith.constant 0 : i32
    return %c0_i32, %c0_i32_0 : i32, i32
  }
  func.func @transform_6(%arg0: i32) -> (i32, i32) {
    %c0_i32 = arith.constant 0 : i32
    %c0_i32_0 = arith.constant 0 : i32
    %c0_i32_1 = arith.constant 0 : i32
    return %c0_i32, %c0_i32_0 : i32, i32
  }
  func.func @transform_7(%arg0: i32) -> (i32, i32) {
    %c0_i32 = arith.constant 0 : i32
    %c0_i32_0 = arith.constant 0 : i32
    %c0_i32_1 = arith.constant 0 : i32
    return %c0_i32, %c0_i32_0 : i32, i32
  }
  func.func @transform_8(%arg0: i32) -> (i32, i32) {
    %c0_i32 = arith.constant 0 : i32
    %c0_i32_0 = arith.constant 0 : i32
    %c0_i32_1 = arith.constant 0 : i32
    return %c0_i32, %c0_i32_0 : i32, i32
  }
  func.func @transform_9(%arg0: i32) -> (i32, i32) {
    %c0_i32 = arith.constant 0 : i32
    %c0_i32_0 = arith.constant 0 : i32
    %c0_i32_1 = arith.constant 0 : i32
    return %c0_i32, %c0_i32_0 : i32, i32
  }
  func.func @transform_10(%arg0: i32) -> (i32, i32) {
    %c0_i32 = arith.constant 0 : i32
    %c0_i32_0 = arith.constant 0 : i32
    %c0_i32_1 = arith.constant 0 : i32
    return %c0_i32, %c0_i32_0 : i32, i32
  }
  func.func @transform_11(%arg0: i32) -> (i32, i32) {
    %c0_i32 = arith.constant 0 : i32
    %c0_i32_0 = arith.constant 0 : i32
    %c0_i32_1 = arith.constant 0 : i32
    return %c0_i32, %c0_i32_0 : i32, i32
  }
  func.func @transform_12(%arg0: i32) -> (i32, i32) {
    %c0_i32 = arith.constant 0 : i32
    %c0_i32_0 = arith.constant 0 : i32
    %c0_i32_1 = arith.constant 0 : i32
    return %c0_i32, %c0_i32_0 : i32, i32
  }
  func.func @transform_13(%arg0: i32) -> (i32, i32) {
    %c0_i32 = arith.constant 0 : i32
    %c0_i32_0 = arith.constant 0 : i32
    %c0_i32_1 = arith.constant 0 : i32
    return %c0_i32, %c0_i32_0 : i32, i32
  }
  func.func @transform_14(%arg0: i32) -> (i32, i32, i32) {
    %c0_i32 = arith.constant 0 : i32
    %c0_i32_0 = arith.constant 0 : i32
    %c0_i32_1 = arith.constant 0 : i32
    return %arg0, %c0_i32, %c0_i32_0 : i32, i32, i32
  }
}

</mosaic_0001>

<llo_original>
// kernel: tpu_custom_call.1
$region0: #{tpu_custom_call.1}
  #allocation0 [shape = 'u32[]', space=smem, size = 0x4, offset = 0x4, fixed_abs, tag = 'smem constant byte address 0x4 - core index']
  #allocation1 [shape = 'u32[144,128]{1,0:T(1,128)}', space=vmem, size = 0x12000, scoped, tag = 'internal scratch']
  #allocation2 [shape = 'f32[18,18,64]{2,1,0:T(8,128)}', space=vmem, size = 0x36000, scoped, tag = 'scratch operand']
  %s0 = inlined_call_operand.hbm [shape: f32[4,16,256], index: 0, kind: input, shape index: {}]
  %s1 = inlined_call_operand.vmem [shape: bf16[16,32], index: 1, kind: input, shape index: {}]
  %s2 = inlined_call_operand.vmem [shape: f32[1,32], index: 2, kind: input, shape index: {}]
  %s3 = inlined_call_operand.vmem [shape: f32[1,32], index: 3, kind: input, shape index: {}]
  %s4 = inlined_call_operand.vmem [shape: f32[3,3,64], index: 4, kind: input, shape index: {}]
  %s5 = inlined_call_operand.vmem [shape: f32[1,64], index: 5, kind: input, shape index: {}]
  %s6 = inlined_call_operand.vmem [shape: f32[1,64], index: 6, kind: input, shape index: {}]
  %s7 = inlined_call_operand.vmem [shape: f32[32,8], index: 7, kind: input, shape index: {}]
  %s8 = inlined_call_operand.vmem [shape: f32[1,8], index: 8, kind: input, shape index: {}]
  %s9 = inlined_call_operand.vmem [shape: f32[8,32], index: 9, kind: input, shape index: {}]
  %s10 = inlined_call_operand.vmem [shape: f32[1,32], index: 10, kind: input, shape index: {}]
  %s11 = inlined_call_operand.vmem [shape: bf16[32,16], index: 11, kind: input, shape index: {}]
  %s12 = inlined_call_operand.vmem [shape: f32[16,1], index: 12, kind: input, shape index: {}]
  %s13 = inlined_call_operand.vmem [shape: f32[16,1], index: 13, kind: input, shape index: {}]
  %s14 = inlined_call_operand.hbm [shape: f32[4,16,256], index: 14, kind: output, shape index: {}]
  %s15 = sld [smem:[#allocation0]]
  $region93: #{tpu_custom_call.1} parent=0
    _
  %s17 = ssub.s32 1, %s15
  %s18 = scalar_select 0, %s17, %s15
  $region1: #{tpu_custom_call.1} parent=0
    #allocation3 [shape = 'u8[65536]{0}', space=vmem, size = 0x10000, scoped, tag = 'input window, operand 0']
    #allocation4 [shape = 's32[2]{0}', space=sflag, size = 0x8, scoped, tag = 'scoped memory for tpu_custom_call.1']
    #allocation5 [shape = 's32[2]{0}', space=sflag, size = 0x8, scoped, tag = 'scoped memory for tpu_custom_call.1']
    #allocation6 [shape = 'u8[65536]{0}', space=vmem, size = 0x10000, scoped, tag = 'output window, operand 0']
    %19 = vsyncpa [#allocation4], 0
    %s20 = scalar_lea.sflag [#allocation4], 1
    %21 = vsyncpa %s20, 0
    %22 = vsyncpa [#allocation5], 0
    %s23 = scalar_lea.sflag [#allocation5], 1
    %24 = vsyncpa %s23, 0
    loop: start=0, step=1, limit=4
    $region2: #{tpu_custom_call.1} parent=1 // loop_pre_header
      _
    $region3: #{tpu_custom_call.1} parent=1 // loop_header
      %s26 = sphi 0, %s30
      %p27 = scmp.ge.s32.totalorder %s26, 4
      %s36 = sphi 0, %s38
      %s39 = sphi 0, %s36
      %s40 = sphi 0, %s39
      %s56 = sphi 0, %s40
      %s60 = sphi 0, %s60
      %s62 = sphi 0, %s60
      %s63 = sphi 0, %s62
      %s77 = sphi 0, %s63
      %s81 = sphi 0, %s81
      %s83 = sphi 0, %s81
      %s84 = sphi 0, %s83
      %s98 = sphi 0, %s84
      %s102 = sphi 0, %s102
      %s104 = sphi 0, %s102
      %s105 = sphi 0, %s104
      %s119 = sphi 0, %s105
      %s123 = sphi 0, %s123
      %s125 = sphi 0, %s123
      %s126 = sphi 0, %s125
      %s140 = sphi 0, %s126
      %s144 = sphi 0, %s144
      %s146 = sphi 0, %s144
      %s147 = sphi 0, %s146
      %s161 = sphi 0, %s147
      %s165 = sphi 0, %s165
      %s167 = sphi 0, %s165
      %s168 = sphi 0, %s167
      %s182 = sphi 0, %s168
      %s186 = sphi 0, %s186
      %s188 = sphi 0, %s186
      %s189 = sphi 0, %s188
      %s203 = sphi 0, %s189
      %s207 = sphi 0, %s207
      %s209 = sphi 0, %s207
      %s210 = sphi 0, %s209
      %s224 = sphi 0, %s210
      %s228 = sphi 0, %s228
      %s230 = sphi 0, %s228
      %s231 = sphi 0, %s230
      %s245 = sphi 0, %s231
      %s249 = sphi 0, %s249
      %s251 = sphi 0, %s249
      %s252 = sphi 0, %s251
      %s266 = sphi 0, %s252
      %s270 = sphi 0, %s270
      %s272 = sphi 0, %s270
      %s273 = sphi 0, %s272
      %s287 = sphi 0, %s273
      %s291 = sphi 0, %s291
      %s293 = sphi 0, %s291
      %s294 = sphi 0, %s293
      %s308 = sphi 0, %s294
      %s312 = sphi 0, %s312
      %s314 = sphi 0, %s312
      %s315 = sphi 0, %s314
      %s329 = sphi 0, %s315
      %s335 = sphi 0, %s337
      %s338 = sphi 0, %s335
      %s339 = sphi 0, %s338
      %s355 = sphi 0, %s339
    $region4: #{tpu_custom_call.1} parent=1 // loop_header_branch
      %29 = sbr.rel (%p27) target = $region8
    $region5: #{tpu_custom_call.1} parent=1 // loop_body
      %s31 = ssub.s32 %s26, 1
      %s32 = ssub.s32 %s26, 2
      %s33 = sadd.s32 %s26, 1
      %s34 = ssub.s32 %s26, %s33
      %p35 = scmp.eq.s32.totalorder %s34, 0
      %s37 = sadd.s32 %s36, 1
      %s38 = scalar_select %p35, %s36, %s37
      %p41 = pneg %p35
      %p42 = scmp.eq.s32.totalorder %s26, 1
      %p43 = por %p41, %p42
      %p44 = scmp.ne.s32.totalorder %s36, %s39
      %p45 = scmp.eq.s32.totalorder %s26, 0
      %p46 = por %p44, %p45
      %p47 = scmp.ne.s32.totalorder %s36, %s39
      %p48 = scmp.eq.s32.totalorder %s31, 1
      %p49 = por %p47, %p48
      %p50 = scmp.ne.s32.totalorder %s39, %s40
      %p51 = scmp.eq.s32.totalorder %s31, 0
      %p52 = por %p50, %p51
      %p53 = scmp.ne.s32.totalorder %s39, %s40
      %p54 = scmp.eq.s32.totalorder %s32, 1
      %p55 = por %p53, %p54
      %p57 = scmp.ne.s32.totalorder %s40, %s56
      %p58 = scmp.eq.s32.totalorder %s32, 0
      %p59 = por %p57, %p58
      %s61 = sadd.s32 %s60, 1
      %p64 = scmp.eq.s32.totalorder %s26, 1
      %p65 = scmp.ne.s32.totalorder %s60, %s62
      %p66 = scmp.eq.s32.totalorder %s26, 0
      %p67 = por %p65, %p66
      %p68 = scmp.ne.s32.totalorder %s60, %s62
      %p69 = scmp.eq.s32.totalorder %s31, 1
      %p70 = por %p68, %p69
      %p71 = scmp.ne.s32.totalorder %s62, %s63
      %p72 = scmp.eq.s32.totalorder %s31, 0
      %p73 = por %p71, %p72
      %p74 = scmp.ne.s32.totalorder %s62, %s63
      %p75 = scmp.eq.s32.totalorder %s32, 1
      %p76 = por %p74, %p75
      %p78 = scmp.ne.s32.totalorder %s63, %s77
      %p79 = scmp.eq.s32.totalorder %s32, 0
      %p80 = por %p78, %p79
      %s82 = sadd.s32 %s81, 1
      %p85 = scmp.eq.s32.totalorder %s26, 1
      %p86 = scmp.ne.s32.totalorder %s81, %s83
      %p87 = scmp.eq.s32.totalorder %s26, 0
      %p88 = por %p86, %p87
      %p89 = scmp.ne.s32.totalorder %s81, %s83
      %p90 = scmp.eq.s32.totalorder %s31, 1
      %p91 = por %p89, %p90
      %p92 = scmp.ne.s32.totalorder %s83, %s84
      %p93 = scmp.eq.s32.totalorder %s31, 0
      %p94 = por %p92, %p93
      %p95 = scmp.ne.s32.totalorder %s83, %s84
      %p96 = scmp.eq.s32.totalorder %s32, 1
      %p97 = por %p95, %p96
      %p99 = scmp.ne.s32.totalorder %s84, %s98
      %p100 = scmp.eq.s32.totalorder %s32, 0
      %p101 = por %p99, %p100
      %s103 = sadd.s32 %s102, 1
      %p106 = scmp.eq.s32.totalorder %s26, 1
      %p107 = scmp.ne.s32.totalorder %s102, %s104
      %p108 = scmp.eq.s32.totalorder %s26, 0
      %p109 = por %p107, %p108
      %p110 = scmp.ne.s32.totalorder %s102, %s104
      %p111 = scmp.eq.s32.totalorder %s31, 1
      %p112 = por %p110, %p111
      %p113 = scmp.ne.s32.totalorder %s104, %s105
      %p114 = scmp.eq.s32.totalorder %s31, 0
      %p115 = por %p113, %p114
      %p116 = scmp.ne.s32.totalorder %s104, %s105
      %p117 = scmp.eq.s32.totalorder %s32, 1
      %p118 = por %p116, %p117
      %p120 = scmp.ne.s32.totalorder %s105, %s119
      %p121 = scmp.eq.s32.totalorder %s32, 0
      %p122 = por %p120, %p121
      %s124 = sadd.s32 %s123, 1
      %p127 = scmp.eq.s32.totalorder %s26, 1
      %p128 = scmp.ne.s32.totalorder %s123, %s125
      %p129 = scmp.eq.s32.totalorder %s26, 0
      %p130 = por %p128, %p129
      %p131 = scmp.ne.s32.totalorder %s123, %s125
      %p132 = scmp.eq.s32.totalorder %s31, 1
      %p133 = por %p131, %p132
      %p134 = scmp.ne.s32.totalorder %s125, %s126
      %p135 = scmp.eq.s32.totalorder %s31, 0
      %p136 = por %p134, %p135
      %p137 = scmp.ne.s32.totalorder %s125, %s126
      %p138 = scmp.eq.s32.totalorder %s32, 1
      %p139 = por %p137, %p138
      %p141 = scmp.ne.s32.totalorder %s126, %s140
      %p142 = scmp.eq.s32.totalorder %s32, 0
      %p143 = por %p141, %p142
      %s145 = sadd.s32 %s144, 1
      %p148 = scmp.eq.s32.totalorder %s26, 1
      %p149 = scmp.ne.s32.totalorder %s144, %s146
      %p150 = scmp.eq.s32.totalorder %s26, 0
      %p151 = por %p149, %p150
      %p152 = scmp.ne.s32.totalorder %s144, %s146
      %p153 = scmp.eq.s32.totalorder %s31, 1
      %p154 = por %p152, %p153
      %p155 = scmp.ne.s32.totalorder %s146, %s147
      %p156 = scmp.eq.s32.totalorder %s31, 0
      %p157 = por %p155, %p156
      %p158 = scmp.ne.s32.totalorder %s146, %s147
      %p159 = scmp.eq.s32.totalorder %s32, 1
      %p160 = por %p158, %p159
      %p162 = scmp.ne.s32.totalorder %s147, %s161
      %p163 = scmp.eq.s32.totalorder %s32, 0
      %p164 = por %p162, %p163
      %s166 = sadd.s32 %s165, 1
      %p169 = scmp.eq.s32.totalorder %s26, 1
      %p170 = scmp.ne.s32.totalorder %s165, %s167
      %p171 = scmp.eq.s32.totalorder %s26, 0
      %p172 = por %p170, %p171
      %p173 = scmp.ne.s32.totalorder %s165, %s167
      %p174 = scmp.eq.s32.totalorder %s31, 1
      %p175 = por %p173, %p174
      %p176 = scmp.ne.s32.totalorder %s167, %s168
      %p177 = scmp.eq.s32.totalorder %s31, 0
      %p178 = por %p176, %p177
      %p179 = scmp.ne.s32.totalorder %s167, %s168
      %p180 = scmp.eq.s32.totalorder %s32, 1
      %p181 = por %p179, %p180
      %p183 = scmp.ne.s32.totalorder %s168, %s182
      %p184 = scmp.eq.s32.totalorder %s32, 0
      %p185 = por %p183, %p184
      %s187 = sadd.s32 %s186, 1
      %p190 = scmp.eq.s32.totalorder %s26, 1
      %p191 = scmp.ne.s32.totalorder %s186, %s188
      %p192 = scmp.eq.s32.totalorder %s26, 0
      %p193 = por %p191, %p192
      %p194 = scmp.ne.s32.totalorder %s186, %s188
      %p195 = scmp.eq.s32.totalorder %s31, 1
      %p196 = por %p194, %p195
      %p197 = scmp.ne.s32.totalorder %s188, %s189
      %p198 = scmp.eq.s32.totalorder %s31, 0
      %p199 = por %p197, %p198
      %p200 = scmp.ne.s32.totalorder %s188, %s189
      %p201 = scmp.eq.s32.totalorder %s32, 1
      %p202 = por %p200, %p201
      %p204 = scmp.ne.s32.totalorder %s189, %s203
      %p205 = scmp.eq.s32.totalorder %s32, 0
      %p206 = por %p204, %p205
      %s208 = sadd.s32 %s207, 1
      %p211 = scmp.eq.s32.totalorder %s26, 1
      %p212 = scmp.ne.s32.totalorder %s207, %s209
      %p213 = scmp.eq.s32.totalorder %s26, 0
      %p214 = por %p212, %p213
      %p215 = scmp.ne.s32.totalorder %s207, %s209
      %p216 = scmp.eq.s32.totalorder %s31, 1
      %p217 = por %p215, %p216
      %p218 = scmp.ne.s32.totalorder %s209, %s210
      %p219 = scmp.eq.s32.totalorder %s31, 0
      %p220 = por %p218, %p219
      %p221 = scmp.ne.s32.totalorder %s209, %s210
      %p222 = scmp.eq.s32.totalorder %s32, 1
      %p223 = por %p221, %p222
      %p225 = scmp.ne.s32.totalorder %s210, %s224
      %p226 = scmp.eq.s32.totalorder %s32, 0
      %p227 = por %p225, %p226
      %s229 = sadd.s32 %s228, 1
      %p232 = scmp.eq.s32.totalorder %s26, 1
      %p233 = scmp.ne.s32.totalorder %s228, %s230
      %p234 = scmp.eq.s32.totalorder %s26, 0
      %p235 = por %p233, %p234
      %p236 = scmp.ne.s32.totalorder %s228, %s230
      %p237 = scmp.eq.s32.totalorder %s31, 1
      %p238 = por %p236, %p237
      %p239 = scmp.ne.s32.totalorder %s230, %s231
      %p240 = scmp.eq.s32.totalorder %s31, 0
      %p241 = por %p239, %p240
      %p242 = scmp.ne.s32.totalorder %s230, %s231
      %p243 = scmp.eq.s32.totalorder %s32, 1
      %p244 = por %p242, %p243
      %p246 = scmp.ne.s32.totalorder %s231, %s245
      %p247 = scmp.eq.s32.totalorder %s32, 0
      %p248 = por %p246, %p247
      %s250 = sadd.s32 %s249, 1
      %p253 = scmp.eq.s32.totalorder %s26, 1
      %p254 = scmp.ne.s32.totalorder %s249, %s251
      %p255 = scmp.eq.s32.totalorder %s26, 0
      %p256 = por %p254, %p255
      %p257 = scmp.ne.s32.totalorder %s249, %s251
      %p258 = scmp.eq.s32.totalorder %s31, 1
      %p259 = por %p257, %p258
      %p260 = scmp.ne.s32.totalorder %s251, %s252
      %p261 = scmp.eq.s32.totalorder %s31, 0
      %p262 = por %p260, %p261
      %p263 = scmp.ne.s32.totalorder %s251, %s252
      %p264 = scmp.eq.s32.totalorder %s32, 1
      %p265 = por %p263, %p264
      %p267 = scmp.ne.s32.totalorder %s252, %s266
      %p268 = scmp.eq.s32.totalorder %s32, 0
      %p269 = por %p267, %p268
      %s271 = sadd.s32 %s270, 1
      %p274 = scmp.eq.s32.totalorder %s26, 1
      %p275 = scmp.ne.s32.totalorder %s270, %s272
      %p276 = scmp.eq.s32.totalorder %s26, 0
      %p277 = por %p275, %p276
      %p278 = scmp.ne.s32.totalorder %s270, %s272
      %p279 = scmp.eq.s32.totalorder %s31, 1
      %p280 = por %p278, %p279
      %p281 = scmp.ne.s32.totalorder %s272, %s273
      %p282 = scmp.eq.s32.totalorder %s31, 0
      %p283 = por %p281, %p282
      %p284 = scmp.ne.s32.totalorder %s272, %s273
      %p285 = scmp.eq.s32.totalorder %s32, 1
      %p286 = por %p284, %p285
      %p288 = scmp.ne.s32.totalorder %s273, %s287
      %p289 = scmp.eq.s32.totalorder %s32, 0
      %p290 = por %p288, %p289
      %s292 = sadd.s32 %s291, 1
      %p295 = scmp.eq.s32.totalorder %s26, 1
      %p296 = scmp.ne.s32.totalorder %s291, %s293
      %p297 = scmp.eq.s32.totalorder %s26, 0
      %p298 = por %p296, %p297
      %p299 = scmp.ne.s32.totalorder %s291, %s293
      %p300 = scmp.eq.s32.totalorder %s31, 1
      %p301 = por %p299, %p300
      %p302 = scmp.ne.s32.totalorder %s293, %s294
      %p303 = scmp.eq.s32.totalorder %s31, 0
      %p304 = por %p302, %p303
      %p305 = scmp.ne.s32.totalorder %s293, %s294
      %p306 = scmp.eq.s32.totalorder %s32, 1
      %p307 = por %p305, %p306
      %p309 = scmp.ne.s32.totalorder %s294, %s308
      %p310 = scmp.eq.s32.totalorder %s32, 0
      %p311 = por %p309, %p310
      %s313 = sadd.s32 %s312, 1
      %p316 = scmp.eq.s32.totalorder %s26, 1
      %p317 = scmp.ne.s32.totalorder %s312, %s314
      %p318 = scmp.eq.s32.totalorder %s26, 0
      %p319 = por %p317, %p318
      %p320 = scmp.ne.s32.totalorder %s312, %s314
      %p321 = scmp.eq.s32.totalorder %s31, 1
      %p322 = por %p320, %p321
      %p323 = scmp.ne.s32.totalorder %s314, %s315
      %p324 = scmp.eq.s32.totalorder %s31, 0
      %p325 = por %p323, %p324
      %p326 = scmp.ne.s32.totalorder %s314, %s315
      %p327 = scmp.eq.s32.totalorder %s32, 1
      %p328 = por %p326, %p327
      %p330 = scmp.ne.s32.totalorder %s315, %s329
      %p331 = scmp.eq.s32.totalorder %s32, 0
      %p332 = por %p330, %p331
      %s333 = ssub.s32 %s26, %s33
      %p334 = scmp.eq.s32.totalorder %s333, 0
      %s336 = sadd.s32 %s335, 1
      %s337 = scalar_select %p334, %s335, %s336
      %p340 = pneg %p334
      %p341 = scmp.eq.s32.totalorder %s26, 1
      %p342 = por %p340, %p341
      %p343 = scmp.ne.s32.totalorder %s335, %s338
      %p344 = scmp.eq.s32.totalorder %s26, 0
      %p345 = por %p343, %p344
      %p346 = scmp.ne.s32.totalorder %s335, %s338
      %p347 = scmp.eq.s32.totalorder %s31, 1
      %p348 = por %p346, %p347
      %p349 = scmp.ne.s32.totalorder %s338, %s339
      %p350 = scmp.eq.s32.totalorder %s31, 0
      %p351 = por %p349, %p350
      %p352 = scmp.ne.s32.totalorder %s338, %s339
      %p353 = scmp.eq.s32.totalorder %s32, 1
      %p354 = por %p352, %p353
      %p356 = scmp.ne.s32.totalorder %s339, %s355
      %p357 = scmp.eq.s32.totalorder %s32, 0
      %p358 = por %p356, %p357
      %p359 = scmp.le.s32.totalorder 1, %s26
      %p360 = scmp.lt.s32.totalorder %s26, 3
      %p361 = pnand %p359, %p360
      %p362 = pneg %p361
      // Predicated region
      $region9: #{tpu_custom_call.1} parent=5 // pred_check
        _
      $region10: #{tpu_custom_call.1} parent=5 // pred_check_branch
        %364 = sbr.rel (%p361) target = $region12
      $region11: #{tpu_custom_call.1} parent=5 // pred_region
        %s365 = ssub.s32 %s26, 1
        // Predicated region
        $region13: #{tpu_custom_call.1} parent=11 // pred_check
          %p366 = pneg %p73
        $region14: #{tpu_custom_call.1} parent=11 // pred_check_branch
          %368 = sbr.rel (%p366) target = $region16
        $region15: #{tpu_custom_call.1} parent=11 // pred_region
          _
        $region16: #{tpu_custom_call.1} parent=11 // pred_fallthru
          _
        // Predicated region
        $region17: #{tpu_custom_call.1} parent=11 // pred_check
          %p369 = pneg %p94
        $region18: #{tpu_custom_call.1} parent=11 // pred_check_branch
          %371 = sbr.rel (%p369) target = $region20
        $region19: #{tpu_custom_call.1} parent=11 // pred_region
          _
        $region20: #{tpu_custom_call.1} parent=11 // pred_fallthru
          _
        // Predicated region
        $region21: #{tpu_custom_call.1} parent=11 // pred_check
          %p372 = pneg %p115
        $region22: #{tpu_custom_call.1} parent=11 // pred_check_branch
          %374 = sbr.rel (%p372) target = $region24
        $region23: #{tpu_custom_call.1} parent=11 // pred_region
          _
        $region24: #{tpu_custom_call.1} parent=11 // pred_fallthru
          _
        // Predicated region
        $region25: #{tpu_custom_call.1} parent=11 // pred_check
          %p375 = pneg %p136
        $region26: #{tpu_custom_call.1} parent=11 // pred_check_branch
          %377 = sbr.rel (%p375) target = $region28
        $region27: #{tpu_custom_call.1} parent=11 // pred_region
          _
        $region28: #{tpu_custom_call.1} parent=11 // pred_fallthru
          _
        // Predicated region
        $region29: #{tpu_custom_call.1} parent=11 // pred_check
          %p378 = pneg %p157
        $region30: #{tpu_custom_call.1} parent=11 // pred_check_branch
          %380 = sbr.rel (%p378) target = $region32
        $region31: #{tpu_custom_call.1} parent=11 // pred_region
          _
        $region32: #{tpu_custom_call.1} parent=11 // pred_fallthru
          _
        // Predicated region
        $region33: #{tpu_custom_call.1} parent=11 // pred_check
          %p381 = pneg %p178
        $region34: #{tpu_custom_call.1} parent=11 // pred_check_branch
          %383 = sbr.rel (%p381) target = $region36
        $region35: #{tpu_custom_call.1} parent=11 // pred_region
          _
        $region36: #{tpu_custom_call.1} parent=11 // pred_fallthru
          _
        // Predicated region
        $region37: #{tpu_custom_call.1} parent=11 // pred_check
          %p384 = pneg %p199
        $region38: #{tpu_custom_call.1} parent=11 // pred_check_branch
          %386 = sbr.rel (%p384) target = $region40
        $region39: #{tpu_custom_call.1} parent=11 // pred_region
          _
        $region40: #{tpu_custom_call.1} parent=11 // pred_fallthru
          _
        // Predicated region
        $region41: #{tpu_custom_call.1} parent=11 // pred_check
          %p387 = pneg %p220
        $region42: #{tpu_custom_call.1} parent=11 // pred_check_branch
          %389 = sbr.rel (%p387) target = $region44
        $region43: #{tpu_custom_call.1} parent=11 // pred_region
          _
        $region44: #{tpu_custom_call.1} parent=11 // pred_fallthru
          _
        // Predicated region
        $region45: #{tpu_custom_call.1} parent=11 // pred_check
          %p390 = pneg %p241
        $region46: #{tpu_custom_call.1} parent=11 // pred_check_branch
          %392 = sbr.rel (%p390) target = $region48
        $region47: #{tpu_custom_call.1} parent=11 // pred_region
          _
        $region48: #{tpu_custom_call.1} parent=11 // pred_fallthru
          _
        // Predicated region
        $region49: #{tpu_custom_call.1} parent=11 // pred_check
          %p393 = pneg %p262
        $region50: #{tpu_custom_call.1} parent=11 // pred_check_branch
          %395 = sbr.rel (%p393) target = $region52
        $region51: #{tpu_custom_call.1} parent=11 // pred_region
          _
        $region52: #{tpu_custom_call.1} parent=11 // pred_fallthru
          _
        // Predicated region
        $region53: #{tpu_custom_call.1} parent=11 // pred_check
          %p396 = pneg %p283
        $region54: #{tpu_custom_call.1} parent=11 // pred_check_branch
          %398 = sbr.rel (%p396) target = $region56
        $region55: #{tpu_custom_call.1} parent=11 // pred_region
          _
        $region56: #{tpu_custom_call.1} parent=11 // pred_fallthru
          _
        // Predicated region
        $region57: #{tpu_custom_call.1} parent=11 // pred_check
          %p399 = pneg %p304
        $region58: #{tpu_custom_call.1} parent=11 // pred_check_branch
          %401 = sbr.rel (%p399) target = $region60
        $region59: #{tpu_custom_call.1} parent=11 // pred_region
          _
        $region60: #{tpu_custom_call.1} parent=11 // pred_fallthru
          _
        // Predicated region
        $region61: #{tpu_custom_call.1} parent=11 // pred_check
          %p402 = pneg %p325
        $region62: #{tpu_custom_call.1} parent=11 // pred_check_branch
          %404 = sbr.rel (%p402) target = $region64
        $region63: #{tpu_custom_call.1} parent=11 // pred_region
          _
        $region64: #{tpu_custom_call.1} parent=11 // pred_fallthru
          _
      $region12: #{tpu_custom_call.1} parent=5 // pred_fallthru
        _
      %p405 = scmp.lt.s32.totalorder %s26, 2
      // Predicated region
      $region65: #{tpu_custom_call.1} parent=5 // pred_check
        %p406 = pneg %p405
      $region66: #{tpu_custom_call.1} parent=5 // pred_check_branch
        %408 = sbr.rel (%p406) target = $region68
      $region67: #{tpu_custom_call.1} parent=5 // pred_region
        // Predicated region
        $region69: #{tpu_custom_call.1} parent=67 // pred_check
          %p409 = pneg %p46
        $region70: #{tpu_custom_call.1} parent=67 // pred_check_branch
          %411 = sbr.rel (%p409) target = $region72
        $region71: #{tpu_custom_call.1} parent=67 // pred_region
          %s412 = sand.u32 %s36, 1
          %s413 = scalar_lea.sflag [#allocation4], %s412
          %s414 = sand.u32 %s36, 1
          %s415 = smul.addr %s414, 64
          %s416 = scalar_lea.vmem [#allocation3], %s415
          %s417 = smul.u32 2, %s26
          %s419 = ssub.s32 1024, 1024
          %420 = vsyncadd %s413, %s419
          %s421 = smul.addr %s417, 4
          %s422 = smul.addr %s421, 128
          %s423 = scalar_lea.hbm %s0, %s422
          %s424 = sshll.u32 %s416, 4
          %s425 = int_to_ptr.vmem [resolvable:$true] %s424
          %430 = dma.hbm_to_vmem [thread:$0]  %s423, 1024, %s425, %s413, 256, 256, 16
        $region72: #{tpu_custom_call.1} parent=67 // pred_fallthru
          _
      $region68: #{tpu_custom_call.1} parent=5 // pred_fallthru
        _
      %p431 = scmp.le.s32.totalorder 1, %s26
      %p432 = scmp.lt.s32.totalorder %s26, 3
      %p433 = pnand %p431, %p432
      %p434 = pneg %p433
      // Predicated region
      $region73: #{tpu_custom_call.1} parent=5 // pred_check
        _
      $region74: #{tpu_custom_call.1} parent=5 // pred_check_branch
        %436 = sbr.rel (%p433) target = $region76
      $region75: #{tpu_custom_call.1} parent=5 // pred_region
        %s437 = ssub.s32 %s26, 1
        %s438 = sand.u32 %s39, 1
        %s439 = scalar_lea.sflag [#allocation4], %s438
        %s440 = sand.u32 %s39, 1
        %s441 = smul.addr %s440, 64
        %s442 = scalar_lea.vmem [#allocation3], %s441
        // Predicated region
        $region77: #{tpu_custom_call.1} parent=75 // pred_check
          %p443 = pneg %p52
        $region78: #{tpu_custom_call.1} parent=75 // pred_check_branch
          %445 = sbr.rel (%p443) target = $region80
        $region79: #{tpu_custom_call.1} parent=75 // pred_region
          %446 = dma.done %s439, 1024
        $region80: #{tpu_custom_call.1} parent=75 // pred_fallthru
          _
        %s447 = sand.u32 %s39, 1
        %s448 = scalar_lea.sflag [#allocation4], %s447
        %s449 = sand.u32 %s39, 1
        %s450 = smul.addr %s449, 64
        %s451 = scalar_lea.vmem [#allocation3], %s450
        %p452 = pneg %p52
        %p453 = pneg %p49
        %p454 = pneg %p73
        %p455 = pneg %p70
        %p456 = pneg %p94
        %p457 = pneg %p91
        %p458 = pneg %p115
        %p459 = pneg %p112
        %p460 = pneg %p136
        %p461 = pneg %p133
        %p462 = pneg %p157
        %p463 = pneg %p154
        %p464 = pneg %p178
        %p465 = pneg %p175
        %p466 = pneg %p199
        %p467 = pneg %p196
        %p468 = pneg %p220
        %p469 = pneg %p217
        %p470 = pneg %p241
        %p471 = pneg %p238
        %p472 = pneg %p262
        %p473 = pneg %p259
        %p474 = pneg %p283
        %p475 = pneg %p280
        %p476 = pneg %p304
        %p477 = pneg %p301
        %p478 = pneg %p325
        %p479 = pneg %p322
        %p480 = pneg %p351
        %p481 = pneg %p348
        %s482 = sand.u32 %s338, 1
        %s483 = scalar_lea.sflag [#allocation5], %s482
        %s484 = sand.u32 %s338, 1
        %s485 = smul.addr %s484, 64
        %s486 = scalar_lea.vmem [#allocation6], %s485
        %s487 = smul.u32 2, %s31
        %s488 = smul.u32 2, %s31
        %vm490 = vcmask 523264
        %491 = vst.msk [vmem:[#allocation2] sm:$0xff] %vm490, 0.0
        %492 = vst.msk [vmem:[#allocation2 + $0x8] sm:$0xff] %vm490, 0.0
        %vm493 = vcmask 517120
        %494 = vst.msk [vmem:[#allocation2 + $0x10] sm:$0x3] %vm493, 0.0
        %s495 = scalar_lea.vmem [#allocation2], 408
        %496 = vst.msk [vmem:[%s495] sm:$0xff] %vm490, 0.0
        %497 = vst.msk [vmem:[%s495 + $0x8] sm:$0xff] %vm490, 0.0
        %498 = vst.msk [vmem:[%s495 + $0x10] sm:$0x3] %vm493, 0.0
        %s499 = scalar_lea.vmem [#allocation2], 24
        %vm500 = vcmask 516096
        %501 = vst.msk [vmem:[%s499] sm:$0x1] %vm500, 0.0
        %502 = vst.msk [vmem:[%s499 + $0x18] sm:$0x1] %vm500, 0.0
        %503 = vst.msk [vmem:[%s499 + $0x30] sm:$0x1] %vm500, 0.0
        %504 = vst.msk [vmem:[%s499 + $0x48] sm:$0x1] %vm500, 0.0
        %505 = vst.msk [vmem:[%s499 + $0x60] sm:$0x1] %vm500, 0.0
        %506 = vst.msk [vmem:[%s499 + $0x78] sm:$0x1] %vm500, 0.0
        %507 = vst.msk [vmem:[%s499 + $0x90] sm:$0x1] %vm500, 0.0
        %508 = vst.msk [vmem:[%s499 + $0xa8] sm:$0x1] %vm500, 0.0
        %509 = vst.msk [vmem:[%s499 + $0xc0] sm:$0x1] %vm500, 0.0
        %510 = vst.msk [vmem:[%s499 + $0xd8] sm:$0x1] %vm500, 0.0
        %511 = vst.msk [vmem:[%s499 + $0xf0] sm:$0x1] %vm500, 0.0
        %512 = vst.msk [vmem:[%s499 + $0x108] sm:$0x1] %vm500, 0.0
        %513 = vst.msk [vmem:[%s499 + $0x120] sm:$0x1] %vm500, 0.0
        %514 = vst.msk [vmem:[%s499 + $0x138] sm:$0x1] %vm500, 0.0
        %515 = vst.msk [vmem:[%s499 + $0x150] sm:$0x1] %vm500, 0.0
        %516 = vst.msk [vmem:[%s499 + $0x168] sm:$0x1] %vm500, 0.0
        %517 = vst.msk [vmem:[%s499 + $0x11] sm:$0x1] %vm500, 0.0
        %518 = vst.msk [vmem:[%s499 + $0x29] sm:$0x1] %vm500, 0.0
        %519 = vst.msk [vmem:[%s499 + $0x41] sm:$0x1] %vm500, 0.0
        %520 = vst.msk [vmem:[%s499 + $0x59] sm:$0x1] %vm500, 0.0
        %521 = vst.msk [vmem:[%s499 + $0x71] sm:$0x1] %vm500, 0.0
        %522 = vst.msk [vmem:[%s499 + $0x89] sm:$0x1] %vm500, 0.0
        %523 = vst.msk [vmem:[%s499 + $0xa1] sm:$0x1] %vm500, 0.0
        %524 = vst.msk [vmem:[%s499 + $0xb9] sm:$0x1] %vm500, 0.0
        %525 = vst.msk [vmem:[%s499 + $0xd1] sm:$0x1] %vm500, 0.0
        %526 = vst.msk [vmem:[%s499 + $0xe9] sm:$0x1] %vm500, 0.0
        %527 = vst.msk [vmem:[%s499 + $0x101] sm:$0x1] %vm500, 0.0
        %528 = vst.msk [vmem:[%s499 + $0x119] sm:$0x1] %vm500, 0.0
        %529 = vst.msk [vmem:[%s499 + $0x131] sm:$0x1] %vm500, 0.0
        %530 = vst.msk [vmem:[%s499 + $0x149] sm:$0x1] %vm500, 0.0
        %531 = vst.msk [vmem:[%s499 + $0x161] sm:$0x1] %vm500, 0.0
        %532 = vst.msk [vmem:[%s499 + $0x179] sm:$0x1] %vm500, 0.0
        %v533 = vld [vmem:[%s442] sm:$0xff]
        %v534 = vld [vmem:[%s442 + $0x8] sm:$0xff]
        %v535 = vld [vmem:[%s442 + $0x10] sm:$0xff]
        %v536 = vld [vmem:[%s442 + $0x18] sm:$0xff]
        %v537 = vpack.c.bf16 %v535, %v533
        %v538 = vpack.c.bf16 %v536, %v534
        %v539 = vld [vmem:[%s1] sm:$0xf]
        %v540 = vld [vmem:[%s1 + $0x4] sm:$0xf]
        %541 = vxpose.xlu0.c.b16.start [1/8] %v537, 128
        %542 = vxpose.xlu0.c.b16.cont [2/8] 0, 128
        %543 = vxpose.xlu0.c.b16.cont [3/8] 0, 128
        %544 = vxpose.xlu0.c.b16.cont [4/8] 0, 128
        %545 = vxpose.xlu0.c.b16.cont [5/8] 0, 128
        %546 = vxpose.xlu0.c.b16.cont [6/8] 0, 128
        %547 = vxpose.xlu0.c.b16.cont [7/8] 0, 128
        %548 = vxpose.xlu0.c.b16.end [8/8] 0, 128
        %v549 = vpop.trf.xlu0
        %v550 = vpop.trf.xlu0
        %v551 = vpop.trf.xlu0
        %v552 = vpop.trf.xlu0
        %v553 = vpop.trf.xlu0
        %v554 = vpop.trf.xlu0
        %v555 = vpop.trf.xlu0
        %v556 = vpop.trf.xlu0
        %557 = vxpose.xlu0.c.b16.start [1/8] %v538, 128
        %558 = vxpose.xlu0.c.b16.cont [2/8] 0, 128
        %559 = vxpose.xlu0.c.b16.cont [3/8] 0, 128
        %560 = vxpose.xlu0.c.b16.cont [4/8] 0, 128
        %561 = vxpose.xlu0.c.b16.cont [5/8] 0, 128
        %562 = vxpose.xlu0.c.b16.cont [6/8] 0, 128
        %563 = vxpose.xlu0.c.b16.cont [7/8] 0, 128
        %564 = vxpose.xlu0.c.b16.end [8/8] 0, 128
        %v565 = vpop.trf.xlu0
        %v566 = vpop.trf.xlu0
        %v567 = vpop.trf.xlu0
        %v568 = vpop.trf.xlu0
        %v569 = vpop.trf.xlu0
        %v570 = vpop.trf.xlu0
        %v571 = vpop.trf.xlu0
        %v572 = vpop.trf.xlu0
        %v575 = vunpack.c.l.b16 %v539
        %v576 = vunpack.c.l.b16 %v540
        %v577 = vpack.c.b16 %v576, %v575
        %vm579 = vcmask 130048
        %v581 = vsel %vm579, %v549, 0
        %v584 = vsel %vm579, %v550, 0
        %v587 = vsel %vm579, %v551, 0
        %v590 = vsel %vm579, %v552, 0
        %v593 = vsel %vm579, %v553, 0
        %v596 = vsel %vm579, %v554, 0
        %v599 = vsel %vm579, %v555, 0
        %v602 = vsel %vm579, %v556, 0
        %v605 = vsel %vm579, %v565, 0
        %v608 = vsel %vm579, %v566, 0
        %v611 = vsel %vm579, %v567, 0
        %v614 = vsel %vm579, %v568, 0
        %v617 = vsel %vm579, %v569, 0
        %v620 = vsel %vm579, %v570, 0
        %v623 = vsel %vm579, %v571, 0
        %v626 = vsel %vm579, %v572, 0
        %628 = vmatprep.subr.bf16.mxu0 0
        %629 = vmatpush1.bf16.msra.mxu0 %v577
        %630 = vmatprep.subr.bf16.mxu0 0
        %631 = vmatpush1.bf16.msra.mxu0 0
        %632 = vmatprep.subr.bf16.mxu0 0
        %633 = vmatpush1.bf16.msra.mxu0 0
        %634 = vmatprep.subr.bf16.mxu0 0
        %635 = vmatpush1.bf16.msra.mxu0 0
        %636 = vmatprep.subr.bf16.mxu0 0
        %637 = vmatpush1.bf16.msra.mxu0 0
        %638 = vmatprep.subr.bf16.mxu0 0
        %639 = vmatpush1.bf16.msra.mxu0 0
        %640 = vmatprep.subr.bf16.mxu0 0
        %641 = vmatpush1.bf16.msra.mxu0 0
        %642 = vmatprep.subr.bf16.mxu0 0
        %643 = vmatpush1.bf16.msra.mxu0 0
        %644 = vmatprep.subr.bf16.mxu0 0
        %645 = vmatpush1.bf16.msra.mxu0 0
        %646 = vmatprep.subr.bf16.mxu0 0
        %647 = vmatpush1.bf16.msra.mxu0 0
        %648 = vmatprep.subr.bf16.mxu0 0
        %649 = vmatpush1.bf16.msra.mxu0 0
        %650 = vmatprep.subr.bf16.mxu0 0
        %651 = vmatpush1.bf16.msra.mxu0 0
        %652 = vmatprep.subr.bf16.mxu0 0
        %653 = vmatpush1.bf16.msra.mxu0 0
        %654 = vmatprep.subr.bf16.mxu0 0
        %655 = vmatpush1.bf16.msra.mxu0 0
        %656 = vmatprep.subr.bf16.mxu0 0
        %657 = vmatpush1.bf16.msra.mxu0 0
        %658 = vmatprep.subr.bf16.mxu0 0
        %659 = vmatpush1.bf16.msra.mxu0 0
        %660 = vmatprep.mubr.bf16.mxu0 0
        %661 = vmatmul.mubr.bf16.gmra.mrb[0].mxu0 %v581
        %v662 = vpop.f32.mrb[0].mxu0
        %v663 = vadd.f32 0.0, %v662
        %v664 = vpop.f32.mrb[0].mxu0
        %v665 = vpop.f32.mrb[0].mxu0
        %v666 = vadd.f32 0.0, %v665
        %v667 = vpop.f32.mrb[0].mxu0
        %668 = vmatprep.mubr.bf16.mxu0 0
        %669 = vmatmul.mubr.bf16.gmra.mrb[0].mxu0 %v584
        %v670 = vpop.f32.mrb[0].mxu0
        %v671 = vadd.f32 0.0, %v670
        %v672 = vpop.f32.mrb[0].mxu0
        %v673 = vpop.f32.mrb[0].mxu0
        %v674 = vadd.f32 0.0, %v673
        %v675 = vpop.f32.mrb[0].mxu0
        %676 = vmatprep.mubr.bf16.mxu0 0
        %677 = vmatmul.mubr.bf16.gmra.mrb[0].mxu0 %v587
        %v678 = vpop.f32.mrb[0].mxu0
        %v679 = vadd.f32 0.0, %v678
        %v680 = vpop.f32.mrb[0].mxu0
        %v681 = vpop.f32.mrb[0].mxu0
        %v682 = vadd.f32 0.0, %v681
        %v683 = vpop.f32.mrb[0].mxu0
        %684 = vmatprep.mubr.bf16.mxu0 0
        %685 = vmatmul.mubr.bf16.gmra.mrb[0].mxu0 %v590
        %v686 = vpop.f32.mrb[0].mxu0
        %v687 = vadd.f32 0.0, %v686
        %v688 = vpop.f32.mrb[0].mxu0
        %v689 = vpop.f32.mrb[0].mxu0
        %v690 = vadd.f32 0.0, %v689
        %v691 = vpop.f32.mrb[0].mxu0
        %692 = vmatprep.mubr.bf16.mxu0 0
        %693 = vmatmul.mubr.bf16.gmra.mrb[0].mxu0 %v593
        %v694 = vpop.f32.mrb[0].mxu0
        %v695 = vadd.f32 0.0, %v694
        %v696 = vpop.f32.mrb[0].mxu0
        %v697 = vpop.f32.mrb[0].mxu0
        %v698 = vadd.f32 0.0, %v697
        %v699 = vpop.f32.mrb[0].mxu0
        %700 = vmatprep.mubr.bf16.mxu0 0
        %701 = vmatmul.mubr.bf16.gmra.mrb[0].mxu0 %v596
        %v702 = vpop.f32.mrb[0].mxu0
        %v703 = vadd.f32 0.0, %v702
        %v704 = vpop.f32.mrb[0].mxu0
        %v705 = vpop.f32.mrb[0].mxu0
        %v706 = vadd.f32 0.0, %v705
        %v707 = vpop.f32.mrb[0].mxu0
        %708 = vmatprep.mubr.bf16.mxu0 0
        %709 = vmatmul.mubr.bf16.gmra.mrb[0].mxu0 %v599
        %v710 = vpop.f32.mrb[0].mxu0
        %v711 = vadd.f32 0.0, %v710
        %v712 = vpop.f32.mrb[0].mxu0
        %v713 = vpop.f32.mrb[0].mxu0
        %v714 = vadd.f32 0.0, %v713
        %v715 = vpop.f32.mrb[0].mxu0
        %716 = vmatprep.mubr.bf16.mxu0 0
        %717 = vmatmul.mubr.bf16.gmra.mrb[0].mxu0 %v602
        %v718 = vpop.f32.mrb[0].mxu0
        %v719 = vadd.f32 0.0, %v718
        %v720 = vpop.f32.mrb[0].mxu0
        %v721 = vpop.f32.mrb[0].mxu0
        %v722 = vadd.f32 0.0, %v721
        %v723 = vpop.f32.mrb[0].mxu0
        %724 = vmatprep.mubr.bf16.mxu0 0
        %725 = vmatmul.mubr.bf16.gmra.mrb[0].mxu0 %v605
        %v726 = vpop.f32.mrb[0].mxu0
        %v727 = vadd.f32 0.0, %v726
        %v728 = vpop.f32.mrb[0].mxu0
        %v729 = vpop.f32.mrb[0].mxu0
        %v730 = vadd.f32 0.0, %v729
        %v731 = vpop.f32.mrb[0].mxu0
        %732 = vmatprep.mubr.bf16.mxu0 0
        %733 = vmatmul.mubr.bf16.gmra.mrb[0].mxu0 %v608
        %v734 = vpop.f32.mrb[0].mxu0
        %v735 = vadd.f32 0.0, %v734
        %v736 = vpop.f32.mrb[0].mxu0
        %v737 = vpop.f32.mrb[0].mxu0
        %v738 = vadd.f32 0.0, %v737
        %v739 = vpop.f32.mrb[0].mxu0
        %740 = vmatprep.mubr.bf16.mxu0 0
        %741 = vmatmul.mubr.bf16.gmra.mrb[0].mxu0 %v611
        %v742 = vpop.f32.mrb[0].mxu0
        %v743 = vadd.f32 0.0, %v742
        %v744 = vpop.f32.mrb[0].mxu0
        %v745 = vpop.f32.mrb[0].mxu0
        %v746 = vadd.f32 0.0, %v745
        %v747 = vpop.f32.mrb[0].mxu0
        %748 = vmatprep.mubr.bf16.mxu0 0
        %749 = vmatmul.mubr.bf16.gmra.mrb[0].mxu0 %v614
        %v750 = vpop.f32.mrb[0].mxu0
        %v751 = vadd.f32 0.0, %v750
        %v752 = vpop.f32.mrb[0].mxu0
        %v753 = vpop.f32.mrb[0].mxu0
        %v754 = vadd.f32 0.0, %v753
        %v755 = vpop.f32.mrb[0].mxu0
        %756 = vmatprep.mubr.bf16.mxu0 0
        %757 = vmatmul.mubr.bf16.gmra.mrb[0].mxu0 %v617
        %v758 = vpop.f32.mrb[0].mxu0
        %v759 = vadd.f32 0.0, %v758
        %v760 = vpop.f32.mrb[0].mxu0
        %v761 = vpop.f32.mrb[0].mxu0
        %v762 = vadd.f32 0.0, %v761
        %v763 = vpop.f32.mrb[0].mxu0
        %764 = vmatprep.mubr.bf16.mxu0 0
        %765 = vmatmul.mubr.bf16.gmra.mrb[0].mxu0 %v620
        %v766 = vpop.f32.mrb[0].mxu0
        %v767 = vadd.f32 0.0, %v766
        %v768 = vpop.f32.mrb[0].mxu0
        %v769 = vpop.f32.mrb[0].mxu0
        %v770 = vadd.f32 0.0, %v769
        %v771 = vpop.f32.mrb[0].mxu0
        %772 = vmatprep.mubr.bf16.mxu0 0
        %773 = vmatmul.mubr.bf16.gmra.mrb[0].mxu0 %v623
        %v774 = vpop.f32.mrb[0].mxu0
        %v775 = vadd.f32 0.0, %v774
        %v776 = vpop.f32.mrb[0].mxu0
        %v777 = vpop.f32.mrb[0].mxu0
        %v778 = vadd.f32 0.0, %v777
        %v779 = vpop.f32.mrb[0].mxu0
        %780 = vmatprep.mubr.bf16.mxu0 0
        %781 = vmatmul.mubr.bf16.gmra.mrb[0].mxu0 %v626
        %v782 = vpop.f32.mrb[0].mxu0
        %v783 = vadd.f32 0.0, %v782
        %v784 = vpop.f32.mrb[0].mxu0
        %v785 = vpop.f32.mrb[0].mxu0
        %v786 = vadd.f32 0.0, %v785
        %v787 = vpop.f32.mrb[0].mxu0
        %788 = vdwg.mxu0
        %v789 = vld [vmem:[%s2] sm:$0x1]
        %v791 = vlaneseq
        %v792 = vshrl.u32 %v791, 7
        %v793 = vsub.s32 0, %v792
        %v794 = vrot.slane %v789, %v793
        %v796 = vmul.f32 %v663, %v794
        %v797 = vmul.f32 %v666, %v794
        %v798 = vmul.f32 %v671, %v794
        %v799 = vmul.f32 %v674, %v794
        %v800 = vmul.f32 %v679, %v794
        %v801 = vmul.f32 %v682, %v794
        %v802 = vmul.f32 %v687, %v794
        %v803 = vmul.f32 %v690, %v794
        %v804 = vmul.f32 %v695, %v794
        %v805 = vmul.f32 %v698, %v794
        %v806 = vmul.f32 %v703, %v794
        %v807 = vmul.f32 %v706, %v794
        %v808 = vmul.f32 %v711, %v794
        %v809 = vmul.f32 %v714, %v794
        %v810 = vmul.f32 %v719, %v794
        %v811 = vmul.f32 %v722, %v794
        %v812 = vmul.f32 %v727, %v794
        %v813 = vmul.f32 %v730, %v794
        %v814 = vmul.f32 %v735, %v794
        %v815 = vmul.f32 %v738, %v794
        %v816 = vmul.f32 %v743, %v794
        %v817 = vmul.f32 %v746, %v794
        %v818 = vmul.f32 %v751, %v794
        %v819 = vmul.f32 %v754, %v794
        %v820 = vmul.f32 %v759, %v794
        %v821 = vmul.f32 %v762, %v794
        %v822 = vmul.f32 %v767, %v794
        %v823 = vmul.f32 %v770, %v794
        %v824 = vmul.f32 %v775, %v794
        %v825 = vmul.f32 %v778, %v794
        %v826 = vmul.f32 %v783, %v794
        %v827 = vmul.f32 %v786, %v794
        %v828 = vld [vmem:[%s3] sm:$0x1]
        %v830 = vlaneseq
        %v831 = vshrl.u32 %v830, 7
        %v832 = vsub.s32 0, %v831
        %v833 = vrot.slane %v828, %v832
        %v835 = vadd.f32 %v796, %v833
        %v836 = vadd.f32 %v797, %v833
        %v837 = vadd.f32 %v798, %v833
        %v838 = vadd.f32 %v799, %v833
        %v839 = vadd.f32 %v800, %v833
        %v840 = vadd.f32 %v801, %v833
        %v841 = vadd.f32 %v802, %v833
        %v842 = vadd.f32 %v803, %v833
        %v843 = vadd.f32 %v804, %v833
        %v844 = vadd.f32 %v805, %v833
        %v845 = vadd.f32 %v806, %v833
        %v846 = vadd.f32 %v807, %v833
        %v847 = vadd.f32 %v808, %v833
        %v848 = vadd.f32 %v809, %v833
        %v849 = vadd.f32 %v810, %v833
        %v850 = vadd.f32 %v811, %v833
        %v851 = vadd.f32 %v812, %v833
        %v852 = vadd.f32 %v813, %v833
        %v853 = vadd.f32 %v814, %v833
        %v854 = vadd.f32 %v815, %v833
        %v855 = vadd.f32 %v816, %v833
        %v856 = vadd.f32 %v817, %v833
        %v857 = vadd.f32 %v818, %v833
        %v858 = vadd.f32 %v819, %v833
        %v859 = vadd.f32 %v820, %v833
        %v860 = vadd.f32 %v821, %v833
        %v861 = vadd.f32 %v822, %v833
        %v862 = vadd.f32 %v823, %v833
        %v863 = vadd.f32 %v824, %v833
        %v864 = vadd.f32 %v825, %v833
        %v865 = vadd.f32 %v826, %v833
        %v866 = vadd.f32 %v827, %v833
        %v867 = vadd.f32 %v835, 3.0
        %v868 = vadd.f32 %v836, 3.0
        %v869 = vadd.f32 %v837, 3.0
        %v870 = vadd.f32 %v838, 3.0
        %v871 = vadd.f32 %v839, 3.0
        %v872 = vadd.f32 %v840, 3.0
        %v873 = vadd.f32 %v841, 3.0
        %v874 = vadd.f32 %v842, 3.0
        %v875 = vadd.f32 %v843, 3.0
        %v876 = vadd.f32 %v844, 3.0
        %v877 = vadd.f32 %v845, 3.0
        %v878 = vadd.f32 %v846, 3.0
        %v879 = vadd.f32 %v847, 3.0
        %v880 = vadd.f32 %v848, 3.0
        %v881 = vadd.f32 %v849, 3.0
        %v882 = vadd.f32 %v850, 3.0
        %v883 = vadd.f32 %v851, 3.0
        %v884 = vadd.f32 %v852, 3.0
        %v885 = vadd.f32 %v853, 3.0
        %v886 = vadd.f32 %v854, 3.0
        %v887 = vadd.f32 %v855, 3.0
        %v888 = vadd.f32 %v856, 3.0
        %v889 = vadd.f32 %v857, 3.0
        %v890 = vadd.f32 %v858, 3.0
        %v891 = vadd.f32 %v859, 3.0
        %v892 = vadd.f32 %v860, 3.0
        %v893 = vadd.f32 %v861, 3.0
        %v894 = vadd.f32 %v862, 3.0
        %v895 = vadd.f32 %v863, 3.0
        %v896 = vadd.f32 %v864, 3.0
        %v897 = vadd.f32 %v865, 3.0
        %v898 = vadd.f32 %v866, 3.0
        %v899 = vmax.f32 %v867, 0.0
        %v900 = vmax.f32 %v868, 0.0
        %v901 = vmax.f32 %v869, 0.0
        %v902 = vmax.f32 %v870, 0.0
        %v903 = vmax.f32 %v871, 0.0
        %v904 = vmax.f32 %v872, 0.0
        %v905 = vmax.f32 %v873, 0.0
        %v906 = vmax.f32 %v874, 0.0
        %v907 = vmax.f32 %v875, 0.0
        %v908 = vmax.f32 %v876, 0.0
        %v909 = vmax.f32 %v877, 0.0
        %v910 = vmax.f32 %v878, 0.0
        %v911 = vmax.f32 %v879, 0.0
        %v912 = vmax.f32 %v880, 0.0
        %v913 = vmax.f32 %v881, 0.0
        %v914 = vmax.f32 %v882, 0.0
        %v915 = vmax.f32 %v883, 0.0
        %v916 = vmax.f32 %v884, 0.0
        %v917 = vmax.f32 %v885, 0.0
        %v918 = vmax.f32 %v886, 0.0
        %v919 = vmax.f32 %v887, 0.0
        %v920 = vmax.f32 %v888, 0.0
        %v921 = vmax.f32 %v889, 0.0
        %v922 = vmax.f32 %v890, 0.0
        %v923 = vmax.f32 %v891, 0.0
        %v924 = vmax.f32 %v892, 0.0
        %v925 = vmax.f32 %v893, 0.0
        %v926 = vmax.f32 %v894, 0.0
        %v927 = vmax.f32 %v895, 0.0
        %v928 = vmax.f32 %v896, 0.0
        %v929 = vmax.f32 %v897, 0.0
        %v930 = vmax.f32 %v898, 0.0
        %v931 = vmin.f32 %v899, 6.0
        %v932 = vmin.f32 %v900, 6.0
        %v933 = vmin.f32 %v901, 6.0
        %v934 = vmin.f32 %v902, 6.0
        %v935 = vmin.f32 %v903, 6.0
        %v936 = vmin.f32 %v904, 6.0
        %v937 = vmin.f32 %v905, 6.0
        %v938 = vmin.f32 %v906, 6.0
        %v939 = vmin.f32 %v907, 6.0
        %v940 = vmin.f32 %v908, 6.0
        %v941 = vmin.f32 %v909, 6.0
        %v942 = vmin.f32 %v910, 6.0
        %v943 = vmin.f32 %v911, 6.0
        %v944 = vmin.f32 %v912, 6.0
        %v945 = vmin.f32 %v913, 6.0
        %v946 = vmin.f32 %v914, 6.0
        %v947 = vmin.f32 %v915, 6.0
        %v948 = vmin.f32 %v916, 6.0
        %v949 = vmin.f32 %v917, 6.0
        %v950 = vmin.f32 %v918, 6.0
        %v951 = vmin.f32 %v919, 6.0
        %v952 = vmin.f32 %v920, 6.0
        %v953 = vmin.f32 %v921, 6.0
        %v954 = vmin.f32 %v922, 6.0
        %v955 = vmin.f32 %v923, 6.0
        %v956 = vmin.f32 %v924, 6.0
        %v957 = vmin.f32 %v925, 6.0
        %v958 = vmin.f32 %v926, 6.0
        %v959 = vmin.f32 %v927, 6.0
        %v960 = vmin.f32 %v928, 6.0
        %v961 = vmin.f32 %v929, 6.0
        %v962 = vmin.f32 %v930, 6.0
        %v963 = vmul.f32 %v835, %v931
        %v964 = vmul.f32 %v836, %v932
        %v965 = vmul.f32 %v837, %v933
        %v966 = vmul.f32 %v838, %v934
        %v967 = vmul.f32 %v839, %v935
        %v968 = vmul.f32 %v840, %v936
        %v969 = vmul.f32 %v841, %v937
        %v970 = vmul.f32 %v842, %v938
        %v971 = vmul.f32 %v843, %v939
        %v972 = vmul.f32 %v844, %v940
        %v973 = vmul.f32 %v845, %v941
        %v974 = vmul.f32 %v846, %v942
        %v975 = vmul.f32 %v847, %v943
        %v976 = vmul.f32 %v848, %v944
        %v977 = vmul.f32 %v849, %v945
        %v978 = vmul.f32 %v850, %v946
        %v979 = vmul.f32 %v851, %v947
        %v980 = vmul.f32 %v852, %v948
        %v981 = vmul.f32 %v853, %v949
        %v982 = vmul.f32 %v854, %v950
        %v983 = vmul.f32 %v855, %v951
        %v984 = vmul.f32 %v856, %v952
        %v985 = vmul.f32 %v857, %v953
        %v986 = vmul.f32 %v858, %v954
        %v987 = vmul.f32 %v859, %v955
        %v988 = vmul.f32 %v860, %v956
        %v989 = vmul.f32 %v861, %v957
        %v990 = vmul.f32 %v862, %v958
        %v991 = vmul.f32 %v863, %v959
        %v992 = vmul.f32 %v864, %v960
        %v993 = vmul.f32 %v865, %v961
        %v994 = vmul.f32 %v866, %v962
        %v995 = vmul.f32 %v963, 0.16666667
        %v996 = vmul.f32 %v964, 0.16666667
        %v997 = vmul.f32 %v965, 0.16666667
        %v998 = vmul.f32 %v966, 0.16666667
        %v999 = vmul.f32 %v967, 0.16666667
        %v1000 = vmul.f32 %v968, 0.16666667
        %v1001 = vmul.f32 %v969, 0.16666667
        %v1002 = vmul.f32 %v970, 0.16666667
        %v1003 = vmul.f32 %v971, 0.16666667
        %v1004 = vmul.f32 %v972, 0.16666667
        %v1005 = vmul.f32 %v973, 0.16666667
        %v1006 = vmul.f32 %v974, 0.16666667
        %v1007 = vmul.f32 %v975, 0.16666667
        %v1008 = vmul.f32 %v976, 0.16666667
        %v1009 = vmul.f32 %v977, 0.16666667
        %v1010 = vmul.f32 %v978, 0.16666667
        %v1011 = vmul.f32 %v979, 0.16666667
        %v1012 = vmul.f32 %v980, 0.16666667
        %v1013 = vmul.f32 %v981, 0.16666667
        %v1014 = vmul.f32 %v982, 0.16666667
        %v1015 = vmul.f32 %v983, 0.16666667
        %v1016 = vmul.f32 %v984, 0.16666667
        %v1017 = vmul.f32 %v985, 0.16666667
        %v1018 = vmul.f32 %v986, 0.16666667
        %v1019 = vmul.f32 %v987, 0.16666667
        %v1020 = vmul.f32 %v988, 0.16666667
        %v1021 = vmul.f32 %v989, 0.16666667
        %v1022 = vmul.f32 %v990, 0.16666667
        %v1023 = vmul.f32 %v991, 0.16666667
        %v1024 = vmul.f32 %v992, 0.16666667
        %v1025 = vmul.f32 %v993, 0.16666667
        %v1026 = vmul.f32 %v994, 0.16666667
        %s1027 = scalar_lea.vmem %s442, 32 [#allocation3]
        %v1028 = vld [vmem:[%s1027] sm:$0xff]
        %v1029 = vld [vmem:[%s1027 + $0x8] sm:$0xff]
        %v1030 = vld [vmem:[%s1027 + $0x10] sm:$0xff]
        %v1031 = vld [vmem:[%s1027 + $0x18] sm:$0xff]
        %v1032 = vpack.c.bf16 %v1030, %v1028
        %v1033 = vpack.c.bf16 %v1031, %v1029
        %1034 = vxpose.xlu0.c.b16.start [1/8] %v1032, 128
        %1035 = vxpose.xlu0.c.b16.cont [2/8] 0, 128
        %1036 = vxpose.xlu0.c.b16.cont [3/8] 0, 128
        %1037 = vxpose.xlu0.c.b16.cont [4/8] 0, 128
        %1038 = vxpose.xlu0.c.b16.cont [5/8] 0, 128
        %1039 = vxpose.xlu0.c.b16.cont [6/8] 0, 128
        %1040 = vxpose.xlu0.c.b16.cont [7/8] 0, 128
        %1041 = vxpose.xlu0.c.b16.end [8/8] 0, 128
        %v1042 = vpop.trf.xlu0
        %v1043 = vpop.trf.xlu0
        %v1044 = vpop.trf.xlu0
        %v1045 = vpop.trf.xlu0
        %v1046 = vpop.trf.xlu0
        %v1047 = vpop.trf.xlu0
        %v1048 = vpop.trf.xlu0
        %v1049 = vpop.trf.xlu0
        %1050 = vxpose.xlu0.c.b16.start [1/8] %v1033, 128
        %1051 = vxpose.xlu0.c.b16.cont [2/8] 0, 128
        %1052 = vxpose.xlu0.c.b16.cont [3/8] 0, 128
        %1053 = vxpose.xlu0.c.b16.cont [4/8] 0, 128
        %1054 = vxpose.xlu0.c.b16.cont [5/8] 0, 128
        %1055 = vxpose.xlu0.c.b16.cont [6/8] 0, 128
        %1056 = vxpose.xlu0.c.b16.cont [7/8] 0, 128
        %1057 = vxpose.xlu0.c.b16.end [8/8] 0, 128
        %v1058 = vpop.trf.xlu0
        %v1059 = vpop.trf.xlu0
        %v1060 = vpop.trf.xlu0
        %v1061 = vpop.trf.xlu0
        %v1062 = vpop.trf.xlu0
        %v1063 = vpop.trf.xlu0
        %v1064 = vpop.trf.xlu0
        %v1065 = vpop.trf.xlu0
        %v1067 = vsel %vm579, %v1042, 0
        %v1070 = vsel %vm579, %v1043, 0
        %v1073 = vsel %vm579, %v1044, 0
        %v1076 = vsel %vm579, %v1045, 0
        %v1079 = vsel %vm579, %v1046, 0
        %v1082 = vsel %vm579, %v1047, 0
        %v1085 = vsel %vm579, %v1048, 0
        %v1088 = vsel %vm579, %v1049, 0
        %v1091 = vsel %vm579, %v1058, 0
        %v1094 = vsel %vm579, %v1059, 0
        %v1097 = vsel %vm579, %v1060, 0
        %v1100 = vsel %vm579, %v1061, 0
        %v1103 = vsel %vm579, %v1062, 0
        %v1106 = vsel %vm579, %v1063, 0
        %v1109 = vsel %vm579, %v1064, 0
        %v1112 = vsel %vm579, %v1065, 0
        %1114 = vmatprep.subr.bf16.mxu0 0
        %1115 = vmatpush1.bf16.msra.mxu0 %v577
        %1116 = vmatprep.subr.bf16.mxu0 0
        %1117 = vmatpush1.bf16.msra.mxu0 0
        %1118 = vmatprep.subr.bf16.mxu0 0
        %1119 = vmatpush1.bf16.msra.mxu0 0
        %1120 = vmatprep.subr.bf16.mxu0 0
        %1121 = vmatpush1.bf16.msra.mxu0 0
        %1122 = vmatprep.subr.bf16.mxu0 0
        %1123 = vmatpush1.bf16.msra.mxu0 0
        %1124 = vmatprep.subr.bf16.mxu0 0
        %1125 = vmatpush1.bf16.msra.mxu0 0
        %1126 = vmatprep.subr.bf16.mxu0 0
        %1127 = vmatpush1.bf16.msra.mxu0 0
        %1128 = vmatprep.subr.bf16.mxu0 0
        %1129 = vmatpush1.bf16.msra.mxu0 0
        %1130 = vmatprep.subr.bf16.mxu0 0
        %1131 = vmatpush1.bf16.msra.mxu0 0
        %1132 = vmatprep.subr.bf16.mxu0 0
        %1133 = vmatpush1.bf16.msra.mxu0 0
        %1134 = vmatprep.subr.bf16.mxu0 0
        %1135 = vmatpush1.bf16.msra.mxu0 0
        %1136 = vmatprep.subr.bf16.mxu0 0
        %1137 = vmatpush1.bf16.msra.mxu0 0
        %1138 = vmatprep.subr.bf16.mxu0 0
        %1139 = vmatpush1.bf16.msra.mxu0 0
        %1140 = vmatprep.subr.bf16.mxu0 0
        %1141 = vmatpush1.bf16.msra.mxu0 0
        %1142 = vmatprep.subr.bf16.mxu0 0
        %1143 = vmatpush1.bf16.msra.mxu0 0
        %1144 = vmatprep.subr.bf16.mxu0 0
        %1145 = vmatpush1.bf16.msra.mxu0 0
        %1146 = vmatprep.mubr.bf16.mxu0 0
        %1147 = vmatmul.mubr.bf16.gmra.mrb[0].mxu0 %v1067
        %v1148 = vpop.f32.mrb[0].mxu0
        %v1149 = vadd.f32 0.0, %v1148
        %v1150 = vpop.f32.mrb[0].mxu0
        %v1151 = vpop.f32.mrb[0].mxu0
        %v1152 = vadd.f32 0.0, %v1151
        %v1153 = vpop.f32.mrb[0].mxu0
        %1154 = vmatprep.mubr.bf16.mxu0 0
        %1155 = vmatmul.mubr.bf16.gmra.mrb[0].mxu0 %v1070
        %v1156 = vpop.f32.mrb[0].mxu0
        %v1157 = vadd.f32 0.0, %v1156
        %v1158 = vpop.f32.mrb[0].mxu0
        %v1159 = vpop.f32.mrb[0].mxu0
        %v1160 = vadd.f32 0.0, %v1159
        %v1161 = vpop.f32.mrb[0].mxu0
        %1162 = vmatprep.mubr.bf16.mxu0 0
        %1163 = vmatmul.mubr.bf16.gmra.mrb[0].mxu0 %v1073
        %v1164 = vpop.f32.mrb[0].mxu0
        %v1165 = vadd.f32 0.0, %v1164
        %v1166 = vpop.f32.mrb[0].mxu0
        %v1167 = vpop.f32.mrb[0].mxu0
        %v1168 = vadd.f32 0.0, %v1167
        %v1169 = vpop.f32.mrb[0].mxu0
        %1170 = vmatprep.mubr.bf16.mxu0 0
        %1171 = vmatmul.mubr.bf16.gmra.mrb[0].mxu0 %v1076
        %v1172 = vpop.f32.mrb[0].mxu0
        %v1173 = vadd.f32 0.0, %v1172
        %v1174 = vpop.f32.mrb[0].mxu0
        %v1175 = vpop.f32.mrb[0].mxu0
        %v1176 = vadd.f32 0.0, %v1175
        %v1177 = vpop.f32.mrb[0].mxu0
        %1178 = vmatprep.mubr.bf16.mxu0 0
        %1179 = vmatmul.mubr.bf16.gmra.mrb[0].mxu0 %v1079
        %v1180 = vpop.f32.mrb[0].mxu0
        %v1181 = vadd.f32 0.0, %v1180
        %v1182 = vpop.f32.mrb[0].mxu0
        %v1183 = vpop.f32.mrb[0].mxu0
        %v1184 = vadd.f32 0.0, %v1183
        %v1185 = vpop.f32.mrb[0].mxu0
        %1186 = vmatprep.mubr.bf16.mxu0 0
        %1187 = vmatmul.mubr.bf16.gmra.mrb[0].mxu0 %v1082
        %v1188 = vpop.f32.mrb[0].mxu0
        %v1189 = vadd.f32 0.0, %v1188
        %v1190 = vpop.f32.mrb[0].mxu0
        %v1191 = vpop.f32.mrb[0].mxu0
        %v1192 = vadd.f32 0.0, %v1191
        %v1193 = vpop.f32.mrb[0].mxu0
        %1194 = vmatprep.mubr.bf16.mxu0 0
        %1195 = vmatmul.mubr.bf16.gmra.mrb[0].mxu0 %v1085
        %v1196 = vpop.f32.mrb[0].mxu0
        %v1197 = vadd.f32 0.0, %v1196
        %v1198 = vpop.f32.mrb[0].mxu0
        %v1199 = vpop.f32.mrb[0].mxu0
        %v1200 = vadd.f32 0.0, %v1199
        %v1201 = vpop.f32.mrb[0].mxu0
        %1202 = vmatprep.mubr.bf16.mxu0 0
        %1203 = vmatmul.mubr.bf16.gmra.mrb[0].mxu0 %v1088
        %v1204 = vpop.f32.mrb[0].mxu0
        %v1205 = vadd.f32 0.0, %v1204
        %v1206 = vpop.f32.mrb[0].mxu0
        %v1207 = vpop.f32.mrb[0].mxu0
        %v1208 = vadd.f32 0.0, %v1207
        %v1209 = vpop.f32.mrb[0].mxu0
        %1210 = vmatprep.mubr.bf16.mxu0 0
        %1211 = vmatmul.mubr.bf16.gmra.mrb[0].mxu0 %v1091
        %v1212 = vpop.f32.mrb[0].mxu0
        %v1213 = vadd.f32 0.0, %v1212
        %v1214 = vpop.f32.mrb[0].mxu0
        %v1215 = vpop.f32.mrb[0].mxu0
        %v1216 = vadd.f32 0.0, %v1215
        %v1217 = vpop.f32.mrb[0].mxu0
        %1218 = vmatprep.mubr.bf16.mxu0 0
        %1219 = vmatmul.mubr.bf16.gmra.mrb[0].mxu0 %v1094
        %v1220 = vpop.f32.mrb[0].mxu0
        %v1221 = vadd.f32 0.0, %v1220
        %v1222 = vpop.f32.mrb[0].mxu0
        %v1223 = vpop.f32.mrb[0].mxu0
        %v1224 = vadd.f32 0.0, %v1223
        %v1225 = vpop.f32.mrb[0].mxu0
        %1226 = vmatprep.mubr.bf16.mxu0 0
        %1227 = vmatmul.mubr.bf16.gmra.mrb[0].mxu0 %v1097
        %v1228 = vpop.f32.mrb[0].mxu0
        %v1229 = vadd.f32 0.0, %v1228
        %v1230 = vpop.f32.mrb[0].mxu0
        %v1231 = vpop.f32.mrb[0].mxu0
        %v1232 = vadd.f32 0.0, %v1231
        %v1233 = vpop.f32.mrb[0].mxu0
        %1234 = vmatprep.mubr.bf16.mxu0 0
        %1235 = vmatmul.mubr.bf16.gmra.mrb[0].mxu0 %v1100
        %v1236 = vpop.f32.mrb[0].mxu0
        %v1237 = vadd.f32 0.0, %v1236
        %v1238 = vpop.f32.mrb[0].mxu0
        %v1239 = vpop.f32.mrb[0].mxu0
        %v1240 = vadd.f32 0.0, %v1239
        %v1241 = vpop.f32.mrb[0].mxu0
        %1242 = vmatprep.mubr.bf16.mxu0 0
        %1243 = vmatmul.mubr.bf16.gmra.mrb[0].mxu0 %v1103
        %v1244 = vpop.f32.mrb[0].mxu0
        %v1245 = vadd.f32 0.0, %v1244
        %v1246 = vpop.f32.mrb[0].mxu0
        %v1247 = vpop.f32.mrb[0].mxu0
        %v1248 = vadd.f32 0.0, %v1247
        %v1249 = vpop.f32.mrb[0].mxu0
        %1250 = vmatprep.mubr.bf16.mxu0 0
        %1251 = vmatmul.mubr.bf16.gmra.mrb[0].mxu0 %v1106
        %v1252 = vpop.f32.mrb[0].mxu0
        %v1253 = vadd.f32 0.0, %v1252
        %v1254 = vpop.f32.mrb[0].mxu0
        %v1255 = vpop.f32.mrb[0].mxu0
        %v1256 = vadd.f32 0.0, %v1255
        %v1257 = vpop.f32.mrb[0].mxu0
        %1258 = vmatprep.mubr.bf16.mxu0 0
        %1259 = vmatmul.mubr.bf16.gmra.mrb[0].mxu0 %v1109
        %v1260 = vpop.f32.mrb[0].mxu0
        %v1261 = vadd.f32 0.0, %v1260
        %v1262 = vpop.f32.mrb[0].mxu0
        %v1263 = vpop.f32.mrb[0].mxu0
        %v1264 = vadd.f32 0.0, %v1263
        %v1265 = vpop.f32.mrb[0].mxu0
        %1266 = vmatprep.mubr.bf16.mxu0 0
        %1267 = vmatmul.mubr.bf16.gmra.mrb[0].mxu0 %v1112
        %v1268 = vpop.f32.mrb[0].mxu0
        %v1269 = vadd.f32 0.0, %v1268
        %v1270 = vpop.f32.mrb[0].mxu0
        %v1271 = vpop.f32.mrb[0].mxu0
        %v1272 = vadd.f32 0.0, %v1271
        %v1273 = vpop.f32.mrb[0].mxu0
        %1274 = vdwg.mxu0
        %v1275 = vmul.f32 %v1149, %v794
        %v1276 = vmul.f32 %v1152, %v794
        %v1277 = vmul.f32 %v1157, %v794
        %v1278 = vmul.f32 %v1160, %v794
        %v1279 = vmul.f32 %v1165, %v794
        %v1280 = vmul.f32 %v1168, %v794
        %v1281 = vmul.f32 %v1173, %v794
        %v1282 = vmul.f32 %v1176, %v794
        %v1283 = vmul.f32 %v1181, %v794
        %v1284 = vmul.f32 %v1184, %v794
        %v1285 = vmul.f32 %v1189, %v794
        %v1286 = vmul.f32 %v1192, %v794
        %v1287 = vmul.f32 %v1197, %v794
        %v1288 = vmul.f32 %v1200, %v794
        %v1289 = vmul.f32 %v1205, %v794
        %v1290 = vmul.f32 %v1208, %v794
        %v1291 = vmul.f32 %v1213, %v794
        %v1292 = vmul.f32 %v1216, %v794
        %v1293 = vmul.f32 %v1221, %v794
        %v1294 = vmul.f32 %v1224, %v794
        %v1295 = vmul.f32 %v1229, %v794
        %v1296 = vmul.f32 %v1232, %v794
        %v1297 = vmul.f32 %v1237, %v794
        %v1298 = vmul.f32 %v1240, %v794
        %v1299 = vmul.f32 %v1245, %v794
        %v1300 = vmul.f32 %v1248, %v794
        %v1301 = vmul.f32 %v1253, %v794
        %v1302 = vmul.f32 %v1256, %v794
        %v1303 = vmul.f32 %v1261, %v794
        %v1304 = vmul.f32 %v1264, %v794
        %v1305 = vmul.f32 %v1269, %v794
        %v1306 = vmul.f32 %v1272, %v794
        %v1307 = vadd.f32 %v1275, %v833
        %v1308 = vadd.f32 %v1276, %v833
        %v1309 = vadd.f32 %v1277, %v833
        %v1310 = vadd.f32 %v1278, %v833
        %v1311 = vadd.f32 %v1279, %v833
        %v1312 = vadd.f32 %v1280, %v833
        %v1313 = vadd.f32 %v1281, %v833
        %v1314 = vadd.f32 %v1282, %v833
        %v1315 = vadd.f32 %v1283, %v833
        %v1316 = vadd.f32 %v1284, %v833
        %v1317 = vadd.f32 %v1285, %v833
        %v1318 = vadd.f32 %v1286, %v833
        %v1319 = vadd.f32 %v1287, %v833
        %v1320 = vadd.f32 %v1288, %v833
        %v1321 = vadd.f32 %v1289, %v833
        %v1322 = vadd.f32 %v1290, %v833
        %v1323 = vadd.f32 %v1291, %v833
        %v1324 = vadd.f32 %v1292, %v833
        %v1325 = vadd.f32 %v1293, %v833
        %v1326 = vadd.f32 %v1294, %v833
        %v1327 = vadd.f32 %v1295, %v833
        %v1328 = vadd.f32 %v1296, %v833
        %v1329 = vadd.f32 %v1297, %v833
        %v1330 = vadd.f32 %v1298, %v833
        %v1331 = vadd.f32 %v1299, %v833
        %v1332 = vadd.f32 %v1300, %v833
        %v1333 = vadd.f32 %v1301, %v833
        %v1334 = vadd.f32 %v1302, %v833
        %v1335 = vadd.f32 %v1303, %v833
        %v1336 = vadd.f32 %v1304, %v833
        %v1337 = vadd.f32 %v1305, %v833
        %v1338 = vadd.f32 %v1306, %v833
        %v1339 = vadd.f32 %v1307, 3.0
        %v1340 = vadd.f32 %v1308, 3.0
        %v1341 = vadd.f32 %v1309, 3.0
        %v1342 = vadd.f32 %v1310, 3.0
        %v1343 = vadd.f32 %v1311, 3.0
        %v1344 = vadd.f32 %v1312, 3.0
        %v1345 = vadd.f32 %v1313, 3.0
        %v1346 = vadd.f32 %v1314, 3.0
        %v1347 = vadd.f32 %v1315, 3.0
        %v1348 = vadd.f32 %v1316, 3.0
        %v1349 = vadd.f32 %v1317, 3.0
        %v1350 = vadd.f32 %v1318, 3.0
        %v1351 = vadd.f32 %v1319, 3.0
        %v1352 = vadd.f32 %v1320, 3.0
        %v1353 = vadd.f32 %v1321, 3.0
        %v1354 = vadd.f32 %v1322, 3.0
        %v1355 = vadd.f32 %v1323, 3.0
        %v1356 = vadd.f32 %v1324, 3.0
        %v1357 = vadd.f32 %v1325, 3.0
        %v1358 = vadd.f32 %v1326, 3.0
        %v1359 = vadd.f32 %v1327, 3.0
        %v1360 = vadd.f32 %v1328, 3.0
        %v1361 = vadd.f32 %v1329, 3.0
        %v1362 = vadd.f32 %v1330, 3.0
        %v1363 = vadd.f32 %v1331, 3.0
        %v1364 = vadd.f32 %v1332, 3.0
        %v1365 = vadd.f32 %v1333, 3.0
        %v1366 = vadd.f32 %v1334, 3.0
        %v1367 = vadd.f32 %v1335, 3.0
        %v1368 = vadd.f32 %v1336, 3.0
        %v1369 = vadd.f32 %v1337, 3.0
        %v1370 = vadd.f32 %v1338, 3.0
        %v1371 = vmax.f32 %v1339, 0.0
        %v1372 = vmax.f32 %v1340, 0.0
        %v1373 = vmax.f32 %v1341, 0.0
        %v1374 = vmax.f32 %v1342, 0.0
        %v1375 = vmax.f32 %v1343, 0.0
        %v1376 = vmax.f32 %v1344, 0.0
        %v1377 = vmax.f32 %v1345, 0.0
        %v1378 = vmax.f32 %v1346, 0.0
        %v1379 = vmax.f32 %v1347, 0.0
        %v1380 = vmax.f32 %v1348, 0.0
        %v1381 = vmax.f32 %v1349, 0.0
        %v1382 = vmax.f32 %v1350, 0.0
        %v1383 = vmax.f32 %v1351, 0.0
        %v1384 = vmax.f32 %v1352, 0.0
        %v1385 = vmax.f32 %v1353, 0.0
        %v1386 = vmax.f32 %v1354, 0.0
        %v1387 = vmax.f32 %v1355, 0.0
        %v1388 = vmax.f32 %v1356, 0.0
        %v1389 = vmax.f32 %v1357, 0.0
        %v1390 = vmax.f32 %v1358, 0.0
        %v1391 = vmax.f32 %v1359, 0.0
        %v1392 = vmax.f32 %v1360, 0.0
        %v1393 = vmax.f32 %v1361, 0.0
        %v1394 = vmax.f32 %v1362, 0.0
        %v1395 = vmax.f32 %v1363, 0.0
        %v1396 = vmax.f32 %v1364, 0.0
        %v1397 = vmax.f32 %v1365, 0.0
        %v1398 = vmax.f32 %v1366, 0.0
        %v1399 = vmax.f32 %v1367, 0.0
        %v1400 = vmax.f32 %v1368, 0.0
        %v1401 = vmax.f32 %v1369, 0.0
        %v1402 = vmax.f32 %v1370, 0.0
        %v1403 = vmin.f32 %v1371, 6.0
        %v1404 = vmin.f32 %v1372, 6.0
        %v1405 = vmin.f32 %v1373, 6.0
        %v1406 = vmin.f32 %v1374, 6.0
        %v1407 = vmin.f32 %v1375, 6.0
        %v1408 = vmin.f32 %v1376, 6.0
        %v1409 = vmin.f32 %v1377, 6.0
        %v1410 = vmin.f32 %v1378, 6.0
        %v1411 = vmin.f32 %v1379, 6.0
        %v1412 = vmin.f32 %v1380, 6.0
        %v1413 = vmin.f32 %v1381, 6.0
        %v1414 = vmin.f32 %v1382, 6.0
        %v1415 = vmin.f32 %v1383, 6.0
        %v1416 = vmin.f32 %v1384, 6.0
        %v1417 = vmin.f32 %v1385, 6.0
        %v1418 = vmin.f32 %v1386, 6.0
        %v1419 = vmin.f32 %v1387, 6.0
        %v1420 = vmin.f32 %v1388, 6.0
        %v1421 = vmin.f32 %v1389, 6.0
        %v1422 = vmin.f32 %v1390, 6.0
        %v1423 = vmin.f32 %v1391, 6.0
        %v1424 = vmin.f32 %v1392, 6.0
        %v1425 = vmin.f32 %v1393, 6.0
        %v1426 = vmin.f32 %v1394, 6.0
        %v1427 = vmin.f32 %v1395, 6.0
        %v1428 = vmin.f32 %v1396, 6.0
        %v1429 = vmin.f32 %v1397, 6.0
        %v1430 = vmin.f32 %v1398, 6.0
        %v1431 = vmin.f32 %v1399, 6.0
        %v1432 = vmin.f32 %v1400, 6.0
        %v1433 = vmin.f32 %v1401, 6.0
        %v1434 = vmin.f32 %v1402, 6.0
        %v1435 = vmul.f32 %v1307, %v1403
        %v1436 = vmul.f32 %v1308, %v1404
        %v1437 = vmul.f32 %v1309, %v1405
        %v1438 = vmul.f32 %v1310, %v1406
        %v1439 = vmul.f32 %v1311, %v1407
        %v1440 = vmul.f32 %v1312, %v1408
        %v1441 = vmul.f32 %v1313, %v1409
        %v1442 = vmul.f32 %v1314, %v1410
        %v1443 = vmul.f32 %v1315, %v1411
        %v1444 = vmul.f32 %v1316, %v1412
        %v1445 = vmul.f32 %v1317, %v1413
        %v1446 = vmul.f32 %v1318, %v1414
        %v1447 = vmul.f32 %v1319, %v1415
        %v1448 = vmul.f32 %v1320, %v1416
        %v1449 = vmul.f32 %v1321, %v1417
        %v1450 = vmul.f32 %v1322, %v1418
        %v1451 = vmul.f32 %v1323, %v1419
        %v1452 = vmul.f32 %v1324, %v1420
        %v1453 = vmul.f32 %v1325, %v1421
        %v1454 = vmul.f32 %v1326, %v1422
        %v1455 = vmul.f32 %v1327, %v1423
        %v1456 = vmul.f32 %v1328, %v1424
        %v1457 = vmul.f32 %v1329, %v1425
        %v1458 = vmul.f32 %v1330, %v1426
        %v1459 = vmul.f32 %v1331, %v1427
        %v1460 = vmul.f32 %v1332, %v1428
        %v1461 = vmul.f32 %v1333, %v1429
        %v1462 = vmul.f32 %v1334, %v1430
        %v1463 = vmul.f32 %v1335, %v1431
        %v1464 = vmul.f32 %v1336, %v1432
        %v1465 = vmul.f32 %v1337, %v1433
        %v1466 = vmul.f32 %v1338, %v1434
        %v1467 = vmul.f32 %v1435, 0.16666667
        %v1468 = vmul.f32 %v1436, 0.16666667
        %v1469 = vmul.f32 %v1437, 0.16666667
        %v1470 = vmul.f32 %v1438, 0.16666667
        %v1471 = vmul.f32 %v1439, 0.16666667
        %v1472 = vmul.f32 %v1440, 0.16666667
        %v1473 = vmul.f32 %v1441, 0.16666667
        %v1474 = vmul.f32 %v1442, 0.16666667
        %v1475 = vmul.f32 %v1443, 0.16666667
        %v1476 = vmul.f32 %v1444, 0.16666667
        %v1477 = vmul.f32 %v1445, 0.16666667
        %v1478 = vmul.f32 %v1446, 0.16666667
        %v1479 = vmul.f32 %v1447, 0.16666667
        %v1480 = vmul.f32 %v1448, 0.16666667
        %v1481 = vmul.f32 %v1449, 0.16666667
        %v1482 = vmul.f32 %v1450, 0.16666667
        %v1483 = vmul.f32 %v1451, 0.16666667
        %v1484 = vmul.f32 %v1452, 0.16666667
        %v1485 = vmul.f32 %v1453, 0.16666667
        %v1486 = vmul.f32 %v1454, 0.16666667
        %v1487 = vmul.f32 %v1455, 0.16666667
        %v1488 = vmul.f32 %v1456, 0.16666667
        %v1489 = vmul.f32 %v1457, 0.16666667
        %v1490 = vmul.f32 %v1458, 0.16666667
        %v1491 = vmul.f32 %v1459, 0.16666667
        %v1492 = vmul.f32 %v1460, 0.16666667
        %v1493 = vmul.f32 %v1461, 0.16666667
        %v1494 = vmul.f32 %v1462, 0.16666667
        %v1495 = vmul.f32 %v1463, 0.16666667
        %v1496 = vmul.f32 %v1464, 0.16666667
        %v1497 = vmul.f32 %v1465, 0.16666667
        %v1498 = vmul.f32 %v1466, 0.16666667
        %1531 = vrot.lane.b32.xlu0 %v1467, 32
        %v1532 = vpop.permute.xlu0 %1531
        %1533 = vrot.lane.b32.xlu0 %v1468, 32
        %v1534 = vpop.permute.xlu0 %1533
        %1535 = vrot.lane.b32.xlu0 %v1469, 32
        %v1536 = vpop.permute.xlu0 %1535
        %1537 = vrot.lane.b32.xlu0 %v1470, 32
        %v1538 = vpop.permute.xlu0 %1537
        %1539 = vrot.lane.b32.xlu0 %v1471, 32
        %v1540 = vpop.permute.xlu0 %1539
        %1541 = vrot.lane.b32.xlu0 %v1472, 32
        %v1542 = vpop.permute.xlu0 %1541
        %1543 = vrot.lane.b32.xlu0 %v1473, 32
        %v1544 = vpop.permute.xlu0 %1543
        %1545 = vrot.lane.b32.xlu0 %v1474, 32
        %v1546 = vpop.permute.xlu0 %1545
        %1547 = vrot.lane.b32.xlu0 %v1475, 32
        %v1548 = vpop.permute.xlu0 %1547
        %1549 = vrot.lane.b32.xlu0 %v1476, 32
        %v1550 = vpop.permute.xlu0 %1549
        %1551 = vrot.lane.b32.xlu0 %v1477, 32
        %v1552 = vpop.permute.xlu0 %1551
        %1553 = vrot.lane.b32.xlu0 %v1478, 32
        %v1554 = vpop.permute.xlu0 %1553
        %1555 = vrot.lane.b32.xlu0 %v1479, 32
        %v1556 = vpop.permute.xlu0 %1555
        %1557 = vrot.lane.b32.xlu0 %v1480, 32
        %v1558 = vpop.permute.xlu0 %1557
        %1559 = vrot.lane.b32.xlu0 %v1481, 32
        %v1560 = vpop.permute.xlu0 %1559
        %1561 = vrot.lane.b32.xlu0 %v1482, 32
        %v1562 = vpop.permute.xlu0 %1561
        %1563 = vrot.lane.b32.xlu0 %v1483, 32
        %v1564 = vpop.permute.xlu0 %1563
        %1565 = vrot.lane.b32.xlu0 %v1484, 32
        %v1566 = vpop.permute.xlu0 %1565
        %1567 = vrot.lane.b32.xlu0 %v1485, 32
        %v1568 = vpop.permute.xlu0 %1567
        %1569 = vrot.lane.b32.xlu0 %v1486, 32
        %v1570 = vpop.permute.xlu0 %1569
        %1571 = vrot.lane.b32.xlu0 %v1487, 32
        %v1572 = vpop.permute.xlu0 %1571
        %1573 = vrot.lane.b32.xlu0 %v1488, 32
        %v1574 = vpop.permute.xlu0 %1573
        %1575 = vrot.lane.b32.xlu0 %v1489, 32
        %v1576 = vpop.permute.xlu0 %1575
        %1577 = vrot.lane.b32.xlu0 %v1490, 32
        %v1578 = vpop.permute.xlu0 %1577
        %1579 = vrot.lane.b32.xlu0 %v1491, 32
        %v1580 = vpop.permute.xlu0 %1579
        %1581 = vrot.lane.b32.xlu0 %v1492, 32
        %v1582 = vpop.permute.xlu0 %1581
        %1583 = vrot.lane.b32.xlu0 %v1493, 32
        %v1584 = vpop.permute.xlu0 %1583
        %1585 = vrot.lane.b32.xlu0 %v1494, 32
        %v1586 = vpop.permute.xlu0 %1585
        %1587 = vrot.lane.b32.xlu0 %v1495, 32
        %v1588 = vpop.permute.xlu0 %1587
        %1589 = vrot.lane.b32.xlu0 %v1496, 32
        %v1590 = vpop.permute.xlu0 %1589
        %1591 = vrot.lane.b32.xlu0 %v1497, 32
        %v1592 = vpop.permute.xlu0 %1591
        %1593 = vrot.lane.b32.xlu0 %v1498, 32
        %v1594 = vpop.permute.xlu0 %1593
        %vm1627 = vcmask 261120
        %v1628 = vsel %vm1627, %v995, %v1532
        %v1629 = vsel %vm1627, %v996, %v1534
        %v1630 = vsel %vm1627, %v997, %v1536
        %v1631 = vsel %vm1627, %v998, %v1538
        %v1632 = vsel %vm1627, %v999, %v1540
        %v1633 = vsel %vm1627, %v1000, %v1542
        %v1634 = vsel %vm1627, %v1001, %v1544
        %v1635 = vsel %vm1627, %v1002, %v1546
        %v1636 = vsel %vm1627, %v1003, %v1548
        %v1637 = vsel %vm1627, %v1004, %v1550
        %v1638 = vsel %vm1627, %v1005, %v1552
        %v1639 = vsel %vm1627, %v1006, %v1554
        %v1640 = vsel %vm1627, %v1007, %v1556
        %v1641 = vsel %vm1627, %v1008, %v1558
        %v1642 = vsel %vm1627, %v1009, %v1560
        %v1643 = vsel %vm1627, %v1010, %v1562
        %v1644 = vsel %vm1627, %v1011, %v1564
        %v1645 = vsel %vm1627, %v1012, %v1566
        %v1646 = vsel %vm1627, %v1013, %v1568
        %v1647 = vsel %vm1627, %v1014, %v1570
        %v1648 = vsel %vm1627, %v1015, %v1572
        %v1649 = vsel %vm1627, %v1016, %v1574
        %v1650 = vsel %vm1627, %v1017, %v1576
        %v1651 = vsel %vm1627, %v1018, %v1578
        %v1652 = vsel %vm1627, %v1019, %v1580
        %v1653 = vsel %vm1627, %v1020, %v1582
        %v1654 = vsel %vm1627, %v1021, %v1584
        %v1655 = vsel %vm1627, %v1022, %v1586
        %v1656 = vsel %vm1627, %v1023, %v1588
        %v1657 = vsel %vm1627, %v1024, %v1590
        %v1658 = vsel %vm1627, %v1025, %v1592
        %v1659 = vsel %vm1627, %v1026, %v1594
        %1660 = vst.msk [vmem:[%s499 + $0x1] sm:$0xff] %vm490, %v1628
        %1661 = vst.msk [vmem:[%s499 + $0x9] sm:$0xff] %vm490, %v1629
        %1662 = vst.msk [vmem:[%s499 + $0x19] sm:$0xff] %vm490, %v1630
        %1663 = vst.msk [vmem:[%s499 + $0x21] sm:$0xff] %vm490, %v1631
        %1664 = vst.msk [vmem:[%s499 + $0x31] sm:$0xff] %vm490, %v1632
        %1665 = vst.msk [vmem:[%s499 + $0x39] sm:$0xff] %vm490, %v1633
        %1666 = vst.msk [vmem:[%s499 + $0x49] sm:$0xff] %vm490, %v1634
        %1667 = vst.msk [vmem:[%s499 + $0x51] sm:$0xff] %vm490, %v1635
        %1668 = vst.msk [vmem:[%s499 + $0x61] sm:$0xff] %vm490, %v1636
        %1669 = vst.msk [vmem:[%s499 + $0x69] sm:$0xff] %vm490, %v1637
        %1670 = vst.msk [vmem:[%s499 + $0x79] sm:$0xff] %vm490, %v1638
        %1671 = vst.msk [vmem:[%s499 + $0x81] sm:$0xff] %vm490, %v1639
        %1672 = vst.msk [vmem:[%s499 + $0x91] sm:$0xff] %vm490, %v1640
        %1673 = vst.msk [vmem:[%s499 + $0x99] sm:$0xff] %vm490, %v1641
        %1674 = vst.msk [vmem:[%s499 + $0xa9] sm:$0xff] %vm490, %v1642
        %1675 = vst.msk [vmem:[%s499 + $0xb1] sm:$0xff] %vm490, %v1643
        %1676 = vst.msk [vmem:[%s499 + $0xc1] sm:$0xff] %vm490, %v1644
        %1677 = vst.msk [vmem:[%s499 + $0xc9] sm:$0xff] %vm490, %v1645
        %1678 = vst.msk [vmem:[%s499 + $0xd9] sm:$0xff] %vm490, %v1646
        %1679 = vst.msk [vmem:[%s499 + $0xe1] sm:$0xff] %vm490, %v1647
        %1680 = vst.msk [vmem:[%s499 + $0xf1] sm:$0xff] %vm490, %v1648
        %1681 = vst.msk [vmem:[%s499 + $0xf9] sm:$0xff] %vm490, %v1649
        %1682 = vst.msk [vmem:[%s499 + $0x109] sm:$0xff] %vm490, %v1650
        %1683 = vst.msk [vmem:[%s499 + $0x111] sm:$0xff] %vm490, %v1651
        %1684 = vst.msk [vmem:[%s499 + $0x121] sm:$0xff] %vm490, %v1652
        %1685 = vst.msk [vmem:[%s499 + $0x129] sm:$0xff] %vm490, %v1653
        %1686 = vst.msk [vmem:[%s499 + $0x139] sm:$0xff] %vm490, %v1654
        %1687 = vst.msk [vmem:[%s499 + $0x141] sm:$0xff] %vm490, %v1655
        %1688 = vst.msk [vmem:[%s499 + $0x151] sm:$0xff] %vm490, %v1656
        %1689 = vst.msk [vmem:[%s499 + $0x159] sm:$0xff] %vm490, %v1657
        %1690 = vst.msk [vmem:[%s499 + $0x169] sm:$0xff] %vm490, %v1658
        %1691 = vst.msk [vmem:[%s499 + $0x171] sm:$0xff] %vm490, %v1659
        %v1692 = vld [vmem:[%s4] sm:$0x7]
        %v1693 = vld [vmem:[#allocation2] sm:$0xff]
        %v1694 = vld [vmem:[#allocation2 + $0x8] sm:$0xff]
        %v1695 = vld [vmem:[#allocation2 + $0x18] sm:$0xff]
        %v1696 = vld [vmem:[#allocation2 + $0x20] sm:$0xff]
        %v1697 = vld [vmem:[#allocation2 + $0x30] sm:$0xff]
        %v1698 = vld [vmem:[#allocation2 + $0x38] sm:$0xff]
        %v1699 = vld [vmem:[#allocation2 + $0x48] sm:$0xff]
        %v1700 = vld [vmem:[#allocation2 + $0x50] sm:$0xff]
        %v1701 = vld [vmem:[#allocation2 + $0x60] sm:$0xff]
        %v1702 = vld [vmem:[#allocation2 + $0x68] sm:$0xff]
        %v1703 = vld [vmem:[#allocation2 + $0x78] sm:$0xff]
        %v1704 = vld [vmem:[#allocation2 + $0x80] sm:$0xff]
        %v1705 = vld [vmem:[#allocation2 + $0x90] sm:$0xff]
        %v1706 = vld [vmem:[#allocation2 + $0x98] sm:$0xff]
        %v1707 = vld [vmem:[#allocation2 + $0xa8] sm:$0xff]
        %v1708 = vld [vmem:[#allocation2 + $0xb0] sm:$0xff]
        %v1709 = vld [vmem:[#allocation2 + $0xc0] sm:$0xff]
        %v1710 = vld [vmem:[#allocation2 + $0xc8] sm:$0xff]
        %v1711 = vld [vmem:[#allocation2 + $0xd8] sm:$0xff]
        %v1712 = vld [vmem:[#allocation2 + $0xe0] sm:$0xff]
        %v1713 = vld [vmem:[#allocation2 + $0xf0] sm:$0xff]
        %v1714 = vld [vmem:[#allocation2 + $0xf8] sm:$0xff]
        %v1715 = vld [vmem:[#allocation2 + $0x108] sm:$0xff]
        %v1716 = vld [vmem:[#allocation2 + $0x110] sm:$0xff]
        %v1717 = vld [vmem:[#allocation2 + $0x120] sm:$0xff]
        %v1718 = vld [vmem:[#allocation2 + $0x128] sm:$0xff]
        %v1719 = vld [vmem:[#allocation2 + $0x138] sm:$0xff]
        %v1720 = vld [vmem:[#allocation2 + $0x140] sm:$0xff]
        %v1721 = vld [vmem:[#allocation2 + $0x150] sm:$0xff]
        %v1722 = vld [vmem:[#allocation2 + $0x158] sm:$0xff]
        %v1723 = vld [vmem:[#allocation2 + $0x168] sm:$0xff]
        %v1724 = vld [vmem:[#allocation2 + $0x170] sm:$0xff]
        %v1725 = vlaneseq
        %v1726 = vshrl.u32 %v1725, 7
        %v1727 = vsub.s32 0, %v1726
        %v1728 = vrot.slane %v1692, %v1727
        %v1729 = vmul.f32 %v1693, %v1728
        %v1730 = vmul.f32 %v1694, %v1728
        %v1731 = vmul.f32 %v1695, %v1728
        %v1732 = vmul.f32 %v1696, %v1728
        %v1733 = vmul.f32 %v1697, %v1728
        %v1734 = vmul.f32 %v1698, %v1728
        %v1735 = vmul.f32 %v1699, %v1728
        %v1736 = vmul.f32 %v1700, %v1728
        %v1737 = vmul.f32 %v1701, %v1728
        %v1738 = vmul.f32 %v1702, %v1728
        %v1739 = vmul.f32 %v1703, %v1728
        %v1740 = vmul.f32 %v1704, %v1728
        %v1741 = vmul.f32 %v1705, %v1728
        %v1742 = vmul.f32 %v1706, %v1728
        %v1743 = vmul.f32 %v1707, %v1728
        %v1744 = vmul.f32 %v1708, %v1728
        %v1745 = vmul.f32 %v1709, %v1728
        %v1746 = vmul.f32 %v1710, %v1728
        %v1747 = vmul.f32 %v1711, %v1728
        %v1748 = vmul.f32 %v1712, %v1728
        %v1749 = vmul.f32 %v1713, %v1728
        %v1750 = vmul.f32 %v1714, %v1728
        %v1751 = vmul.f32 %v1715, %v1728
        %v1752 = vmul.f32 %v1716, %v1728
        %v1753 = vmul.f32 %v1717, %v1728
        %v1754 = vmul.f32 %v1718, %v1728
        %v1755 = vmul.f32 %v1719, %v1728
        %v1756 = vmul.f32 %v1720, %v1728
        %v1757 = vmul.f32 %v1721, %v1728
        %v1758 = vmul.f32 %v1722, %v1728
        %v1759 = vmul.f32 %v1723, %v1728
        %v1760 = vmul.f32 %v1724, %v1728
        %v1761 = vadd.f32 %v1729, 0.0
        %v1762 = vadd.f32 %v1730, 0.0
        %v1763 = vadd.f32 %v1731, 0.0
        %v1764 = vadd.f32 %v1732, 0.0
        %v1765 = vadd.f32 %v1733, 0.0
        %v1766 = vadd.f32 %v1734, 0.0
        %v1767 = vadd.f32 %v1735, 0.0
        %v1768 = vadd.f32 %v1736, 0.0
        %v1769 = vadd.f32 %v1737, 0.0
        %v1770 = vadd.f32 %v1738, 0.0
        %v1771 = vadd.f32 %v1739, 0.0
        %v1772 = vadd.f32 %v1740, 0.0
        %v1773 = vadd.f32 %v1741, 0.0
        %v1774 = vadd.f32 %v1742, 0.0
        %v1775 = vadd.f32 %v1743, 0.0
        %v1776 = vadd.f32 %v1744, 0.0
        %v1777 = vadd.f32 %v1745, 0.0
        %v1778 = vadd.f32 %v1746, 0.0
        %v1779 = vadd.f32 %v1747, 0.0
        %v1780 = vadd.f32 %v1748, 0.0
        %v1781 = vadd.f32 %v1749, 0.0
        %v1782 = vadd.f32 %v1750, 0.0
        %v1783 = vadd.f32 %v1751, 0.0
        %v1784 = vadd.f32 %v1752, 0.0
        %v1785 = vadd.f32 %v1753, 0.0
        %v1786 = vadd.f32 %v1754, 0.0
        %v1787 = vadd.f32 %v1755, 0.0
        %v1788 = vadd.f32 %v1756, 0.0
        %v1789 = vadd.f32 %v1757, 0.0
        %v1790 = vadd.f32 %v1758, 0.0
        %v1791 = vadd.f32 %v1759, 0.0
        %v1792 = vadd.f32 %v1760, 0.0
        %v1793 = vld [vmem:[#allocation2 + $0x1] sm:$0xff]
        %v1794 = vld [vmem:[#allocation2 + $0x9] sm:$0xff]
        %v1795 = vld [vmem:[#allocation2 + $0x19] sm:$0xff]
        %v1796 = vld [vmem:[#allocation2 + $0x21] sm:$0xff]
        %v1797 = vld [vmem:[#allocation2 + $0x31] sm:$0xff]
        %v1798 = vld [vmem:[#allocation2 + $0x39] sm:$0xff]
        %v1799 = vld [vmem:[#allocation2 + $0x49] sm:$0xff]
        %v1800 = vld [vmem:[#allocation2 + $0x51] sm:$0xff]
        %v1801 = vld [vmem:[#allocation2 + $0x61] sm:$0xff]
        %v1802 = vld [vmem:[#allocation2 + $0x69] sm:$0xff]
        %v1803 = vld [vmem:[#allocation2 + $0x79] sm:$0xff]
        %v1804 = vld [vmem:[#allocation2 + $0x81] sm:$0xff]
        %v1805 = vld [vmem:[#allocation2 + $0x91] sm:$0xff]
        %v1806 = vld [vmem:[#allocation2 + $0x99] sm:$0xff]
        %v1807 = vld [vmem:[#allocation2 + $0xa9] sm:$0xff]
        %v1808 = vld [vmem:[#allocation2 + $0xb1] sm:$0xff]
        %v1809 = vld [vmem:[#allocation2 + $0xc1] sm:$0xff]
        %v1810 = vld [vmem:[#allocation2 + $0xc9] sm:$0xff]
        %v1811 = vld [vmem:[#allocation2 + $0xd9] sm:$0xff]
        %v1812 = vld [vmem:[#allocation2 + $0xe1] sm:$0xff]
        %v1813 = vld [vmem:[#allocation2 + $0xf1] sm:$0xff]
        %v1814 = vld [vmem:[#allocation2 + $0xf9] sm:$0xff]
        %v1815 = vld [vmem:[#allocation2 + $0x109] sm:$0xff]
        %v1816 = vld [vmem:[#allocation2 + $0x111] sm:$0xff]
        %v1817 = vld [vmem:[#allocation2 + $0x121] sm:$0xff]
        %v1818 = vld [vmem:[#allocation2 + $0x129] sm:$0xff]
        %v1819 = vld [vmem:[#allocation2 + $0x139] sm:$0xff]
        %v1820 = vld [vmem:[#allocation2 + $0x141] sm:$0xff]
        %v1821 = vld [vmem:[#allocation2 + $0x151] sm:$0xff]
        %v1822 = vld [vmem:[#allocation2 + $0x159] sm:$0xff]
        %v1823 = vld [vmem:[#allocation2 + $0x169] sm:$0xff]
        %v1824 = vld [vmem:[#allocation2 + $0x171] sm:$0xff]
        %v1825 = vlaneseq
        %v1826 = vshrl.u32 %v1825, 7
        %v1827 = vsub.s32 1, %v1826
        %v1828 = vrot.slane %v1692, %v1827
        %v1829 = vmul.f32 %v1793, %v1828
        %v1830 = vmul.f32 %v1794, %v1828
        %v1831 = vmul.f32 %v1795, %v1828
        %v1832 = vmul.f32 %v1796, %v1828
        %v1833 = vmul.f32 %v1797, %v1828
        %v1834 = vmul.f32 %v1798, %v1828
        %v1835 = vmul.f32 %v1799, %v1828
        %v1836 = vmul.f32 %v1800, %v1828
        %v1837 = vmul.f32 %v1801, %v1828
        %v1838 = vmul.f32 %v1802, %v1828
        %v1839 = vmul.f32 %v1803, %v1828
        %v1840 = vmul.f32 %v1804, %v1828
        %v1841 = vmul.f32 %v1805, %v1828
        %v1842 = vmul.f32 %v1806, %v1828
        %v1843 = vmul.f32 %v1807, %v1828
        %v1844 = vmul.f32 %v1808, %v1828
        %v1845 = vmul.f32 %v1809, %v1828
        %v1846 = vmul.f32 %v1810, %v1828
        %v1847 = vmul.f32 %v1811, %v1828
        %v1848 = vmul.f32 %v1812, %v1828
        %v1849 = vmul.f32 %v1813, %v1828
        %v1850 = vmul.f32 %v1814, %v1828
        %v1851 = vmul.f32 %v1815, %v1828
        %v1852 = vmul.f32 %v1816, %v1828
        %v1853 = vmul.f32 %v1817, %v1828
        %v1854 = vmul.f32 %v1818, %v1828
        %v1855 = vmul.f32 %v1819, %v1828
        %v1856 = vmul.f32 %v1820, %v1828
        %v1857 = vmul.f32 %v1821, %v1828
        %v1858 = vmul.f32 %v1822, %v1828
        %v1859 = vmul.f32 %v1823, %v1828
        %v1860 = vmul.f32 %v1824, %v1828
        %v1861 = vadd.f32 %v1761, %v1829
        %v1862 = vadd.f32 %v1762, %v1830
        %v1863 = vadd.f32 %v1763, %v1831
        %v1864 = vadd.f32 %v1764, %v1832
        %v1865 = vadd.f32 %v1765, %v1833
        %v1866 = vadd.f32 %v1766, %v1834
        %v1867 = vadd.f32 %v1767, %v1835
        %v1868 = vadd.f32 %v1768, %v1836
        %v1869 = vadd.f32 %v1769, %v1837
        %v1870 = vadd.f32 %v1770, %v1838
        %v1871 = vadd.f32 %v1771, %v1839
        %v1872 = vadd.f32 %v1772, %v1840
        %v1873 = vadd.f32 %v1773, %v1841
        %v1874 = vadd.f32 %v1774, %v1842
        %v1875 = vadd.f32 %v1775, %v1843
        %v1876 = vadd.f32 %v1776, %v1844
        %v1877 = vadd.f32 %v1777, %v1845
        %v1878 = vadd.f32 %v1778, %v1846
        %v1879 = vadd.f32 %v1779, %v1847
        %v1880 = vadd.f32 %v1780, %v1848
        %v1881 = vadd.f32 %v1781, %v1849
        %v1882 = vadd.f32 %v1782, %v1850
        %v1883 = vadd.f32 %v1783, %v1851
        %v1884 = vadd.f32 %v1784, %v1852
        %v1885 = vadd.f32 %v1785, %v1853
        %v1886 = vadd.f32 %v1786, %v1854
        %v1887 = vadd.f32 %v1787, %v1855
        %v1888 = vadd.f32 %v1788, %v1856
        %v1889 = vadd.f32 %v1789, %v1857
        %v1890 = vadd.f32 %v1790, %v1858
        %v1891 = vadd.f32 %v1791, %v1859
        %v1892 = vadd.f32 %v1792, %v1860
        %v1893 = vld [vmem:[#allocation2 + $0x2] sm:$0xff]
        %v1894 = vld [vmem:[#allocation2 + $0xa] sm:$0xff]
        %v1895 = vld [vmem:[#allocation2 + $0x1a] sm:$0xff]
        %v1896 = vld [vmem:[#allocation2 + $0x22] sm:$0xff]
        %v1897 = vld [vmem:[#allocation2 + $0x32] sm:$0xff]
        %v1898 = vld [vmem:[#allocation2 + $0x3a] sm:$0xff]
        %v1899 = vld [vmem:[#allocation2 + $0x4a] sm:$0xff]
        %v1900 = vld [vmem:[#allocation2 + $0x52] sm:$0xff]
        %v1901 = vld [vmem:[#allocation2 + $0x62] sm:$0xff]
        %v1902 = vld [vmem:[#allocation2 + $0x6a] sm:$0xff]
        %v1903 = vld [vmem:[#allocation2 + $0x7a] sm:$0xff]
        %v1904 = vld [vmem:[#allocation2 + $0x82] sm:$0xff]
        %v1905 = vld [vmem:[#allocation2 + $0x92] sm:$0xff]
        %v1906 = vld [vmem:[#allocation2 + $0x9a] sm:$0xff]
        %v1907 = vld [vmem:[#allocation2 + $0xaa] sm:$0xff]
        %v1908 = vld [vmem:[#allocation2 + $0xb2] sm:$0xff]
        %v1909 = vld [vmem:[#allocation2 + $0xc2] sm:$0xff]
        %v1910 = vld [vmem:[#allocation2 + $0xca] sm:$0xff]
        %v1911 = vld [vmem:[#allocation2 + $0xda] sm:$0xff]
        %v1912 = vld [vmem:[#allocation2 + $0xe2] sm:$0xff]
        %v1913 = vld [vmem:[#allocation2 + $0xf2] sm:$0xff]
        %v1914 = vld [vmem:[#allocation2 + $0xfa] sm:$0xff]
        %v1915 = vld [vmem:[#allocation2 + $0x10a] sm:$0xff]
        %v1916 = vld [vmem:[#allocation2 + $0x112] sm:$0xff]
        %v1917 = vld [vmem:[#allocation2 + $0x122] sm:$0xff]
        %v1918 = vld [vmem:[#allocation2 + $0x12a] sm:$0xff]
        %v1919 = vld [vmem:[#allocation2 + $0x13a] sm:$0xff]
        %v1920 = vld [vmem:[#allocation2 + $0x142] sm:$0xff]
        %v1921 = vld [vmem:[#allocation2 + $0x152] sm:$0xff]
        %v1922 = vld [vmem:[#allocation2 + $0x15a] sm:$0xff]
        %v1923 = vld [vmem:[#allocation2 + $0x16a] sm:$0xff]
        %v1924 = vld [vmem:[#allocation2 + $0x172] sm:$0xff]
        %v1925 = vlaneseq
        %v1926 = vshrl.u32 %v1925, 7
        %v1927 = vsub.s32 2, %v1926
        %v1928 = vrot.slane %v1692, %v1927
        %v1929 = vmul.f32 %v1893, %v1928
        %v1930 = vmul.f32 %v1894, %v1928
        %v1931 = vmul.f32 %v1895, %v1928
        %v1932 = vmul.f32 %v1896, %v1928
        %v1933 = vmul.f32 %v1897, %v1928
        %v1934 = vmul.f32 %v1898, %v1928
        %v1935 = vmul.f32 %v1899, %v1928
        %v1936 = vmul.f32 %v1900, %v1928
        %v1937 = vmul.f32 %v1901, %v1928
        %v1938 = vmul.f32 %v1902, %v1928
        %v1939 = vmul.f32 %v1903, %v1928
        %v1940 = vmul.f32 %v1904, %v1928
        %v1941 = vmul.f32 %v1905, %v1928
        %v1942 = vmul.f32 %v1906, %v1928
        %v1943 = vmul.f32 %v1907, %v1928
        %v1944 = vmul.f32 %v1908, %v1928
        %v1945 = vmul.f32 %v1909, %v1928
        %v1946 = vmul.f32 %v1910, %v1928
        %v1947 = vmul.f32 %v1911, %v1928
        %v1948 = vmul.f32 %v1912, %v1928
        %v1949 = vmul.f32 %v1913, %v1928
        %v1950 = vmul.f32 %v1914, %v1928
        %v1951 = vmul.f32 %v1915, %v1928
        %v1952 = vmul.f32 %v1916, %v1928
        %v1953 = vmul.f32 %v1917, %v1928
        %v1954 = vmul.f32 %v1918, %v1928
        %v1955 = vmul.f32 %v1919, %v1928
        %v1956 = vmul.f32 %v1920, %v1928
        %v1957 = vmul.f32 %v1921, %v1928
        %v1958 = vmul.f32 %v1922, %v1928
        %v1959 = vmul.f32 %v1923, %v1928
        %v1960 = vmul.f32 %v1924, %v1928
        %v1961 = vadd.f32 %v1861, %v1929
        %v1962 = vadd.f32 %v1862, %v1930
        %v1963 = vadd.f32 %v1863, %v1931
        %v1964 = vadd.f32 %v1864, %v1932
        %v1965 = vadd.f32 %v1865, %v1933
        %v1966 = vadd.f32 %v1866, %v1934
        %v1967 = vadd.f32 %v1867, %v1935
        %v1968 = vadd.f32 %v1868, %v1936
        %v1969 = vadd.f32 %v1869, %v1937
        %v1970 = vadd.f32 %v1870, %v1938
        %v1971 = vadd.f32 %v1871, %v1939
        %v1972 = vadd.f32 %v1872, %v1940
        %v1973 = vadd.f32 %v1873, %v1941
        %v1974 = vadd.f32 %v1874, %v1942
        %v1975 = vadd.f32 %v1875, %v1943
        %v1976 = vadd.f32 %v1876, %v1944
        %v1977 = vadd.f32 %v1877, %v1945
        %v1978 = vadd.f32 %v1878, %v1946
        %v1979 = vadd.f32 %v1879, %v1947
        %v1980 = vadd.f32 %v1880, %v1948
        %v1981 = vadd.f32 %v1881, %v1949
        %v1982 = vadd.f32 %v1882, %v1950
        %v1983 = vadd.f32 %v1883, %v1951
        %v1984 = vadd.f32 %v1884, %v1952
        %v1985 = vadd.f32 %v1885, %v1953
        %v1986 = vadd.f32 %v1886, %v1954
        %v1987 = vadd.f32 %v1887, %v1955
        %v1988 = vadd.f32 %v1888, %v1956
        %v1989 = vadd.f32 %v1889, %v1957
        %v1990 = vadd.f32 %v1890, %v1958
        %v1991 = vadd.f32 %v1891, %v1959
        %v1992 = vadd.f32 %v1892, %v1960
        %s1993 = scalar_lea.vmem %s4, 4
        %v1994 = vld [vmem:[%s1993] sm:$0x7]
        %v1995 = vld [vmem:[%s499] sm:$0xff]
        %v1996 = vld [vmem:[%s499 + $0x8] sm:$0xff]
        %v1997 = vld [vmem:[%s499 + $0x18] sm:$0xff]
        %v1998 = vld [vmem:[%s499 + $0x20] sm:$0xff]
        %v1999 = vld [vmem:[%s499 + $0x30] sm:$0xff]
        %v2000 = vld [vmem:[%s499 + $0x38] sm:$0xff]
        %v2001 = vld [vmem:[%s499 + $0x48] sm:$0xff]
        %v2002 = vld [vmem:[%s499 + $0x50] sm:$0xff]
        %v2003 = vld [vmem:[%s499 + $0x60] sm:$0xff]
        %v2004 = vld [vmem:[%s499 + $0x68] sm:$0xff]
        %v2005 = vld [vmem:[%s499 + $0x78] sm:$0xff]
        %v2006 = vld [vmem:[%s499 + $0x80] sm:$0xff]
        %v2007 = vld [vmem:[%s499 + $0x90] sm:$0xff]
        %v2008 = vld [vmem:[%s499 + $0x98] sm:$0xff]
        %v2009 = vld [vmem:[%s499 + $0xa8] sm:$0xff]
        %v2010 = vld [vmem:[%s499 + $0xb0] sm:$0xff]
        %v2011 = vld [vmem:[%s499 + $0xc0] sm:$0xff]
        %v2012 = vld [vmem:[%s499 + $0xc8] sm:$0xff]
        %v2013 = vld [vmem:[%s499 + $0xd8] sm:$0xff]
        %v2014 = vld [vmem:[%s499 + $0xe0] sm:$0xff]
        %v2015 = vld [vmem:[%s499 + $0xf0] sm:$0xff]
        %v2016 = vld [vmem:[%s499 + $0xf8] sm:$0xff]
        %v2017 = vld [vmem:[%s499 + $0x108] sm:$0xff]
        %v2018 = vld [vmem:[%s499 + $0x110] sm:$0xff]
        %v2019 = vld [vmem:[%s499 + $0x120] sm:$0xff]
        %v2020 = vld [vmem:[%s499 + $0x128] sm:$0xff]
        %v2021 = vld [vmem:[%s499 + $0x138] sm:$0xff]
        %v2022 = vld [vmem:[%s499 + $0x140] sm:$0xff]
        %v2023 = vld [vmem:[%s499 + $0x150] sm:$0xff]
        %v2024 = vld [vmem:[%s499 + $0x158] sm:$0xff]
        %v2025 = vld [vmem:[%s499 + $0x168] sm:$0xff]
        %v2026 = vld [vmem:[%s499 + $0x170] sm:$0xff]
        %v2027 = vlaneseq
        %v2028 = vshrl.u32 %v2027, 7
        %v2029 = vsub.s32 0, %v2028
        %v2030 = vrot.slane %v1994, %v2029
        %v2031 = vmul.f32 %v1995, %v2030
        %v2032 = vmul.f32 %v1996, %v2030
        %v2033 = vmul.f32 %v1997, %v2030
        %v2034 = vmul.f32 %v1998, %v2030
        %v2035 = vmul.f32 %v1999, %v2030
        %v2036 = vmul.f32 %v2000, %v2030
        %v2037 = vmul.f32 %v2001, %v2030
        %v2038 = vmul.f32 %v2002, %v2030
        %v2039 = vmul.f32 %v2003, %v2030
        %v2040 = vmul.f32 %v2004, %v2030
        %v2041 = vmul.f32 %v2005, %v2030
        %v2042 = vmul.f32 %v2006, %v2030
        %v2043 = vmul.f32 %v2007, %v2030
        %v2044 = vmul.f32 %v2008, %v2030
        %v2045 = vmul.f32 %v2009, %v2030
        %v2046 = vmul.f32 %v2010, %v2030
        %v2047 = vmul.f32 %v2011, %v2030
        %v2048 = vmul.f32 %v2012, %v2030
        %v2049 = vmul.f32 %v2013, %v2030
        %v2050 = vmul.f32 %v2014, %v2030
        %v2051 = vmul.f32 %v2015, %v2030
        %v2052 = vmul.f32 %v2016, %v2030
        %v2053 = vmul.f32 %v2017, %v2030
        %v2054 = vmul.f32 %v2018, %v2030
        %v2055 = vmul.f32 %v2019, %v2030
        %v2056 = vmul.f32 %v2020, %v2030
        %v2057 = vmul.f32 %v2021, %v2030
        %v2058 = vmul.f32 %v2022, %v2030
        %v2059 = vmul.f32 %v2023, %v2030
        %v2060 = vmul.f32 %v2024, %v2030
        %v2061 = vmul.f32 %v2025, %v2030
        %v2062 = vmul.f32 %v2026, %v2030
        %v2063 = vadd.f32 %v1961, %v2031
        %v2064 = vadd.f32 %v1962, %v2032
        %v2065 = vadd.f32 %v1963, %v2033
        %v2066 = vadd.f32 %v1964, %v2034
        %v2067 = vadd.f32 %v1965, %v2035
        %v2068 = vadd.f32 %v1966, %v2036
        %v2069 = vadd.f32 %v1967, %v2037
        %v2070 = vadd.f32 %v1968, %v2038
        %v2071 = vadd.f32 %v1969, %v2039
        %v2072 = vadd.f32 %v1970, %v2040
        %v2073 = vadd.f32 %v1971, %v2041
        %v2074 = vadd.f32 %v1972, %v2042
        %v2075 = vadd.f32 %v1973, %v2043
        %v2076 = vadd.f32 %v1974, %v2044
        %v2077 = vadd.f32 %v1975, %v2045
        %v2078 = vadd.f32 %v1976, %v2046
        %v2079 = vadd.f32 %v1977, %v2047
        %v2080 = vadd.f32 %v1978, %v2048
        %v2081 = vadd.f32 %v1979, %v2049
        %v2082 = vadd.f32 %v1980, %v2050
        %v2083 = vadd.f32 %v1981, %v2051
        %v2084 = vadd.f32 %v1982, %v2052
        %v2085 = vadd.f32 %v1983, %v2053
        %v2086 = vadd.f32 %v1984, %v2054
        %v2087 = vadd.f32 %v1985, %v2055
        %v2088 = vadd.f32 %v1986, %v2056
        %v2089 = vadd.f32 %v1987, %v2057
        %v2090 = vadd.f32 %v1988, %v2058
        %v2091 = vadd.f32 %v1989, %v2059
        %v2092 = vadd.f32 %v1990, %v2060
        %v2093 = vadd.f32 %v1991, %v2061
        %v2094 = vadd.f32 %v1992, %v2062
        %v2095 = vld [vmem:[%s499 + $0x1] sm:$0xff]
        %v2096 = vld [vmem:[%s499 + $0x9] sm:$0xff]
        %v2097 = vld [vmem:[%s499 + $0x19] sm:$0xff]
        %v2098 = vld [vmem:[%s499 + $0x21] sm:$0xff]
        %v2099 = vld [vmem:[%s499 + $0x31] sm:$0xff]
        %v2100 = vld [vmem:[%s499 + $0x39] sm:$0xff]
        %v2101 = vld [vmem:[%s499 + $0x49] sm:$0xff]
        %v2102 = vld [vmem:[%s499 + $0x51] sm:$0xff]
        %v2103 = vld [vmem:[%s499 + $0x61] sm:$0xff]
        %v2104 = vld [vmem:[%s499 + $0x69] sm:$0xff]
        %v2105 = vld [vmem:[%s499 + $0x79] sm:$0xff]
        %v2106 = vld [vmem:[%s499 + $0x81] sm:$0xff]
        %v2107 = vld [vmem:[%s499 + $0x91] sm:$0xff]
        %v2108 = vld [vmem:[%s499 + $0x99] sm:$0xff]
        %v2109 = vld [vmem:[%s499 + $0xa9] sm:$0xff]
        %v2110 = vld [vmem:[%s499 + $0xb1] sm:$0xff]
        %v2111 = vld [vmem:[%s499 + $0xc1] sm:$0xff]
        %v2112 = vld [vmem:[%s499 + $0xc9] sm:$0xff]
        %v2113 = vld [vmem:[%s499 + $0xd9] sm:$0xff]
        %v2114 = vld [vmem:[%s499 + $0xe1] sm:$0xff]
        %v2115 = vld [vmem:[%s499 + $0xf1] sm:$0xff]
        %v2116 = vld [vmem:[%s499 + $0xf9] sm:$0xff]
        %v2117 = vld [vmem:[%s499 + $0x109] sm:$0xff]
        %v2118 = vld [vmem:[%s499 + $0x111] sm:$0xff]
        %v2119 = vld [vmem:[%s499 + $0x121] sm:$0xff]
        %v2120 = vld [vmem:[%s499 + $0x129] sm:$0xff]
        %v2121 = vld [vmem:[%s499 + $0x139] sm:$0xff]
        %v2122 = vld [vmem:[%s499 + $0x141] sm:$0xff]
        %v2123 = vld [vmem:[%s499 + $0x151] sm:$0xff]
        %v2124 = vld [vmem:[%s499 + $0x159] sm:$0xff]
        %v2125 = vld [vmem:[%s499 + $0x169] sm:$0xff]
        %v2126 = vld [vmem:[%s499 + $0x171] sm:$0xff]
        %v2127 = vlaneseq
        %v2128 = vshrl.u32 %v2127, 7
        %v2129 = vsub.s32 1, %v2128
        %v2130 = vrot.slane %v1994, %v2129
        %v2131 = vmul.f32 %v2095, %v2130
        %v2132 = vmul.f32 %v2096, %v2130
        %v2133 = vmul.f32 %v2097, %v2130
        %v2134 = vmul.f32 %v2098, %v2130
        %v2135 = vmul.f32 %v2099, %v2130
        %v2136 = vmul.f32 %v2100, %v2130
        %v2137 = vmul.f32 %v2101, %v2130
        %v2138 = vmul.f32 %v2102, %v2130
        %v2139 = vmul.f32 %v2103, %v2130
        %v2140 = vmul.f32 %v2104, %v2130
        %v2141 = vmul.f32 %v2105, %v2130
        %v2142 = vmul.f32 %v2106, %v2130
        %v2143 = vmul.f32 %v2107, %v2130
        %v2144 = vmul.f32 %v2108, %v2130
        %v2145 = vmul.f32 %v2109, %v2130
        %v2146 = vmul.f32 %v2110, %v2130
        %v2147 = vmul.f32 %v2111, %v2130
        %v2148 = vmul.f32 %v2112, %v2130
        %v2149 = vmul.f32 %v2113, %v2130
        %v2150 = vmul.f32 %v2114, %v2130
        %v2151 = vmul.f32 %v2115, %v2130
        %v2152 = vmul.f32 %v2116, %v2130
        %v2153 = vmul.f32 %v2117, %v2130
        %v2154 = vmul.f32 %v2118, %v2130
        %v2155 = vmul.f32 %v2119, %v2130
        %v2156 = vmul.f32 %v2120, %v2130
        %v2157 = vmul.f32 %v2121, %v2130
        %v2158 = vmul.f32 %v2122, %v2130
        %v2159 = vmul.f32 %v2123, %v2130
        %v2160 = vmul.f32 %v2124, %v2130
        %v2161 = vmul.f32 %v2125, %v2130
        %v2162 = vmul.f32 %v2126, %v2130
        %v2163 = vadd.f32 %v2063, %v2131
        %v2164 = vadd.f32 %v2064, %v2132
        %v2165 = vadd.f32 %v2065, %v2133
        %v2166 = vadd.f32 %v2066, %v2134
        %v2167 = vadd.f32 %v2067, %v2135
        %v2168 = vadd.f32 %v2068, %v2136
        %v2169 = vadd.f32 %v2069, %v2137
        %v2170 = vadd.f32 %v2070, %v2138
        %v2171 = vadd.f32 %v2071, %v2139
        %v2172 = vadd.f32 %v2072, %v2140
        %v2173 = vadd.f32 %v2073, %v2141
        %v2174 = vadd.f32 %v2074, %v2142
        %v2175 = vadd.f32 %v2075, %v2143
        %v2176 = vadd.f32 %v2076, %v2144
        %v2177 = vadd.f32 %v2077, %v2145
        %v2178 = vadd.f32 %v2078, %v2146
        %v2179 = vadd.f32 %v2079, %v2147
        %v2180 = vadd.f32 %v2080, %v2148
        %v2181 = vadd.f32 %v2081, %v2149
        %v2182 = vadd.f32 %v2082, %v2150
        %v2183 = vadd.f32 %v2083, %v2151
        %v2184 = vadd.f32 %v2084, %v2152
        %v2185 = vadd.f32 %v2085, %v2153
        %v2186 = vadd.f32 %v2086, %v2154
        %v2187 = vadd.f32 %v2087, %v2155
        %v2188 = vadd.f32 %v2088, %v2156
        %v2189 = vadd.f32 %v2089, %v2157
        %v2190 = vadd.f32 %v2090, %v2158
        %v2191 = vadd.f32 %v2091, %v2159
        %v2192 = vadd.f32 %v2092, %v2160
        %v2193 = vadd.f32 %v2093, %v2161
        %v2194 = vadd.f32 %v2094, %v2162
        %v2195 = vld [vmem:[%s499 + $0x2] sm:$0xff]
        %v2196 = vld [vmem:[%s499 + $0xa] sm:$0xff]
        %v2197 = vld [vmem:[%s499 + $0x1a] sm:$0xff]
        %v2198 = vld [vmem:[%s499 + $0x22] sm:$0xff]
        %v2199 = vld [vmem:[%s499 + $0x32] sm:$0xff]
        %v2200 = vld [vmem:[%s499 + $0x3a] sm:$0xff]
        %v2201 = vld [vmem:[%s499 + $0x4a] sm:$0xff]
        %v2202 = vld [vmem:[%s499 + $0x52] sm:$0xff]
        %v2203 = vld [vmem:[%s499 + $0x62] sm:$0xff]
        %v2204 = vld [vmem:[%s499 + $0x6a] sm:$0xff]
        %v2205 = vld [vmem:[%s499 + $0x7a] sm:$0xff]
        %v2206 = vld [vmem:[%s499 + $0x82] sm:$0xff]
        %v2207 = vld [vmem:[%s499 + $0x92] sm:$0xff]
        %v2208 = vld [vmem:[%s499 + $0x9a] sm:$0xff]
        %v2209 = vld [vmem:[%s499 + $0xaa] sm:$0xff]
        %v2210 = vld [vmem:[%s499 + $0xb2] sm:$0xff]
        %v2211 = vld [vmem:[%s499 + $0xc2] sm:$0xff]
        %v2212 = vld [vmem:[%s499 + $0xca] sm:$0xff]
        %v2213 = vld [vmem:[%s499 + $0xda] sm:$0xff]
        %v2214 = vld [vmem:[%s499 + $0xe2] sm:$0xff]
        %v2215 = vld [vmem:[%s499 + $0xf2] sm:$0xff]
        %v2216 = vld [vmem:[%s499 + $0xfa] sm:$0xff]
        %v2217 = vld [vmem:[%s499 + $0x10a] sm:$0xff]
        %v2218 = vld [vmem:[%s499 + $0x112] sm:$0xff]
        %v2219 = vld [vmem:[%s499 + $0x122] sm:$0xff]
        %v2220 = vld [vmem:[%s499 + $0x12a] sm:$0xff]
        %v2221 = vld [vmem:[%s499 + $0x13a] sm:$0xff]
        %v2222 = vld [vmem:[%s499 + $0x142] sm:$0xff]
        %v2223 = vld [vmem:[%s499 + $0x152] sm:$0xff]
        %v2224 = vld [vmem:[%s499 + $0x15a] sm:$0xff]
        %v2225 = vld [vmem:[%s499 + $0x16a] sm:$0xff]
        %v2226 = vld [vmem:[%s499 + $0x172] sm:$0xff]
        %v2227 = vlaneseq
        %v2228 = vshrl.u32 %v2227, 7
        %v2229 = vsub.s32 2, %v2228
        %v2230 = vrot.slane %v1994, %v2229
        %v2231 = vmul.f32 %v2195, %v2230
        %v2232 = vmul.f32 %v2196, %v2230
        %v2233 = vmul.f32 %v2197, %v2230
        %v2234 = vmul.f32 %v2198, %v2230
        %v2235 = vmul.f32 %v2199, %v2230
        %v2236 = vmul.f32 %v2200, %v2230
        %v2237 = vmul.f32 %v2201, %v2230
        %v2238 = vmul.f32 %v2202, %v2230
        %v2239 = vmul.f32 %v2203, %v2230
        %v2240 = vmul.f32 %v2204, %v2230
        %v2241 = vmul.f32 %v2205, %v2230
        %v2242 = vmul.f32 %v2206, %v2230
        %v2243 = vmul.f32 %v2207, %v2230
        %v2244 = vmul.f32 %v2208, %v2230
        %v2245 = vmul.f32 %v2209, %v2230
        %v2246 = vmul.f32 %v2210, %v2230
        %v2247 = vmul.f32 %v2211, %v2230
        %v2248 = vmul.f32 %v2212, %v2230
        %v2249 = vmul.f32 %v2213, %v2230
        %v2250 = vmul.f32 %v2214, %v2230
        %v2251 = vmul.f32 %v2215, %v2230
        %v2252 = vmul.f32 %v2216, %v2230
        %v2253 = vmul.f32 %v2217, %v2230
        %v2254 = vmul.f32 %v2218, %v2230
        %v2255 = vmul.f32 %v2219, %v2230
        %v2256 = vmul.f32 %v2220, %v2230
        %v2257 = vmul.f32 %v2221, %v2230
        %v2258 = vmul.f32 %v2222, %v2230
        %v2259 = vmul.f32 %v2223, %v2230
        %v2260 = vmul.f32 %v2224, %v2230
        %v2261 = vmul.f32 %v2225, %v2230
        %v2262 = vmul.f32 %v2226, %v2230
        %v2263 = vadd.f32 %v2163, %v2231
        %v2264 = vadd.f32 %v2164, %v2232
        %v2265 = vadd.f32 %v2165, %v2233
        %v2266 = vadd.f32 %v2166, %v2234
        %v2267 = vadd.f32 %v2167, %v2235
        %v2268 = vadd.f32 %v2168, %v2236
        %v2269 = vadd.f32 %v2169, %v2237
        %v2270 = vadd.f32 %v2170, %v2238
        %v2271 = vadd.f32 %v2171, %v2239
        %v2272 = vadd.f32 %v2172, %v2240
        %v2273 = vadd.f32 %v2173, %v2241
        %v2274 = vadd.f32 %v2174, %v2242
        %v2275 = vadd.f32 %v2175, %v2243
        %v2276 = vadd.f32 %v2176, %v2244
        %v2277 = vadd.f32 %v2177, %v2245
        %v2278 = vadd.f32 %v2178, %v2246
        %v2279 = vadd.f32 %v2179, %v2247
        %v2280 = vadd.f32 %v2180, %v2248
        %v2281 = vadd.f32 %v2181, %v2249
        %v2282 = vadd.f32 %v2182, %v2250
        %v2283 = vadd.f32 %v2183, %v2251
        %v2284 = vadd.f32 %v2184, %v2252
        %v2285 = vadd.f32 %v2185, %v2253
        %v2286 = vadd.f32 %v2186, %v2254
        %v2287 = vadd.f32 %v2187, %v2255
        %v2288 = vadd.f32 %v2188, %v2256
        %v2289 = vadd.f32 %v2189, %v2257
        %v2290 = vadd.f32 %v2190, %v2258
        %v2291 = vadd.f32 %v2191, %v2259
        %v2292 = vadd.f32 %v2192, %v2260
        %v2293 = vadd.f32 %v2193, %v2261
        %v2294 = vadd.f32 %v2194, %v2262
        %s2295 = scalar_lea.vmem %s4, 8
        %v2296 = vld [vmem:[%s2295] sm:$0x7]
        %s2297 = scalar_lea.vmem [#allocation2], 48
        %v2298 = vld [vmem:[%s2297] sm:$0xff]
        %v2299 = vld [vmem:[%s2297 + $0x8] sm:$0xff]
        %v2300 = vld [vmem:[%s2297 + $0x18] sm:$0xff]
        %v2301 = vld [vmem:[%s2297 + $0x20] sm:$0xff]
        %v2302 = vld [vmem:[%s2297 + $0x30] sm:$0xff]
        %v2303 = vld [vmem:[%s2297 + $0x38] sm:$0xff]
        %v2304 = vld [vmem:[%s2297 + $0x48] sm:$0xff]
        %v2305 = vld [vmem:[%s2297 + $0x50] sm:$0xff]
        %v2306 = vld [vmem:[%s2297 + $0x60] sm:$0xff]
        %v2307 = vld [vmem:[%s2297 + $0x68] sm:$0xff]
        %v2308 = vld [vmem:[%s2297 + $0x78] sm:$0xff]
        %v2309 = vld [vmem:[%s2297 + $0x80] sm:$0xff]
        %v2310 = vld [vmem:[%s2297 + $0x90] sm:$0xff]
        %v2311 = vld [vmem:[%s2297 + $0x98] sm:$0xff]
        %v2312 = vld [vmem:[%s2297 + $0xa8] sm:$0xff]
        %v2313 = vld [vmem:[%s2297 + $0xb0] sm:$0xff]
        %v2314 = vld [vmem:[%s2297 + $0xc0] sm:$0xff]
        %v2315 = vld [vmem:[%s2297 + $0xc8] sm:$0xff]
        %v2316 = vld [vmem:[%s2297 + $0xd8] sm:$0xff]
        %v2317 = vld [vmem:[%s2297 + $0xe0] sm:$0xff]
        %v2318 = vld [vmem:[%s2297 + $0xf0] sm:$0xff]
        %v2319 = vld [vmem:[%s2297 + $0xf8] sm:$0xff]
        %v2320 = vld [vmem:[%s2297 + $0x108] sm:$0xff]
        %v2321 = vld [vmem:[%s2297 + $0x110] sm:$0xff]
        %v2322 = vld [vmem:[%s2297 + $0x120] sm:$0xff]
        %v2323 = vld [vmem:[%s2297 + $0x128] sm:$0xff]
        %v2324 = vld [vmem:[%s2297 + $0x138] sm:$0xff]
        %v2325 = vld [vmem:[%s2297 + $0x140] sm:$0xff]
        %v2326 = vld [vmem:[%s2297 + $0x150] sm:$0xff]
        %v2327 = vld [vmem:[%s2297 + $0x158] sm:$0xff]
        %v2328 = vld [vmem:[%s2297 + $0x168] sm:$0xff]
        %v2329 = vld [vmem:[%s2297 + $0x170] sm:$0xff]
        %v2330 = vlaneseq
        %v2331 = vshrl.u32 %v2330, 7
        %v2332 = vsub.s32 0, %v2331
        %v2333 = vrot.slane %v2296, %v2332
        %v2334 = vmul.f32 %v2298, %v2333
        %v2335 = vmul.f32 %v2299, %v2333
        %v2336 = vmul.f32 %v2300, %v2333
        %v2337 = vmul.f32 %v2301, %v2333
        %v2338 = vmul.f32 %v2302, %v2333
        %v2339 = vmul.f32 %v2303, %v2333
        %v2340 = vmul.f32 %v2304, %v2333
        %v2341 = vmul.f32 %v2305, %v2333
        %v2342 = vmul.f32 %v2306, %v2333
        %v2343 = vmul.f32 %v2307, %v2333
        %v2344 = vmul.f32 %v2308, %v2333
        %v2345 = vmul.f32 %v2309, %v2333
        %v2346 = vmul.f32 %v2310, %v2333
        %v2347 = vmul.f32 %v2311, %v2333
        %v2348 = vmul.f32 %v2312, %v2333
        %v2349 = vmul.f32 %v2313, %v2333
        %v2350 = vmul.f32 %v2314, %v2333
        %v2351 = vmul.f32 %v2315, %v2333
        %v2352 = vmul.f32 %v2316, %v2333
        %v2353 = vmul.f32 %v2317, %v2333
        %v2354 = vmul.f32 %v2318, %v2333
        %v2355 = vmul.f32 %v2319, %v2333
        %v2356 = vmul.f32 %v2320, %v2333
        %v2357 = vmul.f32 %v2321, %v2333
        %v2358 = vmul.f32 %v2322, %v2333
        %v2359 = vmul.f32 %v2323, %v2333
        %v2360 = vmul.f32 %v2324, %v2333
        %v2361 = vmul.f32 %v2325, %v2333
        %v2362 = vmul.f32 %v2326, %v2333
        %v2363 = vmul.f32 %v2327, %v2333
        %v2364 = vmul.f32 %v2328, %v2333
        %v2365 = vmul.f32 %v2329, %v2333
        %v2366 = vadd.f32 %v2263, %v2334
        %v2367 = vadd.f32 %v2264, %v2335
        %v2368 = vadd.f32 %v2265, %v2336
        %v2369 = vadd.f32 %v2266, %v2337
        %v2370 = vadd.f32 %v2267, %v2338
        %v2371 = vadd.f32 %v2268, %v2339
        %v2372 = vadd.f32 %v2269, %v2340
        %v2373 = vadd.f32 %v2270, %v2341
        %v2374 = vadd.f32 %v2271, %v2342
        %v2375 = vadd.f32 %v2272, %v2343
        %v2376 = vadd.f32 %v2273, %v2344
        %v2377 = vadd.f32 %v2274, %v2345
        %v2378 = vadd.f32 %v2275, %v2346
        %v2379 = vadd.f32 %v2276, %v2347
        %v2380 = vadd.f32 %v2277, %v2348
        %v2381 = vadd.f32 %v2278, %v2349
        %v2382 = vadd.f32 %v2279, %v2350
        %v2383 = vadd.f32 %v2280, %v2351
        %v2384 = vadd.f32 %v2281, %v2352
        %v2385 = vadd.f32 %v2282, %v2353
        %v2386 = vadd.f32 %v2283, %v2354
        %v2387 = vadd.f32 %v2284, %v2355
        %v2388 = vadd.f32 %v2285, %v2356
        %v2389 = vadd.f32 %v2286, %v2357
        %v2390 = vadd.f32 %v2287, %v2358
        %v2391 = vadd.f32 %v2288, %v2359
        %v2392 = vadd.f32 %v2289, %v2360
        %v2393 = vadd.f32 %v2290, %v2361
        %v2394 = vadd.f32 %v2291, %v2362
        %v2395 = vadd.f32 %v2292, %v2363
        %v2396 = vadd.f32 %v2293, %v2364
        %v2397 = vadd.f32 %v2294, %v2365
        %v2398 = vld [vmem:[%s2297 + $0x1] sm:$0xff]
        %v2399 = vld [vmem:[%s2297 + $0x9] sm:$0xff]
        %v2400 = vld [vmem:[%s2297 + $0x19] sm:$0xff]
        %v2401 = vld [vmem:[%s2297 + $0x21] sm:$0xff]
        %v2402 = vld [vmem:[%s2297 + $0x31] sm:$0xff]
        %v2403 = vld [vmem:[%s2297 + $0x39] sm:$0xff]
        %v2404 = vld [vmem:[%s2297 + $0x49] sm:$0xff]
        %v2405 = vld [vmem:[%s2297 + $0x51] sm:$0xff]
        %v2406 = vld [vmem:[%s2297 + $0x61] sm:$0xff]
        %v2407 = vld [vmem:[%s2297 + $0x69] sm:$0xff]
        %v2408 = vld [vmem:[%s2297 + $0x79] sm:$0xff]
        %v2409 = vld [vmem:[%s2297 + $0x81] sm:$0xff]
        %v2410 = vld [vmem:[%s2297 + $0x91] sm:$0xff]
        %v2411 = vld [vmem:[%s2297 + $0x99] sm:$0xff]
        %v2412 = vld [vmem:[%s2297 + $0xa9] sm:$0xff]
        %v2413 = vld [vmem:[%s2297 + $0xb1] sm:$0xff]
        %v2414 = vld [vmem:[%s2297 + $0xc1] sm:$0xff]
        %v2415 = vld [vmem:[%s2297 + $0xc9] sm:$0xff]
        %v2416 = vld [vmem:[%s2297 + $0xd9] sm:$0xff]
        %v2417 = vld [vmem:[%s2297 + $0xe1] sm:$0xff]
        %v2418 = vld [vmem:[%s2297 + $0xf1] sm:$0xff]
        %v2419 = vld [vmem:[%s2297 + $0xf9] sm:$0xff]
        %v2420 = vld [vmem:[%s2297 + $0x109] sm:$0xff]
        %v2421 = vld [vmem:[%s2297 + $0x111] sm:$0xff]
        %v2422 = vld [vmem:[%s2297 + $0x121] sm:$0xff]
        %v2423 = vld [vmem:[%s2297 + $0x129] sm:$0xff]
        %v2424 = vld [vmem:[%s2297 + $0x139] sm:$0xff]
        %v2425 = vld [vmem:[%s2297 + $0x141] sm:$0xff]
        %v2426 = vld [vmem:[%s2297 + $0x151] sm:$0xff]
        %v2427 = vld [vmem:[%s2297 + $0x159] sm:$0xff]
        %v2428 = vld [vmem:[%s2297 + $0x169] sm:$0xff]
        %v2429 = vld [vmem:[%s2297 + $0x171] sm:$0xff]
        %v2430 = vlaneseq
        %v2431 = vshrl.u32 %v2430, 7
        %v2432 = vsub.s32 1, %v2431
        %v2433 = vrot.slane %v2296, %v2432
        %v2434 = vmul.f32 %v2398, %v2433
        %v2435 = vmul.f32 %v2399, %v2433
        %v2436 = vmul.f32 %v2400, %v2433
        %v2437 = vmul.f32 %v2401, %v2433
        %v2438 = vmul.f32 %v2402, %v2433
        %v2439 = vmul.f32 %v2403, %v2433
        %v2440 = vmul.f32 %v2404, %v2433
        %v2441 = vmul.f32 %v2405, %v2433
        %v2442 = vmul.f32 %v2406, %v2433
        %v2443 = vmul.f32 %v2407, %v2433
        %v2444 = vmul.f32 %v2408, %v2433
        %v2445 = vmul.f32 %v2409, %v2433
        %v2446 = vmul.f32 %v2410, %v2433
        %v2447 = vmul.f32 %v2411, %v2433
        %v2448 = vmul.f32 %v2412, %v2433
        %v2449 = vmul.f32 %v2413, %v2433
        %v2450 = vmul.f32 %v2414, %v2433
        %v2451 = vmul.f32 %v2415, %v2433
        %v2452 = vmul.f32 %v2416, %v2433
        %v2453 = vmul.f32 %v2417, %v2433
        %v2454 = vmul.f32 %v2418, %v2433
        %v2455 = vmul.f32 %v2419, %v2433
        %v2456 = vmul.f32 %v2420, %v2433
        %v2457 = vmul.f32 %v2421, %v2433
        %v2458 = vmul.f32 %v2422, %v2433
        %v2459 = vmul.f32 %v2423, %v2433
        %v2460 = vmul.f32 %v2424, %v2433
        %v2461 = vmul.f32 %v2425, %v2433
        %v2462 = vmul.f32 %v2426, %v2433
        %v2463 = vmul.f32 %v2427, %v2433
        %v2464 = vmul.f32 %v2428, %v2433
        %v2465 = vmul.f32 %v2429, %v2433
        %v2466 = vadd.f32 %v2366, %v2434
        %v2467 = vadd.f32 %v2367, %v2435
        %v2468 = vadd.f32 %v2368, %v2436
        %v2469 = vadd.f32 %v2369, %v2437
        %v2470 = vadd.f32 %v2370, %v2438
        %v2471 = vadd.f32 %v2371, %v2439
        %v2472 = vadd.f32 %v2372, %v2440
        %v2473 = vadd.f32 %v2373, %v2441
        %v2474 = vadd.f32 %v2374, %v2442
        %v2475 = vadd.f32 %v2375, %v2443
        %v2476 = vadd.f32 %v2376, %v2444
        %v2477 = vadd.f32 %v2377, %v2445
        %v2478 = vadd.f32 %v2378, %v2446
        %v2479 = vadd.f32 %v2379, %v2447
        %v2480 = vadd.f32 %v2380, %v2448
        %v2481 = vadd.f32 %v2381, %v2449
        %v2482 = vadd.f32 %v2382, %v2450
        %v2483 = vadd.f32 %v2383, %v2451
        %v2484 = vadd.f32 %v2384, %v2452
        %v2485 = vadd.f32 %v2385, %v2453
        %v2486 = vadd.f32 %v2386, %v2454
        %v2487 = vadd.f32 %v2387, %v2455
        %v2488 = vadd.f32 %v2388, %v2456
        %v2489 = vadd.f32 %v2389, %v2457
        %v2490 = vadd.f32 %v2390, %v2458
        %v2491 = vadd.f32 %v2391, %v2459
        %v2492 = vadd.f32 %v2392, %v2460
        %v2493 = vadd.f32 %v2393, %v2461
        %v2494 = vadd.f32 %v2394, %v2462
        %v2495 = vadd.f32 %v2395, %v2463
        %v2496 = vadd.f32 %v2396, %v2464
        %v2497 = vadd.f32 %v2397, %v2465
        %v2498 = vld [vmem:[%s2297 + $0x2] sm:$0xff]
        %v2499 = vld [vmem:[%s2297 + $0xa] sm:$0xff]
        %v2500 = vld [vmem:[%s2297 + $0x1a] sm:$0xff]
        %v2501 = vld [vmem:[%s2297 + $0x22] sm:$0xff]
        %v2502 = vld [vmem:[%s2297 + $0x32] sm:$0xff]
        %v2503 = vld [vmem:[%s2297 + $0x3a] sm:$0xff]
        %v2504 = vld [vmem:[%s2297 + $0x4a] sm:$0xff]
        %v2505 = vld [vmem:[%s2297 + $0x52] sm:$0xff]
        %v2506 = vld [vmem:[%s2297 + $0x62] sm:$0xff]
        %v2507 = vld [vmem:[%s2297 + $0x6a] sm:$0xff]
        %v2508 = vld [vmem:[%s2297 + $0x7a] sm:$0xff]
        %v2509 = vld [vmem:[%s2297 + $0x82] sm:$0xff]
        %v2510 = vld [vmem:[%s2297 + $0x92] sm:$0xff]
        %v2511 = vld [vmem:[%s2297 + $0x9a] sm:$0xff]
        %v2512 = vld [vmem:[%s2297 + $0xaa] sm:$0xff]
        %v2513 = vld [vmem:[%s2297 + $0xb2] sm:$0xff]
        %v2514 = vld [vmem:[%s2297 + $0xc2] sm:$0xff]
        %v2515 = vld [vmem:[%s2297 + $0xca] sm:$0xff]
        %v2516 = vld [vmem:[%s2297 + $0xda] sm:$0xff]
        %v2517 = vld [vmem:[%s2297 + $0xe2] sm:$0xff]
        %v2518 = vld [vmem:[%s2297 + $0xf2] sm:$0xff]
        %v2519 = vld [vmem:[%s2297 + $0xfa] sm:$0xff]
        %v2520 = vld [vmem:[%s2297 + $0x10a] sm:$0xff]
        %v2521 = vld [vmem:[%s2297 + $0x112] sm:$0xff]
        %v2522 = vld [vmem:[%s2297 + $0x122] sm:$0xff]
        %v2523 = vld [vmem:[%s2297 + $0x12a] sm:$0xff]
        %v2524 = vld [vmem:[%s2297 + $0x13a] sm:$0xff]
        %v2525 = vld [vmem:[%s2297 + $0x142] sm:$0xff]
        %v2526 = vld [vmem:[%s2297 + $0x152] sm:$0xff]
        %v2527 = vld [vmem:[%s2297 + $0x15a] sm:$0xff]
        %v2528 = vld [vmem:[%s2297 + $0x16a] sm:$0xff]
        %v2529 = vld [vmem:[%s2297 + $0x172] sm:$0xff]
        %v2530 = vlaneseq
        %v2531 = vshrl.u32 %v2530, 7
        %v2532 = vsub.s32 2, %v2531
        %v2533 = vrot.slane %v2296, %v2532
        %v2534 = vmul.f32 %v2498, %v2533
        %v2535 = vmul.f32 %v2499, %v2533
        %v2536 = vmul.f32 %v2500, %v2533
        %v2537 = vmul.f32 %v2501, %v2533
        %v2538 = vmul.f32 %v2502, %v2533
        %v2539 = vmul.f32 %v2503, %v2533
        %v2540 = vmul.f32 %v2504, %v2533
        %v2541 = vmul.f32 %v2505, %v2533
        %v2542 = vmul.f32 %v2506, %v2533
        %v2543 = vmul.f32 %v2507, %v2533
        %v2544 = vmul.f32 %v2508, %v2533
        %v2545 = vmul.f32 %v2509, %v2533
        %v2546 = vmul.f32 %v2510, %v2533
        %v2547 = vmul.f32 %v2511, %v2533
        %v2548 = vmul.f32 %v2512, %v2533
        %v2549 = vmul.f32 %v2513, %v2533
        %v2550 = vmul.f32 %v2514, %v2533
        %v2551 = vmul.f32 %v2515, %v2533
        %v2552 = vmul.f32 %v2516, %v2533
        %v2553 = vmul.f32 %v2517, %v2533
        %v2554 = vmul.f32 %v2518, %v2533
        %v2555 = vmul.f32 %v2519, %v2533
        %v2556 = vmul.f32 %v2520, %v2533
        %v2557 = vmul.f32 %v2521, %v2533
        %v2558 = vmul.f32 %v2522, %v2533
        %v2559 = vmul.f32 %v2523, %v2533
        %v2560 = vmul.f32 %v2524, %v2533
        %v2561 = vmul.f32 %v2525, %v2533
        %v2562 = vmul.f32 %v2526, %v2533
        %v2563 = vmul.f32 %v2527, %v2533
        %v2564 = vmul.f32 %v2528, %v2533
        %v2565 = vmul.f32 %v2529, %v2533
        %v2566 = vadd.f32 %v2466, %v2534
        %v2567 = vadd.f32 %v2467, %v2535
        %v2568 = vadd.f32 %v2468, %v2536
        %v2569 = vadd.f32 %v2469, %v2537
        %v2570 = vadd.f32 %v2470, %v2538
        %v2571 = vadd.f32 %v2471, %v2539
        %v2572 = vadd.f32 %v2472, %v2540
        %v2573 = vadd.f32 %v2473, %v2541
        %v2574 = vadd.f32 %v2474, %v2542
        %v2575 = vadd.f32 %v2475, %v2543
        %v2576 = vadd.f32 %v2476, %v2544
        %v2577 = vadd.f32 %v2477, %v2545
        %v2578 = vadd.f32 %v2478, %v2546
        %v2579 = vadd.f32 %v2479, %v2547
        %v2580 = vadd.f32 %v2480, %v2548
        %v2581 = vadd.f32 %v2481, %v2549
        %v2582 = vadd.f32 %v2482, %v2550
        %v2583 = vadd.f32 %v2483, %v2551
        %v2584 = vadd.f32 %v2484, %v2552
        %v2585 = vadd.f32 %v2485, %v2553
        %v2586 = vadd.f32 %v2486, %v2554
        %v2587 = vadd.f32 %v2487, %v2555
        %v2588 = vadd.f32 %v2488, %v2556
        %v2589 = vadd.f32 %v2489, %v2557
        %v2590 = vadd.f32 %v2490, %v2558
        %v2591 = vadd.f32 %v2491, %v2559
        %v2592 = vadd.f32 %v2492, %v2560
        %v2593 = vadd.f32 %v2493, %v2561
        %v2594 = vadd.f32 %v2494, %v2562
        %v2595 = vadd.f32 %v2495, %v2563
        %v2596 = vadd.f32 %v2496, %v2564
        %v2597 = vadd.f32 %v2497, %v2565
        %v2598 = vld [vmem:[%s5] sm:$0x1]
        %v2600 = vlaneseq
        %v2601 = vshrl.u32 %v2600, 7
        %v2602 = vsub.s32 0, %v2601
        %v2603 = vrot.slane %v2598, %v2602
        %v2605 = vmul.f32 %v2566, %v2603
        %v2606 = vmul.f32 %v2567, %v2603
        %v2607 = vmul.f32 %v2568, %v2603
        %v2608 = vmul.f32 %v2569, %v2603
        %v2609 = vmul.f32 %v2570, %v2603
        %v2610 = vmul.f32 %v2571, %v2603
        %v2611 = vmul.f32 %v2572, %v2603
        %v2612 = vmul.f32 %v2573, %v2603
        %v2613 = vmul.f32 %v2574, %v2603
        %v2614 = vmul.f32 %v2575, %v2603
        %v2615 = vmul.f32 %v2576, %v2603
        %v2616 = vmul.f32 %v2577, %v2603
        %v2617 = vmul.f32 %v2578, %v2603
        %v2618 = vmul.f32 %v2579, %v2603
        %v2619 = vmul.f32 %v2580, %v2603
        %v2620 = vmul.f32 %v2581, %v2603
        %v2621 = vmul.f32 %v2582, %v2603
        %v2622 = vmul.f32 %v2583, %v2603
        %v2623 = vmul.f32 %v2584, %v2603
        %v2624 = vmul.f32 %v2585, %v2603
        %v2625 = vmul.f32 %v2586, %v2603
        %v2626 = vmul.f32 %v2587, %v2603
        %v2627 = vmul.f32 %v2588, %v2603
        %v2628 = vmul.f32 %v2589, %v2603
        %v2629 = vmul.f32 %v2590, %v2603
        %v2630 = vmul.f32 %v2591, %v2603
        %v2631 = vmul.f32 %v2592, %v2603
        %v2632 = vmul.f32 %v2593, %v2603
        %v2633 = vmul.f32 %v2594, %v2603
        %v2634 = vmul.f32 %v2595, %v2603
        %v2635 = vmul.f32 %v2596, %v2603
        %v2636 = vmul.f32 %v2597, %v2603
        %v2637 = vld [vmem:[%s6] sm:$0x1]
        %v2639 = vlaneseq
        %v2640 = vshrl.u32 %v2639, 7
        %v2641 = vsub.s32 0, %v2640
        %v2642 = vrot.slane %v2637, %v2641
        %v2644 = vadd.f32 %v2605, %v2642
        %v2645 = vadd.f32 %v2606, %v2642
        %v2646 = vadd.f32 %v2607, %v2642
        %v2647 = vadd.f32 %v2608, %v2642
        %v2648 = vadd.f32 %v2609, %v2642
        %v2649 = vadd.f32 %v2610, %v2642
        %v2650 = vadd.f32 %v2611, %v2642
        %v2651 = vadd.f32 %v2612, %v2642
        %v2652 = vadd.f32 %v2613, %v2642
        %v2653 = vadd.f32 %v2614, %v2642
        %v2654 = vadd.f32 %v2615, %v2642
        %v2655 = vadd.f32 %v2616, %v2642
        %v2656 = vadd.f32 %v2617, %v2642
        %v2657 = vadd.f32 %v2618, %v2642
        %v2658 = vadd.f32 %v2619, %v2642
        %v2659 = vadd.f32 %v2620, %v2642
        %v2660 = vadd.f32 %v2621, %v2642
        %v2661 = vadd.f32 %v2622, %v2642
        %v2662 = vadd.f32 %v2623, %v2642
        %v2663 = vadd.f32 %v2624, %v2642
        %v2664 = vadd.f32 %v2625, %v2642
        %v2665 = vadd.f32 %v2626, %v2642
        %v2666 = vadd.f32 %v2627, %v2642
        %v2667 = vadd.f32 %v2628, %v2642
        %v2668 = vadd.f32 %v2629, %v2642
        %v2669 = vadd.f32 %v2630, %v2642
        %v2670 = vadd.f32 %v2631, %v2642
        %v2671 = vadd.f32 %v2632, %v2642
        %v2672 = vadd.f32 %v2633, %v2642
        %v2673 = vadd.f32 %v2634, %v2642
        %v2674 = vadd.f32 %v2635, %v2642
        %v2675 = vadd.f32 %v2636, %v2642
        %v2676 = vadd.f32 %v2644, 3.0
        %v2677 = vadd.f32 %v2645, 3.0
        %v2678 = vadd.f32 %v2646, 3.0
        %v2679 = vadd.f32 %v2647, 3.0
        %v2680 = vadd.f32 %v2648, 3.0
        %v2681 = vadd.f32 %v2649, 3.0
        %v2682 = vadd.f32 %v2650, 3.0
        %v2683 = vadd.f32 %v2651, 3.0
        %v2684 = vadd.f32 %v2652, 3.0
        %v2685 = vadd.f32 %v2653, 3.0
        %v2686 = vadd.f32 %v2654, 3.0
        %v2687 = vadd.f32 %v2655, 3.0
        %v2688 = vadd.f32 %v2656, 3.0
        %v2689 = vadd.f32 %v2657, 3.0
        %v2690 = vadd.f32 %v2658, 3.0
        %v2691 = vadd.f32 %v2659, 3.0
        %v2692 = vadd.f32 %v2660, 3.0
        %v2693 = vadd.f32 %v2661, 3.0
        %v2694 = vadd.f32 %v2662, 3.0
        %v2695 = vadd.f32 %v2663, 3.0
        %v2696 = vadd.f32 %v2664, 3.0
        %v2697 = vadd.f32 %v2665, 3.0
        %v2698 = vadd.f32 %v2666, 3.0
        %v2699 = vadd.f32 %v2667, 3.0
        %v2700 = vadd.f32 %v2668, 3.0
        %v2701 = vadd.f32 %v2669, 3.0
        %v2702 = vadd.f32 %v2670, 3.0
        %v2703 = vadd.f32 %v2671, 3.0
        %v2704 = vadd.f32 %v2672, 3.0
        %v2705 = vadd.f32 %v2673, 3.0
        %v2706 = vadd.f32 %v2674, 3.0
        %v2707 = vadd.f32 %v2675, 3.0
        %v2708 = vmax.f32 %v2676, 0.0
        %v2709 = vmax.f32 %v2677, 0.0
        %v2710 = vmax.f32 %v2678, 0.0
        %v2711 = vmax.f32 %v2679, 0.0
        %v2712 = vmax.f32 %v2680, 0.0
        %v2713 = vmax.f32 %v2681, 0.0
        %v2714 = vmax.f32 %v2682, 0.0
        %v2715 = vmax.f32 %v2683, 0.0
        %v2716 = vmax.f32 %v2684, 0.0
        %v2717 = vmax.f32 %v2685, 0.0
        %v2718 = vmax.f32 %v2686, 0.0
        %v2719 = vmax.f32 %v2687, 0.0
        %v2720 = vmax.f32 %v2688, 0.0
        %v2721 = vmax.f32 %v2689, 0.0
        %v2722 = vmax.f32 %v2690, 0.0
        %v2723 = vmax.f32 %v2691, 0.0
        %v2724 = vmax.f32 %v2692, 0.0
        %v2725 = vmax.f32 %v2693, 0.0
        %v2726 = vmax.f32 %v2694, 0.0
        %v2727 = vmax.f32 %v2695, 0.0
        %v2728 = vmax.f32 %v2696, 0.0
        %v2729 = vmax.f32 %v2697, 0.0
        %v2730 = vmax.f32 %v2698, 0.0
        %v2731 = vmax.f32 %v2699, 0.0
        %v2732 = vmax.f32 %v2700, 0.0
        %v2733 = vmax.f32 %v2701, 0.0
        %v2734 = vmax.f32 %v2702, 0.0
        %v2735 = vmax.f32 %v2703, 0.0
        %v2736 = vmax.f32 %v2704, 0.0
        %v2737 = vmax.f32 %v2705, 0.0
        %v2738 = vmax.f32 %v2706, 0.0
        %v2739 = vmax.f32 %v2707, 0.0
        %v2740 = vmin.f32 %v2708, 6.0
        %v2741 = vmin.f32 %v2709, 6.0
        %v2742 = vmin.f32 %v2710, 6.0
        %v2743 = vmin.f32 %v2711, 6.0
        %v2744 = vmin.f32 %v2712, 6.0
        %v2745 = vmin.f32 %v2713, 6.0
        %v2746 = vmin.f32 %v2714, 6.0
        %v2747 = vmin.f32 %v2715, 6.0
        %v2748 = vmin.f32 %v2716, 6.0
        %v2749 = vmin.f32 %v2717, 6.0
        %v2750 = vmin.f32 %v2718, 6.0
        %v2751 = vmin.f32 %v2719, 6.0
        %v2752 = vmin.f32 %v2720, 6.0
        %v2753 = vmin.f32 %v2721, 6.0
        %v2754 = vmin.f32 %v2722, 6.0
        %v2755 = vmin.f32 %v2723, 6.0
        %v2756 = vmin.f32 %v2724, 6.0
        %v2757 = vmin.f32 %v2725, 6.0
        %v2758 = vmin.f32 %v2726, 6.0
        %v2759 = vmin.f32 %v2727, 6.0
        %v2760 = vmin.f32 %v2728, 6.0
        %v2761 = vmin.f32 %v2729, 6.0
        %v2762 = vmin.f32 %v2730, 6.0
        %v2763 = vmin.f32 %v2731, 6.0
        %v2764 = vmin.f32 %v2732, 6.0
        %v2765 = vmin.f32 %v2733, 6.0
        %v2766 = vmin.f32 %v2734, 6.0
        %v2767 = vmin.f32 %v2735, 6.0
        %v2768 = vmin.f32 %v2736, 6.0
        %v2769 = vmin.f32 %v2737, 6.0
        %v2770 = vmin.f32 %v2738, 6.0
        %v2771 = vmin.f32 %v2739, 6.0
        %v2772 = vmul.f32 %v2644, %v2740
        %v2773 = vmul.f32 %v2645, %v2741
        %v2774 = vmul.f32 %v2646, %v2742
        %v2775 = vmul.f32 %v2647, %v2743
        %v2776 = vmul.f32 %v2648, %v2744
        %v2777 = vmul.f32 %v2649, %v2745
        %v2778 = vmul.f32 %v2650, %v2746
        %v2779 = vmul.f32 %v2651, %v2747
        %v2780 = vmul.f32 %v2652, %v2748
        %v2781 = vmul.f32 %v2653, %v2749
        %v2782 = vmul.f32 %v2654, %v2750
        %v2783 = vmul.f32 %v2655, %v2751
        %v2784 = vmul.f32 %v2656, %v2752
        %v2785 = vmul.f32 %v2657, %v2753
        %v2786 = vmul.f32 %v2658, %v2754
        %v2787 = vmul.f32 %v2659, %v2755
        %v2788 = vmul.f32 %v2660, %v2756
        %v2789 = vmul.f32 %v2661, %v2757
        %v2790 = vmul.f32 %v2662, %v2758
        %v2791 = vmul.f32 %v2663, %v2759
        %v2792 = vmul.f32 %v2664, %v2760
        %v2793 = vmul.f32 %v2665, %v2761
        %v2794 = vmul.f32 %v2666, %v2762
        %v2795 = vmul.f32 %v2667, %v2763
        %v2796 = vmul.f32 %v2668, %v2764
        %v2797 = vmul.f32 %v2669, %v2765
        %v2798 = vmul.f32 %v2670, %v2766
        %v2799 = vmul.f32 %v2671, %v2767
        %v2800 = vmul.f32 %v2672, %v2768
        %v2801 = vmul.f32 %v2673, %v2769
        %v2802 = vmul.f32 %v2674, %v2770
        %v2803 = vmul.f32 %v2675, %v2771
        %v2804 = vmul.f32 %v2772, 0.16666667
        %v2805 = vmul.f32 %v2773, 0.16666667
        %v2806 = vmul.f32 %v2774, 0.16666667
        %v2807 = vmul.f32 %v2775, 0.16666667
        %v2808 = vmul.f32 %v2776, 0.16666667
        %v2809 = vmul.f32 %v2777, 0.16666667
        %v2810 = vmul.f32 %v2778, 0.16666667
        %v2811 = vmul.f32 %v2779, 0.16666667
        %v2812 = vmul.f32 %v2780, 0.16666667
        %v2813 = vmul.f32 %v2781, 0.16666667
        %v2814 = vmul.f32 %v2782, 0.16666667
        %v2815 = vmul.f32 %v2783, 0.16666667
        %v2816 = vmul.f32 %v2784, 0.16666667
        %v2817 = vmul.f32 %v2785, 0.16666667
        %v2818 = vmul.f32 %v2786, 0.16666667
        %v2819 = vmul.f32 %v2787, 0.16666667
        %v2820 = vmul.f32 %v2788, 0.16666667
        %v2821 = vmul.f32 %v2789, 0.16666667
        %v2822 = vmul.f32 %v2790, 0.16666667
        %v2823 = vmul.f32 %v2791, 0.16666667
        %v2824 = vmul.f32 %v2792, 0.16666667
        %v2825 = vmul.f32 %v2793, 0.16666667
        %v2826 = vmul.f32 %v2794, 0.16666667
        %v2827 = vmul.f32 %v2795, 0.16666667
        %v2828 = vmul.f32 %v2796, 0.16666667
        %v2829 = vmul.f32 %v2797, 0.16666667
        %v2830 = vmul.f32 %v2798, 0.16666667
        %v2831 = vmul.f32 %v2799, 0.16666667
        %v2832 = vmul.f32 %v2800, 0.16666667
        %v2833 = vmul.f32 %v2801, 0.16666667
        %v2834 = vmul.f32 %v2802, 0.16666667
        %v2835 = vmul.f32 %v2803, 0.16666667
        %v2836 = vsel %vm490, %v2804, 0.0
        %v2837 = vsel %vm490, %v2805, 0.0
        %v2838 = vadd.f32 %v2836, %v2837
        %v2839 = vsel %vm490, %v2806, 0.0
        %v2840 = vadd.f32 %v2838, %v2839
        %v2841 = vsel %vm490, %v2807, 0.0
        %v2842 = vadd.f32 %v2840, %v2841
        %v2843 = vsel %vm490, %v2808, 0.0
        %v2844 = vadd.f32 %v2842, %v2843
        %v2845 = vsel %vm490, %v2809, 0.0
        %v2846 = vadd.f32 %v2844, %v2845
        %v2847 = vsel %vm490, %v2810, 0.0
        %v2848 = vadd.f32 %v2846, %v2847
        %v2849 = vsel %vm490, %v2811, 0.0
        %v2850 = vadd.f32 %v2848, %v2849
        %v2851 = vsel %vm490, %v2812, 0.0
        %v2852 = vadd.f32 %v2850, %v2851
        %v2853 = vsel %vm490, %v2813, 0.0
        %v2854 = vadd.f32 %v2852, %v2853
        %v2855 = vsel %vm490, %v2814, 0.0
        %v2856 = vadd.f32 %v2854, %v2855
        %v2857 = vsel %vm490, %v2815, 0.0
        %v2858 = vadd.f32 %v2856, %v2857
        %v2859 = vsel %vm490, %v2816, 0.0
        %v2860 = vadd.f32 %v2858, %v2859
        %v2861 = vsel %vm490, %v2817, 0.0
        %v2862 = vadd.f32 %v2860, %v2861
        %v2863 = vsel %vm490, %v2818, 0.0
        %v2864 = vadd.f32 %v2862, %v2863
        %v2865 = vsel %vm490, %v2819, 0.0
        %v2866 = vadd.f32 %v2864, %v2865
        %v2867 = vsel %vm490, %v2820, 0.0
        %v2868 = vadd.f32 %v2866, %v2867
        %v2869 = vsel %vm490, %v2821, 0.0
        %v2870 = vadd.f32 %v2868, %v2869
        %v2871 = vsel %vm490, %v2822, 0.0
        %v2872 = vadd.f32 %v2870, %v2871
        %v2873 = vsel %vm490, %v2823, 0.0
        %v2874 = vadd.f32 %v2872, %v2873
        %v2875 = vsel %vm490, %v2824, 0.0
        %v2876 = vadd.f32 %v2874, %v2875
        %v2877 = vsel %vm490, %v2825, 0.0
        %v2878 = vadd.f32 %v2876, %v2877
        %v2879 = vsel %vm490, %v2826, 0.0
        %v2880 = vadd.f32 %v2878, %v2879
        %v2881 = vsel %vm490, %v2827, 0.0
        %v2882 = vadd.f32 %v2880, %v2881
        %v2883 = vsel %vm490, %v2828, 0.0
        %v2884 = vadd.f32 %v2882, %v2883
        %v2885 = vsel %vm490, %v2829, 0.0
        %v2886 = vadd.f32 %v2884, %v2885
        %v2887 = vsel %vm490, %v2830, 0.0
        %v2888 = vadd.f32 %v2886, %v2887
        %v2889 = vsel %vm490, %v2831, 0.0
        %v2890 = vadd.f32 %v2888, %v2889
        %v2891 = vsel %vm490, %v2832, 0.0
        %v2892 = vadd.f32 %v2890, %v2891
        %v2893 = vsel %vm490, %v2833, 0.0
        %v2894 = vadd.f32 %v2892, %v2893
        %v2895 = vsel %vm490, %v2834, 0.0
        %v2896 = vadd.f32 %v2894, %v2895
        %v2897 = vsel %vm490, %v2835, 0.0
        %v2898 = vadd.f32 %v2896, %v2897
        %v2899 = vrot.slane %v2898, 4
        %v2900 = vadd.f32 %v2898, %v2899
        %v2901 = vrot.slane %v2900, 2
        %v2902 = vadd.f32 %v2900, %v2901
        %v2903 = vrot.slane %v2902, 1
        %v2904 = vadd.f32 %v2902, %v2903
        %v2905 = vmul.f32 %v2904, 0.00390625
        %v2906 = vld [vmem:[%s7] sm:$0xff]
        %v2907 = vld [vmem:[%s7 + $0x8] sm:$0xff]
        %v2908 = vld [vmem:[%s7 + $0x10] sm:$0xff]
        %v2909 = vld [vmem:[%s7 + $0x18] sm:$0xff]
        %v2910 = vld [vmem:[%s8] sm:$0x1]
        %v2912 = vsel %vm1627, %v2905, 0
        %2914 = vmatprep.subr.mxu0 0.0
        %2915 = vmatpush1.msra.mxu0 %v2906
        %2916 = vmatprep.subr.mxu0 0.0
        %2917 = vmatpush1.msra.mxu0 %v2907
        %2918 = vmatprep.subr.mxu0 0.0
        %2919 = vmatpush1.msra.mxu0 %v2908
        %2920 = vmatprep.subr.mxu0 0.0
        %2921 = vmatpush1.msra.mxu0 %v2909
        %2922 = vmatprep.subr.mxu0 0.0
        %2923 = vmatpush1.msra.mxu0 0.0
        %2924 = vmatprep.subr.mxu0 0.0
        %2925 = vmatpush1.msra.mxu0 0.0
        %2926 = vmatprep.subr.mxu0 0.0
        %2927 = vmatpush1.msra.mxu0 0.0
        %2928 = vmatprep.subr.mxu0 0.0
        %2929 = vmatpush1.msra.mxu0 0.0
        %2930 = vmatprep.subr.mxu0 0.0
        %2931 = vmatpush1.msra.mxu0 0.0
        %2932 = vmatprep.subr.mxu0 0.0
        %2933 = vmatpush1.msra.mxu0 0.0
        %2934 = vmatprep.subr.mxu0 0.0
        %2935 = vmatpush1.msra.mxu0 0.0
        %2936 = vmatprep.subr.mxu0 0.0
        %2937 = vmatpush1.msra.mxu0 0.0
        %2938 = vmatprep.subr.mxu0 0.0
        %2939 = vmatpush1.msra.mxu0 0.0
        %2940 = vmatprep.subr.mxu0 0.0
        %2941 = vmatpush1.msra.mxu0 0.0
        %2942 = vmatprep.subr.mxu0 0.0
        %2943 = vmatpush1.msra.mxu0 0.0
        %2944 = vmatprep.subr.mxu0 0.0
        %2945 = vmatpush1.msra.mxu0 0.0
        %2946 = vmatprep.subr.mxu0 0.0
        %2947 = vmatpush1.msra.mxu0 0.0
        %2948 = vmatprep.subr.mxu0 0.0
        %2949 = vmatpush1.msra.mxu0 0.0
        %2950 = vmatprep.subr.mxu0 0.0
        %2951 = vmatpush1.msra.mxu0 0.0
        %2952 = vmatprep.subr.mxu0 0.0
        %2953 = vmatpush1.msra.mxu0 0.0
        %2954 = vmatprep.subr.mxu0 0.0
        %2955 = vmatpush1.msra.mxu0 0.0
        %2956 = vmatprep.subr.mxu0 0.0
        %2957 = vmatpush1.msra.mxu0 0.0
        %2958 = vmatprep.subr.mxu0 0.0
        %2959 = vmatpush1.msra.mxu0 0.0
        %2960 = vmatprep.subr.mxu0 0.0
        %2961 = vmatpush1.msra.mxu0 0.0
        %2962 = vmatprep.subr.mxu0 0.0
        %2963 = vmatpush1.msra.mxu0 0.0
        %2964 = vmatprep.subr.mxu0 0.0
        %2965 = vmatpush1.msra.mxu0 0.0
        %2966 = vmatprep.subr.mxu0 0.0
        %2967 = vmatpush1.msra.mxu0 0.0
        %2968 = vmatprep.subr.mxu0 0.0
        %2969 = vmatpush1.msra.mxu0 0.0
        %2970 = vmatprep.subr.mxu0 0.0
        %2971 = vmatpush1.msra.mxu0 0.0
        %2972 = vmatprep.subr.mxu0 0.0
        %2973 = vmatpush1.msra.mxu0 0.0
        %2974 = vmatprep.subr.mxu0 0.0
        %2975 = vmatpush1.msra.mxu0 0.0
        %2976 = vmatprep.subr.mxu0 0.0
        %2977 = vmatpush1.msra.mxu0 0.0
        %2978 = vmatprep.mubr.f32.mxu0 0.0
        %2979 = vmatmul.mubr.f32.gmra.mrb[0].mxu0 %v2912
        %v2980 = vpop.f32.mrb[0].mxu0
        %v2981 = vadd.f32 %v2910, %v2980
        %v2982 = vpop.f32.mrb[0].mxu0
        %2983 = vdwg.mxu0
        %v2984 = vmax.f32 %v2981, 0.0
        %v2985 = vld [vmem:[%s9] sm:$0xff]
        %v2986 = vld [vmem:[%s10] sm:$0x1]
        %vm2987 = vcmask 64512
        %v2989 = vsel %vm2987, %v2984, 0
        %2991 = vmatprep.subr.mxu0 0.0
        %2992 = vmatpush1.msra.mxu0 %v2985
        %2993 = vmatprep.subr.mxu0 0.0
        %2994 = vmatpush1.msra.mxu0 0.0
        %2995 = vmatprep.subr.mxu0 0.0
        %2996 = vmatpush1.msra.mxu0 0.0
        %2997 = vmatprep.subr.mxu0 0.0
        %2998 = vmatpush1.msra.mxu0 0.0
        %2999 = vmatprep.subr.mxu0 0.0
        %3000 = vmatpush1.msra.mxu0 0.0
        %3001 = vmatprep.subr.mxu0 0.0
        %3002 = vmatpush1.msra.mxu0 0.0
        %3003 = vmatprep.subr.mxu0 0.0
        %3004 = vmatpush1.msra.mxu0 0.0
        %3005 = vmatprep.subr.mxu0 0.0
        %3006 = vmatpush1.msra.mxu0 0.0
        %3007 = vmatprep.subr.mxu0 0.0
        %3008 = vmatpush1.msra.mxu0 0.0
        %3009 = vmatprep.subr.mxu0 0.0
        %3010 = vmatpush1.msra.mxu0 0.0
        %3011 = vmatprep.subr.mxu0 0.0
        %3012 = vmatpush1.msra.mxu0 0.0
        %3013 = vmatprep.subr.mxu0 0.0
        %3014 = vmatpush1.msra.mxu0 0.0
        %3015 = vmatprep.subr.mxu0 0.0
        %3016 = vmatpush1.msra.mxu0 0.0
        %3017 = vmatprep.subr.mxu0 0.0
        %3018 = vmatpush1.msra.mxu0 0.0
        %3019 = vmatprep.subr.mxu0 0.0
        %3020 = vmatpush1.msra.mxu0 0.0
        %3021 = vmatprep.subr.mxu0 0.0
        %3022 = vmatpush1.msra.mxu0 0.0
        %3023 = vmatprep.subr.mxu0 0.0
        %3024 = vmatpush1.msra.mxu0 0.0
        %3025 = vmatprep.subr.mxu0 0.0
        %3026 = vmatpush1.msra.mxu0 0.0
        %3027 = vmatprep.subr.mxu0 0.0
        %3028 = vmatpush1.msra.mxu0 0.0
        %3029 = vmatprep.subr.mxu0 0.0
        %3030 = vmatpush1.msra.mxu0 0.0
        %3031 = vmatprep.subr.mxu0 0.0
        %3032 = vmatpush1.msra.mxu0 0.0
        %3033 = vmatprep.subr.mxu0 0.0
        %3034 = vmatpush1.msra.mxu0 0.0
        %3035 = vmatprep.subr.mxu0 0.0
        %3036 = vmatpush1.msra.mxu0 0.0
        %3037 = vmatprep.subr.mxu0 0.0
        %3038 = vmatpush1.msra.mxu0 0.0
        %3039 = vmatprep.subr.mxu0 0.0
        %3040 = vmatpush1.msra.mxu0 0.0
        %3041 = vmatprep.subr.mxu0 0.0
        %3042 = vmatpush1.msra.mxu0 0.0
        %3043 = vmatprep.subr.mxu0 0.0
        %3044 = vmatpush1.msra.mxu0 0.0
        %3045 = vmatprep.subr.mxu0 0.0
        %3046 = vmatpush1.msra.mxu0 0.0
        %3047 = vmatprep.subr.mxu0 0.0
        %3048 = vmatpush1.msra.mxu0 0.0
        %3049 = vmatprep.subr.mxu0 0.0
        %3050 = vmatpush1.msra.mxu0 0.0
        %3051 = vmatprep.subr.mxu0 0.0
        %3052 = vmatpush1.msra.mxu0 0.0
        %3053 = vmatprep.subr.mxu0 0.0
        %3054 = vmatpush1.msra.mxu0 0.0
        %3055 = vmatprep.mubr.f32.mxu0 0.0
        %3056 = vmatmul.mubr.f32.gmra.mrb[0].mxu0 %v2989
        %v3057 = vpop.f32.mrb[0].mxu0
        %v3058 = vadd.f32 %v2986, %v3057
        %v3059 = vpop.f32.mrb[0].mxu0
        %3060 = vdwg.mxu0
        %v3061 = vmul.f32 %v3058, 0.2
        %v3062 = vadd.f32 %v3061, 0.5
        %v3063 = vmax.f32 %v3062, 0.0
        %v3064 = vmin.f32 %v3063, 1.0
        %3065 = vrot.lane.b32.xlu0 %v2905, 96
        %v3066 = vpop.permute.xlu0 %3065
        %v3067 = vsel %vm1627, %v3066, 0
        %3069 = vmatprep.subr.mxu0 0.0
        %3070 = vmatpush1.msra.mxu0 %v2906
        %3071 = vmatprep.subr.mxu0 0.0
        %3072 = vmatpush1.msra.mxu0 %v2907
        %3073 = vmatprep.subr.mxu0 0.0
        %3074 = vmatpush1.msra.mxu0 %v2908
        %3075 = vmatprep.subr.mxu0 0.0
        %3076 = vmatpush1.msra.mxu0 %v2909
        %3077 = vmatprep.subr.mxu0 0.0
        %3078 = vmatpush1.msra.mxu0 0.0
        %3079 = vmatprep.subr.mxu0 0.0
        %3080 = vmatpush1.msra.mxu0 0.0
        %3081 = vmatprep.subr.mxu0 0.0
        %3082 = vmatpush1.msra.mxu0 0.0
        %3083 = vmatprep.subr.mxu0 0.0
        %3084 = vmatpush1.msra.mxu0 0.0
        %3085 = vmatprep.subr.mxu0 0.0
        %3086 = vmatpush1.msra.mxu0 0.0
        %3087 = vmatprep.subr.mxu0 0.0
        %3088 = vmatpush1.msra.mxu0 0.0
        %3089 = vmatprep.subr.mxu0 0.0
        %3090 = vmatpush1.msra.mxu0 0.0
        %3091 = vmatprep.subr.mxu0 0.0
        %3092 = vmatpush1.msra.mxu0 0.0
        %3093 = vmatprep.subr.mxu0 0.0
        %3094 = vmatpush1.msra.mxu0 0.0
        %3095 = vmatprep.subr.mxu0 0.0
        %3096 = vmatpush1.msra.mxu0 0.0
        %3097 = vmatprep.subr.mxu0 0.0
        %3098 = vmatpush1.msra.mxu0 0.0
        %3099 = vmatprep.subr.mxu0 0.0
        %3100 = vmatpush1.msra.mxu0 0.0
        %3101 = vmatprep.subr.mxu0 0.0
        %3102 = vmatpush1.msra.mxu0 0.0
        %3103 = vmatprep.subr.mxu0 0.0
        %3104 = vmatpush1.msra.mxu0 0.0
        %3105 = vmatprep.subr.mxu0 0.0
        %3106 = vmatpush1.msra.mxu0 0.0
        %3107 = vmatprep.subr.mxu0 0.0
        %3108 = vmatpush1.msra.mxu0 0.0
        %3109 = vmatprep.subr.mxu0 0.0
        %3110 = vmatpush1.msra.mxu0 0.0
        %3111 = vmatprep.subr.mxu0 0.0
        %3112 = vmatpush1.msra.mxu0 0.0
        %3113 = vmatprep.subr.mxu0 0.0
        %3114 = vmatpush1.msra.mxu0 0.0
        %3115 = vmatprep.subr.mxu0 0.0
        %3116 = vmatpush1.msra.mxu0 0.0
        %3117 = vmatprep.subr.mxu0 0.0
        %3118 = vmatpush1.msra.mxu0 0.0
        %3119 = vmatprep.subr.mxu0 0.0
        %3120 = vmatpush1.msra.mxu0 0.0
        %3121 = vmatprep.subr.mxu0 0.0
        %3122 = vmatpush1.msra.mxu0 0.0
        %3123 = vmatprep.subr.mxu0 0.0
        %3124 = vmatpush1.msra.mxu0 0.0
        %3125 = vmatprep.subr.mxu0 0.0
        %3126 = vmatpush1.msra.mxu0 0.0
        %3127 = vmatprep.subr.mxu0 0.0
        %3128 = vmatpush1.msra.mxu0 0.0
        %3129 = vmatprep.subr.mxu0 0.0
        %3130 = vmatpush1.msra.mxu0 0.0
        %3131 = vmatprep.subr.mxu0 0.0
        %3132 = vmatpush1.msra.mxu0 0.0
        %3133 = vmatprep.mubr.f32.mxu0 0.0
        %3134 = vmatmul.mubr.f32.gmra.mrb[0].mxu0 %v3067
        %v3135 = vpop.f32.mrb[0].mxu0
        %v3136 = vadd.f32 %v2910, %v3135
        %v3137 = vpop.f32.mrb[0].mxu0
        %3138 = vdwg.mxu0
        %v3139 = vmax.f32 %v3136, 0.0
        %v3141 = vsel %vm2987, %v3139, 0
        %3143 = vmatprep.subr.mxu0 0.0
        %3144 = vmatpush1.msra.mxu0 %v2985
        %3145 = vmatprep.subr.mxu0 0.0
        %3146 = vmatpush1.msra.mxu0 0.0
        %3147 = vmatprep.subr.mxu0 0.0
        %3148 = vmatpush1.msra.mxu0 0.0
        %3149 = vmatprep.subr.mxu0 0.0
        %3150 = vmatpush1.msra.mxu0 0.0
        %3151 = vmatprep.subr.mxu0 0.0
        %3152 = vmatpush1.msra.mxu0 0.0
        %3153 = vmatprep.subr.mxu0 0.0
        %3154 = vmatpush1.msra.mxu0 0.0
        %3155 = vmatprep.subr.mxu0 0.0
        %3156 = vmatpush1.msra.mxu0 0.0
        %3157 = vmatprep.subr.mxu0 0.0
        %3158 = vmatpush1.msra.mxu0 0.0
        %3159 = vmatprep.subr.mxu0 0.0
        %3160 = vmatpush1.msra.mxu0 0.0
        %3161 = vmatprep.subr.mxu0 0.0
        %3162 = vmatpush1.msra.mxu0 0.0
        %3163 = vmatprep.subr.mxu0 0.0
        %3164 = vmatpush1.msra.mxu0 0.0
        %3165 = vmatprep.subr.mxu0 0.0
        %3166 = vmatpush1.msra.mxu0 0.0
        %3167 = vmatprep.subr.mxu0 0.0
        %3168 = vmatpush1.msra.mxu0 0.0
        %3169 = vmatprep.subr.mxu0 0.0
        %3170 = vmatpush1.msra.mxu0 0.0
        %3171 = vmatprep.subr.mxu0 0.0
        %3172 = vmatpush1.msra.mxu0 0.0
        %3173 = vmatprep.subr.mxu0 0.0
        %3174 = vmatpush1.msra.mxu0 0.0
        %3175 = vmatprep.subr.mxu0 0.0
        %3176 = vmatpush1.msra.mxu0 0.0
        %3177 = vmatprep.subr.mxu0 0.0
        %3178 = vmatpush1.msra.mxu0 0.0
        %3179 = vmatprep.subr.mxu0 0.0
        %3180 = vmatpush1.msra.mxu0 0.0
        %3181 = vmatprep.subr.mxu0 0.0
        %3182 = vmatpush1.msra.mxu0 0.0
        %3183 = vmatprep.subr.mxu0 0.0
        %3184 = vmatpush1.msra.mxu0 0.0
        %3185 = vmatprep.subr.mxu0 0.0
        %3186 = vmatpush1.msra.mxu0 0.0
        %3187 = vmatprep.subr.mxu0 0.0
        %3188 = vmatpush1.msra.mxu0 0.0
        %3189 = vmatprep.subr.mxu0 0.0
        %3190 = vmatpush1.msra.mxu0 0.0
        %3191 = vmatprep.subr.mxu0 0.0
        %3192 = vmatpush1.msra.mxu0 0.0
        %3193 = vmatprep.subr.mxu0 0.0
        %3194 = vmatpush1.msra.mxu0 0.0
        %3195 = vmatprep.subr.mxu0 0.0
        %3196 = vmatpush1.msra.mxu0 0.0
        %3197 = vmatprep.subr.mxu0 0.0
        %3198 = vmatpush1.msra.mxu0 0.0
        %3199 = vmatprep.subr.mxu0 0.0
        %3200 = vmatpush1.msra.mxu0 0.0
        %3201 = vmatprep.subr.mxu0 0.0
        %3202 = vmatpush1.msra.mxu0 0.0
        %3203 = vmatprep.subr.mxu0 0.0
        %3204 = vmatpush1.msra.mxu0 0.0
        %3205 = vmatprep.subr.mxu0 0.0
        %3206 = vmatpush1.msra.mxu0 0.0
        %3207 = vmatprep.mubr.f32.mxu0 0.0
        %3208 = vmatmul.mubr.f32.gmra.mrb[0].mxu0 %v3141
        %v3209 = vpop.f32.mrb[0].mxu0
        %v3210 = vadd.f32 %v2986, %v3209
        %v3211 = vpop.f32.mrb[0].mxu0
        %3212 = vdwg.mxu0
        %v3213 = vmul.f32 %v3210, 0.2
        %v3214 = vadd.f32 %v3213, 0.5
        %v3215 = vmax.f32 %v3214, 0.0
        %v3216 = vmin.f32 %v3215, 1.0
        %3218 = vrot.lane.b32.xlu0 %v3216, 32
        %v3219 = vpop.permute.xlu0 %3218
        %v3221 = vsel %vm1627, %v3064, %v3219
        %v3222 = vlaneseq
        %v3223 = vshrl.u32 %v3222, 7
        %v3224 = vsub.s32 0, %v3223
        %v3225 = vrot.slane %v3221, %v3224
        %v3226 = vmul.f32 %v2804, %v3225
        %v3227 = vmul.f32 %v2805, %v3225
        %v3228 = vmul.f32 %v2806, %v3225
        %v3229 = vmul.f32 %v2807, %v3225
        %v3230 = vmul.f32 %v2808, %v3225
        %v3231 = vmul.f32 %v2809, %v3225
        %v3232 = vmul.f32 %v2810, %v3225
        %v3233 = vmul.f32 %v2811, %v3225
        %v3234 = vmul.f32 %v2812, %v3225
        %v3235 = vmul.f32 %v2813, %v3225
        %v3236 = vmul.f32 %v2814, %v3225
        %v3237 = vmul.f32 %v2815, %v3225
        %v3238 = vmul.f32 %v2816, %v3225
        %v3239 = vmul.f32 %v2817, %v3225
        %v3240 = vmul.f32 %v2818, %v3225
        %v3241 = vmul.f32 %v2819, %v3225
        %v3242 = vmul.f32 %v2820, %v3225
        %v3243 = vmul.f32 %v2821, %v3225
        %v3244 = vmul.f32 %v2822, %v3225
        %v3245 = vmul.f32 %v2823, %v3225
        %v3246 = vmul.f32 %v2824, %v3225
        %v3247 = vmul.f32 %v2825, %v3225
        %v3248 = vmul.f32 %v2826, %v3225
        %v3249 = vmul.f32 %v2827, %v3225
        %v3250 = vmul.f32 %v2828, %v3225
        %v3251 = vmul.f32 %v2829, %v3225
        %v3252 = vmul.f32 %v2830, %v3225
        %v3253 = vmul.f32 %v2831, %v3225
        %v3254 = vmul.f32 %v2832, %v3225
        %v3255 = vmul.f32 %v2833, %v3225
        %v3256 = vmul.f32 %v2834, %v3225
        %v3257 = vmul.f32 %v2835, %v3225
        %v3258 = vpack.c.bf16 %v3227, %v3226
        %v3259 = vpack.c.bf16 %v3229, %v3228
        %v3260 = vpack.c.bf16 %v3231, %v3230
        %v3261 = vpack.c.bf16 %v3233, %v3232
        %v3262 = vpack.c.bf16 %v3235, %v3234
        %v3263 = vpack.c.bf16 %v3237, %v3236
        %v3264 = vpack.c.bf16 %v3239, %v3238
        %v3265 = vpack.c.bf16 %v3241, %v3240
        %v3266 = vpack.c.bf16 %v3243, %v3242
        %v3267 = vpack.c.bf16 %v3245, %v3244
        %v3268 = vpack.c.bf16 %v3247, %v3246
        %v3269 = vpack.c.bf16 %v3249, %v3248
        %v3270 = vpack.c.bf16 %v3251, %v3250
        %v3271 = vpack.c.bf16 %v3253, %v3252
        %v3272 = vpack.c.bf16 %v3255, %v3254
        %v3273 = vpack.c.bf16 %v3257, %v3256
        %v3274 = vld [vmem:[%s11] sm:$0xf]
        %v3275 = vld [vmem:[%s11 + $0x4] sm:$0xf]
        %v3276 = vld [vmem:[%s11 + $0x8] sm:$0xf]
        %v3277 = vld [vmem:[%s11 + $0xc] sm:$0xf]
        %v3282 = vunpack.c.l.b16 %v3274
        %v3283 = vunpack.c.l.b16 %v3275
        %v3284 = vunpack.c.l.b16 %v3276
        %v3285 = vunpack.c.l.b16 %v3277
        %v3286 = vpack.c.b16 %v3283, %v3282
        %v3287 = vpack.c.b16 %v3285, %v3284
        %3290 = vxpose.xlu0.c.b16.start [1/8] %v3286, 128
        %3291 = vxpose.xlu0.c.b16.cont [2/8] %v3287, 128
        %3292 = vxpose.xlu0.c.b16.cont [3/8] 0, 128
        %3293 = vxpose.xlu0.c.b16.cont [4/8] 0, 128
        %3294 = vxpose.xlu0.c.b16.cont [5/8] 0, 128
        %3295 = vxpose.xlu0.c.b16.cont [6/8] 0, 128
        %3296 = vxpose.xlu0.c.b16.cont [7/8] 0, 128
        %3297 = vxpose.xlu0.c.b16.end [8/8] 0, 128
        %v3298 = vpop.trf.xlu0
        %v3299 = vpop.trf.xlu0
        %v3300 = vpop.trf.xlu0
        %v3301 = vpop.trf.xlu0
        %v3302 = vpop.trf.xlu0
        %v3303 = vpop.trf.xlu0
        %v3304 = vpop.trf.xlu0
        %v3305 = vpop.trf.xlu0
        %v3307 = vsel %vm1627, %v3298, 0
        %v3310 = vsel %vm1627, %v3258, 0
        %v3313 = vsel %vm1627, %v3259, 0
        %v3316 = vsel %vm1627, %v3260, 0
        %v3319 = vsel %vm1627, %v3261, 0
        %v3322 = vsel %vm1627, %v3262, 0
        %v3325 = vsel %vm1627, %v3263, 0
        %v3328 = vsel %vm1627, %v3264, 0
        %v3331 = vsel %vm1627, %v3265, 0
        %v3334 = vsel %vm1627, %v3266, 0
        %v3337 = vsel %vm1627, %v3267, 0
        %v3340 = vsel %vm1627, %v3268, 0
        %v3343 = vsel %vm1627, %v3269, 0
        %v3346 = vsel %vm1627, %v3270, 0
        %v3349 = vsel %vm1627, %v3271, 0
        %v3352 = vsel %vm1627, %v3272, 0
        %v3355 = vsel %vm1627, %v3273, 0
        %3357 = vmatprep.subr.bf16.mxu0 0
        %3358 = vmatpush1.bf16.xpose.msra.mxu0 %v3310
        %3359 = vmatprep.subr.bf16.mxu0 0
        %3360 = vmatpush1.bf16.xpose.msra.mxu0 %v3313
        %3361 = vmatprep.subr.bf16.mxu0 0
        %3362 = vmatpush1.bf16.xpose.msra.mxu0 %v3316
        %3363 = vmatprep.subr.bf16.mxu0 0
        %3364 = vmatpush1.bf16.xpose.msra.mxu0 %v3319
        %3365 = vmatprep.subr.bf16.mxu0 0
        %3366 = vmatpush1.bf16.xpose.msra.mxu0 %v3322
        %3367 = vmatprep.subr.bf16.mxu0 0
        %3368 = vmatpush1.bf16.xpose.msra.mxu0 %v3325
        %3369 = vmatprep.subr.bf16.mxu0 0
        %3370 = vmatpush1.bf16.xpose.msra.mxu0 %v3328
        %3371 = vmatprep.subr.bf16.mxu0 0
        %3372 = vmatpush1.bf16.xpose.msra.mxu0 %v3331
        %3373 = vmatprep.subr.bf16.mxu0 0
        %3374 = vmatpush1.bf16.xpose.msra.mxu0 %v3334
        %3375 = vmatprep.subr.bf16.mxu0 0
        %3376 = vmatpush1.bf16.xpose.msra.mxu0 %v3337
        %3377 = vmatprep.subr.bf16.mxu0 0
        %3378 = vmatpush1.bf16.xpose.msra.mxu0 %v3340
        %3379 = vmatprep.subr.bf16.mxu0 0
        %3380 = vmatpush1.bf16.xpose.msra.mxu0 %v3343
        %3381 = vmatprep.subr.bf16.mxu0 0
        %3382 = vmatpush1.bf16.xpose.msra.mxu0 %v3346
        %3383 = vmatprep.subr.bf16.mxu0 0
        %3384 = vmatpush1.bf16.xpose.msra.mxu0 %v3349
        %3385 = vmatprep.subr.bf16.mxu0 0
        %3386 = vmatpush1.bf16.xpose.msra.mxu0 %v3352
        %3387 = vmatprep.subr.bf16.mxu0 0
        %3388 = vmatpush1.bf16.xpose.msra.mxu0 %v3355
        %3389 = vmatprep.mubr.bf16.mxu0 0
        %3390 = vmatmul.mubr.bf16.gmra.mrb[0].mxu0 %v3307
        %v3391 = vpop.f32.mrb[0].mxu0
        %v3392 = vadd.f32 0.0, %v3391
        %v3393 = vpop.f32.mrb[0].mxu0
        %v3394 = vadd.f32 0.0, %v3393
        %v3395 = vpop.f32.mrb[0].mxu0
        %v3396 = vadd.f32 0.0, %v3395
        %v3397 = vpop.f32.mrb[0].mxu0
        %v3398 = vadd.f32 0.0, %v3397
        %3399 = vdwg.mxu0
        %v3400 = vld [vmem:[%s12] sm:$0xff]
        %v3401 = vld [vmem:[%s12 + $0x8] sm:$0xff]
        %3403 = vset.pattern.permute.xlu0 0
        %3404 = vperm.xlu0 %3403, %v3400
        %v3405 = vpop.permute.xlu0 %3404
        %3408 = vset.pattern.permute.xlu0 0
        %3409 = vperm.xlu0 %3408, %v3401
        %v3410 = vpop.permute.xlu0 %3409
        %v3412 = vmul.f32 %v3392, %v3405
        %v3413 = vmul.f32 %v3394, %v3405
        %v3414 = vmul.f32 %v3396, %v3410
        %v3415 = vmul.f32 %v3398, %v3410
        %v3416 = vld [vmem:[%s13] sm:$0xff]
        %v3417 = vld [vmem:[%s13 + $0x8] sm:$0xff]
        %3419 = vset.pattern.permute.xlu0 0
        %3420 = vperm.xlu0 %3419, %v3416
        %v3421 = vpop.permute.xlu0 %3420
        %3424 = vset.pattern.permute.xlu0 0
        %3425 = vperm.xlu0 %3424, %v3417
        %v3426 = vpop.permute.xlu0 %3425
        %v3428 = vadd.f32 %v3412, %v3421
        %v3429 = vadd.f32 %v3413, %v3421
        %v3430 = vadd.f32 %v3414, %v3426
        %v3431 = vadd.f32 %v3415, %v3426
        %v3432 = vld [vmem:[%s442] sm:$0xff]
        %v3433 = vld [vmem:[%s442 + $0x8] sm:$0xff]
        %v3434 = vld [vmem:[%s442 + $0x10] sm:$0xff]
        %v3435 = vld [vmem:[%s442 + $0x18] sm:$0xff]
        %v3436 = vadd.f32 %v3428, %v3432
        %v3437 = vadd.f32 %v3429, %v3433
        %v3438 = vadd.f32 %v3430, %v3434
        %v3439 = vadd.f32 %v3431, %v3435
        %3440 = vst [vmem:[%s486] sm:$0xff] %v3436
        %3441 = vst [vmem:[%s486 + $0x8] sm:$0xff] %v3437
        %3442 = vst [vmem:[%s486 + $0x10] sm:$0xff] %v3438
        %3443 = vst [vmem:[%s486 + $0x18] sm:$0xff] %v3439
        %v3444 = vld [vmem:[%s11] sm:$0xf]
        %v3445 = vld [vmem:[%s11 + $0x4] sm:$0xf]
        %v3446 = vld [vmem:[%s11 + $0x8] sm:$0xf]
        %v3447 = vld [vmem:[%s11 + $0xc] sm:$0xf]
        %v3452 = vunpack.c.l.b16 %v3444
        %v3453 = vunpack.c.l.b16 %v3445
        %v3454 = vunpack.c.l.b16 %v3446
        %v3455 = vunpack.c.l.b16 %v3447
        %v3456 = vpack.c.b16 %v3453, %v3452
        %v3457 = vpack.c.b16 %v3455, %v3454
        %3460 = vxpose.xlu0.c.b16.start [1/8] %v3456, 128
        %3461 = vxpose.xlu0.c.b16.cont [2/8] %v3457, 128
        %3462 = vxpose.xlu0.c.b16.cont [3/8] 0, 128
        %3463 = vxpose.xlu0.c.b16.cont [4/8] 0, 128
        %3464 = vxpose.xlu0.c.b16.cont [5/8] 0, 128
        %3465 = vxpose.xlu0.c.b16.cont [6/8] 0, 128
        %3466 = vxpose.xlu0.c.b16.cont [7/8] 0, 128
        %3467 = vxpose.xlu0.c.b16.end [8/8] 0, 128
        %v3468 = vpop.trf.xlu0
        %v3469 = vpop.trf.xlu0
        %v3470 = vpop.trf.xlu0
        %v3471 = vpop.trf.xlu0
        %v3472 = vpop.trf.xlu0
        %v3473 = vpop.trf.xlu0
        %v3474 = vpop.trf.xlu0
        %v3475 = vpop.trf.xlu0
        %3492 = vrot.lane.b32.xlu0 %v3258, 96
        %v3493 = vpop.permute.xlu0 %3492
        %3494 = vrot.lane.b32.xlu0 %v3259, 96
        %v3495 = vpop.permute.xlu0 %3494
        %3496 = vrot.lane.b32.xlu0 %v3260, 96
        %v3497 = vpop.permute.xlu0 %3496
        %3498 = vrot.lane.b32.xlu0 %v3261, 96
        %v3499 = vpop.permute.xlu0 %3498
        %3500 = vrot.lane.b32.xlu0 %v3262, 96
        %v3501 = vpop.permute.xlu0 %3500
        %3502 = vrot.lane.b32.xlu0 %v3263, 96
        %v3503 = vpop.permute.xlu0 %3502
        %3504 = vrot.lane.b32.xlu0 %v3264, 96
        %v3505 = vpop.permute.xlu0 %3504
        %3506 = vrot.lane.b32.xlu0 %v3265, 96
        %v3507 = vpop.permute.xlu0 %3506
        %3508 = vrot.lane.b32.xlu0 %v3266, 96
        %v3509 = vpop.permute.xlu0 %3508
        %3510 = vrot.lane.b32.xlu0 %v3267, 96
        %v3511 = vpop.permute.xlu0 %3510
        %3512 = vrot.lane.b32.xlu0 %v3268, 96
        %v3513 = vpop.permute.xlu0 %3512
        %3514 = vrot.lane.b32.xlu0 %v3269, 96
        %v3515 = vpop.permute.xlu0 %3514
        %3516 = vrot.lane.b32.xlu0 %v3270, 96
        %v3517 = vpop.permute.xlu0 %3516
        %3518 = vrot.lane.b32.xlu0 %v3271, 96
        %v3519 = vpop.permute.xlu0 %3518
        %3520 = vrot.lane.b32.xlu0 %v3272, 96
        %v3521 = vpop.permute.xlu0 %3520
        %3522 = vrot.lane.b32.xlu0 %v3273, 96
        %v3523 = vpop.permute.xlu0 %3522
        %v3525 = vsel %vm1627, %v3468, 0
        %v3528 = vsel %vm1627, %v3493, 0
        %v3531 = vsel %vm1627, %v3495, 0
        %v3534 = vsel %vm1627, %v3497, 0
        %v3537 = vsel %vm1627, %v3499, 0
        %v3540 = vsel %vm1627, %v3501, 0
        %v3543 = vsel %vm1627, %v3503, 0
        %v3546 = vsel %vm1627, %v3505, 0
        %v3549 = vsel %vm1627, %v3507, 0
        %v3552 = vsel %vm1627, %v3509, 0
        %v3555 = vsel %vm1627, %v3511, 0
        %v3558 = vsel %vm1627, %v3513, 0
        %v3561 = vsel %vm1627, %v3515, 0
        %v3564 = vsel %vm1627, %v3517, 0
        %v3567 = vsel %vm1627, %v3519, 0
        %v3570 = vsel %vm1627, %v3521, 0
        %v3573 = vsel %vm1627, %v3523, 0
        %3575 = vmatprep.subr.bf16.mxu0 0
        %3576 = vmatpush1.bf16.xpose.msra.mxu0 %v3528
        %3577 = vmatprep.subr.bf16.mxu0 0
        %3578 = vmatpush1.bf16.xpose.msra.mxu0 %v3531
        %3579 = vmatprep.subr.bf16.mxu0 0
        %3580 = vmatpush1.bf16.xpose.msra.mxu0 %v3534
        %3581 = vmatprep.subr.bf16.mxu0 0
        %3582 = vmatpush1.bf16.xpose.msra.mxu0 %v3537
        %3583 = vmatprep.subr.bf16.mxu0 0
        %3584 = vmatpush1.bf16.xpose.msra.mxu0 %v3540
        %3585 = vmatprep.subr.bf16.mxu0 0
        %3586 = vmatpush1.bf16.xpose.msra.mxu0 %v3543
        %3587 = vmatprep.subr.bf16.mxu0 0
        %3588 = vmatpush1.bf16.xpose.msra.mxu0 %v3546
        %3589 = vmatprep.subr.bf16.mxu0 0
        %3590 = vmatpush1.bf16.xpose.msra.mxu0 %v3549
        %3591 = vmatprep.subr.bf16.mxu0 0
        %3592 = vmatpush1.bf16.xpose.msra.mxu0 %v3552
        %3593 = vmatprep.subr.bf16.mxu0 0
        %3594 = vmatpush1.bf16.xpose.msra.mxu0 %v3555
        %3595 = vmatprep.subr.bf16.mxu0 0
        %3596 = vmatpush1.bf16.xpose.msra.mxu0 %v3558
        %3597 = vmatprep.subr.bf16.mxu0 0
        %3598 = vmatpush1.bf16.xpose.msra.mxu0 %v3561
        %3599 = vmatprep.subr.bf16.mxu0 0
        %3600 = vmatpush1.bf16.xpose.msra.mxu0 %v3564
        %3601 = vmatprep.subr.bf16.mxu0 0
        %3602 = vmatpush1.bf16.xpose.msra.mxu0 %v3567
        %3603 = vmatprep.subr.bf16.mxu0 0
        %3604 = vmatpush1.bf16.xpose.msra.mxu0 %v3570
        %3605 = vmatprep.subr.bf16.mxu0 0
        %3606 = vmatpush1.bf16.xpose.msra.mxu0 %v3573
        %3607 = vmatprep.mubr.bf16.mxu0 0
        %3608 = vmatmul.mubr.bf16.gmra.mrb[0].mxu0 %v3525
        %v3609 = vpop.f32.mrb[0].mxu0
        %v3610 = vadd.f32 0.0, %v3609
        %v3611 = vpop.f32.mrb[0].mxu0
        %v3612 = vadd.f32 0.0, %v3611
        %v3613 = vpop.f32.mrb[0].mxu0
        %v3614 = vadd.f32 0.0, %v3613
        %v3615 = vpop.f32.mrb[0].mxu0
        %v3616 = vadd.f32 0.0, %v3615
        %3617 = vdwg.mxu0
        %v3618 = vld [vmem:[%s12] sm:$0xff]
        %v3619 = vld [vmem:[%s12 + $0x8] sm:$0xff]
        %3621 = vset.pattern.permute.xlu0 0
        %3622 = vperm.xlu0 %3621, %v3618
        %v3623 = vpop.permute.xlu0 %3622
        %3626 = vset.pattern.permute.xlu0 0
        %3627 = vperm.xlu0 %3626, %v3619
        %v3628 = vpop.permute.xlu0 %3627
        %v3630 = vmul.f32 %v3610, %v3623
        %v3631 = vmul.f32 %v3612, %v3623
        %v3632 = vmul.f32 %v3614, %v3628
        %v3633 = vmul.f32 %v3616, %v3628
        %v3634 = vld [vmem:[%s13] sm:$0xff]
        %v3635 = vld [vmem:[%s13 + $0x8] sm:$0xff]
        %3637 = vset.pattern.permute.xlu0 0
        %3638 = vperm.xlu0 %3637, %v3634
        %v3639 = vpop.permute.xlu0 %3638
        %3642 = vset.pattern.permute.xlu0 0
        %3643 = vperm.xlu0 %3642, %v3635
        %v3644 = vpop.permute.xlu0 %3643
        %v3646 = vadd.f32 %v3630, %v3639
        %v3647 = vadd.f32 %v3631, %v3639
        %v3648 = vadd.f32 %v3632, %v3644
        %v3649 = vadd.f32 %v3633, %v3644
        %v3650 = vld [vmem:[%s1027] sm:$0xff]
        %v3651 = vld [vmem:[%s1027 + $0x8] sm:$0xff]
        %v3652 = vld [vmem:[%s1027 + $0x10] sm:$0xff]
        %v3653 = vld [vmem:[%s1027 + $0x18] sm:$0xff]
        %v3654 = vadd.f32 %v3646, %v3650
        %v3655 = vadd.f32 %v3647, %v3651
        %v3656 = vadd.f32 %v3648, %v3652
        %v3657 = vadd.f32 %v3649, %v3653
        %s3658 = scalar_lea.vmem %s486, 32 [#allocation6]
        %3659 = vst [vmem:[%s3658] sm:$0xff] %v3654
        %3660 = vst [vmem:[%s3658 + $0x8] sm:$0xff] %v3655
        %3661 = vst [vmem:[%s3658 + $0x10] sm:$0xff] %v3656
        %3662 = vst [vmem:[%s3658 + $0x18] sm:$0xff] %v3657
        %s3663 = sand.u32 %s338, 1
        %s3664 = scalar_lea.sflag [#allocation5], %s3663
        %s3665 = sand.u32 %s338, 1
        %s3666 = smul.addr %s3665, 64
        %s3667 = scalar_lea.vmem [#allocation6], %s3666
        // Predicated region
        $region81: #{tpu_custom_call.1} parent=75 // pred_check
          %p3668 = pneg %p348
        $region82: #{tpu_custom_call.1} parent=75 // pred_check_branch
          %3670 = sbr.rel (%p3668) target = $region84
        $region83: #{tpu_custom_call.1} parent=75 // pred_region
          %s3671 = smul.u32 2, %s31
          %s3673 = ssub.s32 1024, 1024
          %3674 = vsyncadd %s3664, %s3673
          %s3675 = smul.addr %s3671, 4
          %s3676 = smul.addr %s3675, 128
          %s3677 = scalar_lea.hbm %s14, %s3676
          %s3678 = sshll.u32 %s3667, 4
          %s3679 = int_to_ptr.vmem [resolvable:$true] %s3678
          %3684 = dma.vmem_to_hbm [thread:$0]  %s3679, 1024, %s3677, %s3664, 256, 256, 16
        $region84: #{tpu_custom_call.1} parent=75 // pred_fallthru
          _
      $region76: #{tpu_custom_call.1} parent=5 // pred_fallthru
        _
      %p3685 = scmp.le.s32.totalorder 2, %s26
      // Predicated region
      $region85: #{tpu_custom_call.1} parent=5 // pred_check
        %p3686 = pneg %p3685
      $region86: #{tpu_custom_call.1} parent=5 // pred_check_branch
        %3688 = sbr.rel (%p3686) target = $region88
      $region87: #{tpu_custom_call.1} parent=5 // pred_region
        %s3689 = ssub.s32 %s26, 2
        // Predicated region
        $region89: #{tpu_custom_call.1} parent=87 // pred_check
          %p3690 = pneg %p354
        $region90: #{tpu_custom_call.1} parent=87 // pred_check_branch
          %3692 = sbr.rel (%p3690) target = $region92
        $region91: #{tpu_custom_call.1} parent=87 // pred_region
          %s3693 = sand.u32 %s339, 1
          %s3694 = scalar_lea.sflag [#allocation5], %s3693
          %s3695 = sand.u32 %s339, 1
          %s3696 = smul.addr %s3695, 64
          %s3697 = scalar_lea.vmem [#allocation6], %s3696
          %3698 = dma.done %s3694, 1024
        $region92: #{tpu_custom_call.1} parent=87 // pred_fallthru
          _
      $region88: #{tpu_custom_call.1} parent=5 // pred_fallthru
        _
    $region6: #{tpu_custom_call.1} parent=1 // loop_footer
      %s30 = sadd.s32 1, %s26
    $region7: #{tpu_custom_call.1} parent=1 // loop_footer_branch
      %25 = sbr.rel target = $region3
    $region8: #{tpu_custom_call.1} parent=1 // loop_exit
      _
    %3699 = vsyncpa [#allocation4], 1
    %s3700 = scalar_lea.sflag [#allocation4], 1
    %3701 = vsyncpa %s3700, 1
    %3702 = vsyncpa [#allocation5], 1
    %s3703 = scalar_lea.sflag [#allocation5], 1
    %3704 = vsyncpa %s3703, 1

</llo_original>
